<compile_context>
chip_gen: v7x
topology: tpu7x:2x2x1
jax: 0.10.0
libtpu: 0.0.40
codegen_flags: <defaults>
</compile_context>

<pallas_src>
import functools

import jax
import jax.numpy as jnp
from jax.experimental import pallas as pl
from jax.experimental.pallas import tpu as pltpu


_BN_EPS = 1e-5
_CP_PARALLEL = pltpu.CompilerParams(dimension_semantics=("parallel",))


# ----------------------------------------------------------------------------
# Host-side constant builders (constant-folded under jit)
# ----------------------------------------------------------------------------
def _band_weights(w, width):
    """(3,3,Cin,Cout) conv kernel -> (3*width*Cin, width*Cout) banded matrix.

    Row block dy, row a*Cin+ci, col b*Cout+co holds w[dy, dx, ci, co] with
    a = b + dx - 1 (zero outside range == zero padding along W).  The three
    dy blocks are stacked along K so every 3x3 conv is a single MXU dot."""
    _, _, cin, cout = w.shape
    eyes = jnp.stack([jnp.eye(width, k=1 - dx, dtype=jnp.float32)
                      for dx in range(3)])                      # (3, width, width)
    band = jnp.einsum("xab,yxio->yaibo", eyes, w.astype(jnp.float32))
    return band.reshape(3 * width * cin, width * cout).astype(jnp.bfloat16)


def _tile_affine(scale, shift, width):
    """Per-channel BN affine tiled to the packed (W*C) lane layout -> (2, W*C)."""
    return jnp.stack([jnp.tile(scale, width),
                      jnp.tile(shift, width)]).astype(jnp.float32)


def _pool_selectors(h_in, w_in, c):
    """Exact 0/1 matrices (bf16) realising MaxPool2d(2,2) as selection matmuls."""
    hh, wh = h_in // 2, w_in // 2
    rows = jnp.arange(h_in)[None, :]
    selh = jnp.stack([
        (jnp.arange(hh)[:, None] * 2 + par == rows).astype(jnp.bfloat16)
        for par in range(2)])                                   # (2, hh, h_in)

    lane_in = jnp.arange(w_in * c)
    lane_out = jnp.arange(wh * c)
    w_of_in = lane_in // c
    c_of_in = lane_in % c
    selw = jnp.stack([
        ((w_of_in[:, None] // 2 == lane_out[None, :] // c)
         & (c_of_in[:, None] == lane_out[None, :] % c)
         & (w_of_in[:, None] % 2 == par)).astype(jnp.bfloat16)
        for par in range(2)])                                   # (2, w_in*c, wh*c)
    return selh, selw


def _upsample_mats(hh, wh, c):
    """Exact 0/1 matrices (bf16) realising nearest Upsample(x2) as dup matmuls."""
    h, w = 2 * hh, 2 * wh
    rh = (jnp.arange(h)[:, None] // 2
          == jnp.arange(hh)[None, :]).astype(jnp.bfloat16)      # (h, hh)
    lane_s = jnp.arange(wh * c)
    lane_b = jnp.arange(w * c)
    rw = ((lane_s[:, None] // c == (lane_b[None, :] // c) // 2)
          & (lane_s[:, None] % c == lane_b[None, :] % c)).astype(jnp.bfloat16)
    return rh, rw                                               # (wh*c, w*c)


# ----------------------------------------------------------------------------
# Flatten the recursive hourglass into a constant list + trace-time program
# ----------------------------------------------------------------------------
def _build_program(params, h, w, cin):
    consts = []          # constant arrays, one pallas_call input each
    pads = {}            # (rows, cols) -> scratch index, for padded-LHS buffers

    def add_const(a):
        consts.append(a)
        return len(consts) - 1

    def add_pad(rows, cols):
        key = (rows, cols)
        if key not in pads:
            pads[key] = len(pads)
        return pads[key]

    def plan_block(p, h, width):
        cin_b = p["w1"].shape[2]
        cmid = p["w1"].shape[3]
        cout = p["w2"].shape[3]
        has_proj = "wsc" in p
        blk = {
            "proj": has_proj,
            "nmid": width * cmid,
            "pad_in": add_pad(h + 2, width * cin_b),
            "pad_mid": add_pad(h + 2, width * cmid),
            "w2": add_const(_band_weights(p["w2"], width)),
            "a2": add_const(_tile_affine(p["s2"], p["b2"], width)),
        }
        if has_proj:
            # conv1 and the projection-shortcut conv share their LHS:
            # fuse them along the output (N) axis into one dot.
            blk["w1"] = add_const(jnp.concatenate(
                [_band_weights(p["w1"], width),
                 _band_weights(p["wsc"], width)], axis=1))
            blk["a1"] = add_const(jnp.concatenate(
                [_tile_affine(p["s1"], p["b1"], width),
                 _tile_affine(p["ssc"], p["bsc"], width)], axis=1))
        else:
            blk["w1"] = add_const(_band_weights(p["w1"], width))
            blk["a1"] = add_const(_tile_affine(p["s1"], p["b1"], width))
        return blk, cout

    def plan_seq(plist, h, width, c):
        blks = []
        for p in plist:
            b, c = plan_block(p, h, width)
            blks.append(b)
        return blks, c

    def plan_hg(p, h, w, c):
        node = {}
        node["shortcut"], _ = plan_seq(p["shortcut"], h, w, c)
        hh, wh = h // 2, w // 2
        selh, selw = _pool_selectors(h, w, c)
        node["selh"], node["selw"] = add_const(selh), add_const(selw)
        node["conv1"], c1 = plan_seq(p["conv1"], hh, wh, c)
        kind, inner = p["conv2"]
        if kind == "hg":
            node["inner"] = ("hg", plan_hg(inner, hh, wh, c1))
            c2 = c1
        else:
            sub, c2 = plan_seq(inner, hh, wh, c1)
            node["inner"] = ("seq", sub)
        node["conv3"], c3 = plan_seq(p["conv3"], hh, wh, c2)
        rh, rw = _upsample_mats(hh, wh, c3)
        node["rh"], node["rw"] = add_const(rh), add_const(rw)
        return node

    root = plan_hg(params, h, w, cin)
    pad_shapes = [None] * len(pads)
    for shape, idx in pads.items():
        pad_shapes[idx] = shape
    return consts, root, pad_shapes


# ----------------------------------------------------------------------------
# The single fused hourglass kernel (one image per grid step)
# ----------------------------------------------------------------------------
def _hourglass_kernel(*refs, program, n_consts, n_pads):
    x_ref = refs[0]
    const = refs[1:1 + n_consts]
    o_ref = refs[1 + n_consts]
    pads = refs[2 + n_consts:2 + n_consts + n_pads]

    # Halo rows of every padded-LHS scratch buffer are zeroed once per
    # invocation; the convs only rewrite rows 1..h, so they stay zero.
    for pref in pads:
        rows, cols = pref.shape
        zrow = jnp.zeros((1, cols), pref.dtype)
        pref[0:1, :] = zrow
        pref[rows - 1:rows, :] = zrow

    def conv3x3(x, w_idx, a_idx, pad_idx, relu):
        # 3x3 conv (+BN affine, optional ReLU) as ONE banded matmul with
        # K = 3*W*Cin: the three dy-shifted views of the padded input are
        # lane-concatenated into the LHS; bf16 operands, f32 accumulation.
        h, _ = x.shape
        pad = pads[pad_idx]
        pad[1:h + 1, :] = x
        lhs = jnp.concatenate(
            [pad[0:h, :], pad[1:h + 1, :], pad[2:h + 2, :]],
            axis=1).astype(jnp.bfloat16)                    # (h, 3*W*Cin)
        y = jnp.dot(lhs, const[w_idx][...],
                    preferred_element_type=jnp.float32)
        aff = const[a_idx]
        y = y * aff[0:1, :] + aff[1:2, :]
        return jnp.maximum(y, 0.0) if relu else y

    def run_block(x, blk):
        if blk["proj"]:
            # conv1 + projection shortcut in one dot (shared LHS, split N)
            y = conv3x3(x, blk["w1"], blk["a1"], blk["pad_in"], relu=False)
            y1 = jnp.maximum(y[:, :blk["nmid"]], 0.0)
            sc = y[:, blk["nmid"]:]
        else:
            y1 = conv3x3(x, blk["w1"], blk["a1"], blk["pad_in"], relu=True)
            sc = x
        y2 = conv3x3(y1, blk["w2"], blk["a2"], blk["pad_mid"], relu=True)
        return jnp.maximum(y2 + sc, 0.0)

    def run_seq(x, blks):
        for b in blks:
            x = run_block(x, b)
        return x

    def maxpool2x2(x, selh_idx, selw_idx):
        selh, selw = const[selh_idx], const[selw_idx]
        xb = x.astype(jnp.bfloat16)
        r = jnp.maximum(
            jnp.dot(selh[0], xb, preferred_element_type=jnp.float32),
            jnp.dot(selh[1], xb, preferred_element_type=jnp.float32))
        rb = r.astype(jnp.bfloat16)
        return jnp.maximum(
            jnp.dot(rb, selw[0], preferred_element_type=jnp.float32),
            jnp.dot(rb, selw[1], preferred_element_type=jnp.float32))

    def upsample2x(x, rh_idx, rw_idx):
        xb = x.astype(jnp.bfloat16)
        t = jnp.dot(const[rh_idx][...], xb, preferred_element_type=jnp.float32)
        return jnp.dot(t.astype(jnp.bfloat16), const[rw_idx][...],
                       preferred_element_type=jnp.float32)

    def run_hg(x, node):
        s = run_seq(x, node["shortcut"])
        y = maxpool2x2(x, node["selh"], node["selw"])
        y = run_seq(y, node["conv1"])
        kind, inner = node["inner"]
        y = run_hg(y, inner) if kind == "hg" else run_seq(y, inner)
        y = run_seq(y, node["conv3"])
        return upsample2x(y, node["rh"], node["rw"]) + s

    o_ref[0] = run_hg(x_ref[0], program)


def hourglass_forward(x_nhwc, params):
    n, h, w, c = x_nhwc.shape
    consts, program, pad_shapes = _build_program(params, h, w, c)

    x2d = x_nhwc.reshape(n, h, w * c)
    in_specs = [pl.BlockSpec((1, h, w * c), lambda i: (i, 0, 0))]
    for arr in consts:
        in_specs.append(
            pl.BlockSpec(arr.shape, lambda i, _nd=arr.ndim: (0,) * _nd))

    kernel = functools.partial(
        _hourglass_kernel, program=program,
        n_consts=len(consts), n_pads=len(pad_shapes))

    out = pl.pallas_call(
        kernel,
        out_shape=jax.ShapeDtypeStruct((n, h, w * c), jnp.float32),
        grid=(n,),
        in_specs=in_specs,
        out_specs=pl.BlockSpec((1, h, w * c), lambda i: (i, 0, 0)),
        scratch_shapes=[pltpu.VMEM(s, jnp.float32) for s in pad_shapes],
        compiler_params=_CP_PARALLEL,
    )(x2d, *consts)
    return out.reshape(n, h, w, c)


def hourglass_apply_nchw(x_nchw, params):
    x_nhwc = jnp.transpose(x_nchw, (0, 2, 3, 1))
    out_nhwc = hourglass_forward(x_nhwc, params)
    return jnp.transpose(out_nhwc, (0, 3, 1, 2))


# ----------------------------------------------------------------------------
# Deterministic synthetic parameter initialization (inference-mode BN folded)
# ----------------------------------------------------------------------------
def _bn_affine(key, c, conv_bias):
    k1, k2, k3, k4 = jax.random.split(key, 4)
    gamma = 1.0 + 0.1 * jax.random.normal(k1, (c,), jnp.float32)
    beta = 0.1 * jax.random.normal(k2, (c,), jnp.float32)
    mean = 0.1 * jax.random.normal(k3, (c,), jnp.float32)
    var = jax.random.uniform(k4, (c,), jnp.float32, minval=0.5, maxval=1.5)
    scale = gamma / jnp.sqrt(var + _BN_EPS)
    shift = beta - mean * scale + conv_bias * scale   # fold conv bias into BN shift
    return scale, shift


def init_residual_params(key, cin, plane):
    ks = jax.random.split(key, 9)
    p = {}
    p["w1"] = 0.1 * jax.random.normal(ks[0], (3, 3, cin, plane), jnp.float32)
    b1 = 0.05 * jax.random.normal(ks[1], (plane,), jnp.float32)
    p["s1"], p["b1"] = _bn_affine(ks[2], plane, b1)
    p["w2"] = 0.1 * jax.random.normal(ks[3], (3, 3, plane, plane), jnp.float32)
    b2 = 0.05 * jax.random.normal(ks[4], (plane,), jnp.float32)
    p["s2"], p["b2"] = _bn_affine(ks[5], plane, b2)
    if plane != cin:  # projection shortcut: Conv2d(3x3, pad 1) + BN
        p["wsc"] = 0.1 * jax.random.normal(ks[6], (3, 3, cin, plane), jnp.float32)
        bsc = 0.05 * jax.random.normal(ks[7], (plane,), jnp.float32)
        p["ssc"], p["bsc"] = _bn_affine(ks[8], plane, bsc)
    return p


def init_make_layers(key, modules, cin, cout):
    ks = jax.random.split(key, modules)
    params = [init_residual_params(ks[0], cin, cout)]
    for i in range(1, modules):
        params.append(init_residual_params(ks[i], cout, cout))
    return params


def init_make_layers_reverse(key, modules, cin, cout):
    # Faithful to the reference: the layer list is overwritten, so only one
    # block (out_feature -> in_feature) survives regardless of `modules`.
    del modules
    return [init_residual_params(key, cout, cin)]


def init_hourglass(key, dims, modules):
    assert len(dims) == len(modules) and len(dims) >= 2
    cur_dim, nex_dim = dims[0], dims[1]
    cur_mod, nex_mod = modules[0], modules[1]
    ks = jax.random.split(key, 4)
    p = {}
    p["shortcut"] = init_make_layers(ks[0], cur_mod, cur_dim, cur_dim)
    p["conv1"] = init_make_layers(ks[1], cur_mod, cur_dim, nex_dim)
    if len(dims) > 2:
        p["conv2"] = ("hg", init_hourglass(ks[2], dims[1:], modules[1:]))
    else:
        p["conv2"] = ("seq", init_make_layers(ks[2], nex_mod, nex_dim, nex_dim))
    p["conv3"] = init_make_layers_reverse(ks[3], cur_mod, cur_dim, nex_dim)
    return p


# ----------------------------------------------------------------------------
if __name__ == "__main__":
    key = jax.random.PRNGKey(0)
    k_x, k_p = jax.random.split(key)

    dims = (4, 8)        # Hourglass(dims=(4, 8), modules=(1, 1))
    modules = (1, 1)

    x = jax.random.normal(k_x, (2, dims[0], 16, 16), jnp.float32)  # NCHW
    params = init_hourglass(k_p, dims, modules)

    fwd = jax.jit(lambda a: hourglass_apply_nchw(a, params))
    out = fwd(x)
    jax.block_until_ready(out)

    assert out.shape == (2, dims[0], 16, 16), out.shape
    assert bool(jnp.all(jnp.isfinite(out)))
    print("KERNEL_OK")
</pallas_src>

<mosaic_0001>
module attributes {stable_mosaic.version = 11 : i64} {
  func.func @_hourglass_kernel(%arg0: i32, %arg1: memref<1x16x64xf32, #tpu.memory_space<vmem>>, %arg2: memref<192x64xbf16, #tpu.memory_space<vmem>>, %arg3: memref<2x64xf32, #tpu.memory_space<vmem>>, %arg4: memref<192x64xbf16, #tpu.memory_space<vmem>>, %arg5: memref<2x64xf32, #tpu.memory_space<vmem>>, %arg6: memref<2x8x16xbf16, #tpu.memory_space<vmem>>, %arg7: memref<2x64x32xbf16, #tpu.memory_space<vmem>>, %arg8: memref<192x64xbf16, #tpu.memory_space<vmem>>, %arg9: memref<2x64xf32, #tpu.memory_space<vmem>>, %arg10: memref<96x128xbf16, #tpu.memory_space<vmem>>, %arg11: memref<2x128xf32, #tpu.memory_space<vmem>>, %arg12: memref<192x64xbf16, #tpu.memory_space<vmem>>, %arg13: memref<2x64xf32, #tpu.memory_space<vmem>>, %arg14: memref<192x64xbf16, #tpu.memory_space<vmem>>, %arg15: memref<2x64xf32, #tpu.memory_space<vmem>>, %arg16: memref<96x32xbf16, #tpu.memory_space<vmem>>, %arg17: memref<2x32xf32, #tpu.memory_space<vmem>>, %arg18: memref<192x64xbf16, #tpu.memory_space<vmem>>, %arg19: memref<2x64xf32, #tpu.memory_space<vmem>>, %arg20: memref<16x8xbf16, #tpu.memory_space<vmem>>, %arg21: memref<32x64xbf16, #tpu.memory_space<vmem>>, %arg22: memref<1x16x64xf32, #tpu.memory_space<vmem>>, %arg23: memref<18x64xf32, #tpu.memory_space<vmem>>, %arg24: memref<10x32xf32, #tpu.memory_space<vmem>>, %arg25: memref<10x64xf32, #tpu.memory_space<vmem>>) attributes {dimension_semantics = [#tpu.dimension_semantics<parallel>], iteration_bounds = array<i64: 2>, scalar_prefetch = 0 : i64, scratch_operands = 3 : i64, tpu.core_type = #tpu.core_type<tc>, window_params = [{transform_indices = @transform_0, window_bounds = array<i64: 1, 16, 64>}, {pipeline_mode = #tpu.pipeline_mode<synchronous>, transform_indices = @transform_1, window_bounds = array<i64: 192, 64>}, {pipeline_mode = #tpu.pipeline_mode<synchronous>, transform_indices = @transform_2, window_bounds = array<i64: 2, 64>}, {pipeline_mode = #tpu.pipeline_mode<synchronous>, transform_indices = @transform_3, window_bounds = array<i64: 192, 64>}, {pipeline_mode = #tpu.pipeline_mode<synchronous>, transform_indices = @transform_4, window_bounds = array<i64: 2, 64>}, {pipeline_mode = #tpu.pipeline_mode<synchronous>, transform_indices = @transform_5, window_bounds = array<i64: 2, 8, 16>}, {pipeline_mode = #tpu.pipeline_mode<synchronous>, transform_indices = @transform_6, window_bounds = array<i64: 2, 64, 32>}, {pipeline_mode = #tpu.pipeline_mode<synchronous>, transform_indices = @transform_7, window_bounds = array<i64: 192, 64>}, {pipeline_mode = #tpu.pipeline_mode<synchronous>, transform_indices = @transform_8, window_bounds = array<i64: 2, 64>}, {pipeline_mode = #tpu.pipeline_mode<synchronous>, transform_indices = @transform_9, window_bounds = array<i64: 96, 128>}, {pipeline_mode = #tpu.pipeline_mode<synchronous>, transform_indices = @transform_10, window_bounds = array<i64: 2, 128>}, {pipeline_mode = #tpu.pipeline_mode<synchronous>, transform_indices = @transform_11, window_bounds = array<i64: 192, 64>}, {pipeline_mode = #tpu.pipeline_mode<synchronous>, transform_indices = @transform_12, window_bounds = array<i64: 2, 64>}, {pipeline_mode = #tpu.pipeline_mode<synchronous>, transform_indices = @transform_13, window_bounds = array<i64: 192, 64>}, {pipeline_mode = #tpu.pipeline_mode<synchronous>, transform_indices = @transform_14, window_bounds = array<i64: 2, 64>}, {pipeline_mode = #tpu.pipeline_mode<synchronous>, transform_indices = @transform_15, window_bounds = array<i64: 96, 32>}, {pipeline_mode = #tpu.pipeline_mode<synchronous>, transform_indices = @transform_16, window_bounds = array<i64: 2, 32>}, {pipeline_mode = #tpu.pipeline_mode<synchronous>, transform_indices = @transform_17, window_bounds = array<i64: 192, 64>}, {pipeline_mode = #tpu.pipeline_mode<synchronous>, transform_indices = @transform_18, window_bounds = array<i64: 2, 64>}, {pipeline_mode = #tpu.pipeline_mode<synchronous>, transform_indices = @transform_19, window_bounds = array<i64: 16, 8>}, {pipeline_mode = #tpu.pipeline_mode<synchronous>, transform_indices = @transform_20, window_bounds = array<i64: 32, 64>}, {transform_indices = @transform_21, window_bounds = array<i64: 1, 16, 64>}]} {
    %cst = arith.constant 0.000000e+00 : f32
    %0 = vector.broadcast %cst : f32 to vector<1x64xf32>
    %c0 = arith.constant 0 : index
    %c0_0 = arith.constant 0 : index
    %1 = vector.load %arg23[%c0, %c0_0] : memref<18x64xf32, #tpu.memory_space<vmem>>, vector<1x64xf32>
    tpu.vector_store %arg23[%c0, %c0_0], %0 {strides = array<i32>} : memref<18x64xf32, #tpu.memory_space<vmem>>, vector<1x64xf32>,
    %c17 = arith.constant 17 : index
    %c0_1 = arith.constant 0 : index
    %2 = vector.load %arg23[%c17, %c0_1] : memref<18x64xf32, #tpu.memory_space<vmem>>, vector<1x64xf32>
    tpu.vector_store %arg23[%c17, %c0_1], %0 {strides = array<i32>} : memref<18x64xf32, #tpu.memory_space<vmem>>, vector<1x64xf32>,
    %cst_2 = arith.constant 0.000000e+00 : f32
    %3 = vector.broadcast %cst_2 : f32 to vector<1x32xf32>
    %c0_3 = arith.constant 0 : index
    %c0_4 = arith.constant 0 : index
    %4 = vector.load %arg24[%c0_3, %c0_4] : memref<10x32xf32, #tpu.memory_space<vmem>>, vector<1x32xf32>
    tpu.vector_store %arg24[%c0_3, %c0_4], %3 {strides = array<i32>} : memref<10x32xf32, #tpu.memory_space<vmem>>, vector<1x32xf32>,
    %c9 = arith.constant 9 : index
    %c0_5 = arith.constant 0 : index
    %5 = vector.load %arg24[%c9, %c0_5] : memref<10x32xf32, #tpu.memory_space<vmem>>, vector<1x32xf32>
    tpu.vector_store %arg24[%c9, %c0_5], %3 {strides = array<i32>} : memref<10x32xf32, #tpu.memory_space<vmem>>, vector<1x32xf32>,
    %cst_6 = arith.constant 0.000000e+00 : f32
    %6 = vector.broadcast %cst_6 : f32 to vector<1x64xf32>
    %c0_7 = arith.constant 0 : index
    %c0_8 = arith.constant 0 : index
    %7 = vector.load %arg25[%c0_7, %c0_8] : memref<10x64xf32, #tpu.memory_space<vmem>>, vector<1x64xf32>
    tpu.vector_store %arg25[%c0_7, %c0_8], %6 {strides = array<i32>} : memref<10x64xf32, #tpu.memory_space<vmem>>, vector<1x64xf32>,
    %c9_9 = arith.constant 9 : index
    %c0_10 = arith.constant 0 : index
    %8 = vector.load %arg25[%c9_9, %c0_10] : memref<10x64xf32, #tpu.memory_space<vmem>>, vector<1x64xf32>
    tpu.vector_store %arg25[%c9_9, %c0_10], %6 {strides = array<i32>} : memref<10x64xf32, #tpu.memory_space<vmem>>, vector<1x64xf32>,
    %c0_11 = arith.constant 0 : index
    %c0_12 = arith.constant 0 : index
    %c0_13 = arith.constant 0 : index
    %9 = vector.load %arg1[%c0_11, %c0_12, %c0_13] : memref<1x16x64xf32, #tpu.memory_space<vmem>>, vector<1x16x64xf32>
    %10 = vector.shape_cast %9 : vector<1x16x64xf32> to vector<16x64xf32>
    %c1 = arith.constant 1 : index
    %c0_14 = arith.constant 0 : index
    %11 = vector.load %arg23[%c1, %c0_14] : memref<18x64xf32, #tpu.memory_space<vmem>>, vector<16x64xf32>
    tpu.vector_store %arg23[%c1, %c0_14], %10 {strides = array<i32>} : memref<18x64xf32, #tpu.memory_space<vmem>>, vector<16x64xf32>,
    %c0_15 = arith.constant 0 : index
    %c0_16 = arith.constant 0 : index
    %12 = vector.load %arg23[%c0_15, %c0_16] : memref<18x64xf32, #tpu.memory_space<vmem>>, vector<16x64xf32>
    %c1_17 = arith.constant 1 : index
    %c0_18 = arith.constant 0 : index
    %13 = vector.load %arg23[%c1_17, %c0_18] : memref<18x64xf32, #tpu.memory_space<vmem>>, vector<16x64xf32>
    %c2 = arith.constant 2 : index
    %c0_19 = arith.constant 0 : index
    %14 = vector.load %arg23[%c2, %c0_19] : memref<18x64xf32, #tpu.memory_space<vmem>>, vector<16x64xf32>
    %15 = tpu.concatenate %12, %13, %14 in 1 : vector<16x64xf32>, vector<16x64xf32>, vector<16x64xf32> -> vector<16x192xf32>
    %16 = arith.truncf %15 : vector<16x192xf32> to vector<16x192xbf16>
    %c0_20 = arith.constant 0 : index
    %c0_21 = arith.constant 0 : index
    %17 = vector.load %arg4[%c0_20, %c0_21] : memref<192x64xbf16, #tpu.memory_space<vmem>>, vector<192x64xbf16>
    %cst_22 = arith.constant dense<0.000000e+00> : vector<16x64xf32>
    %18 = tpu.matmul %16, %17, %cst_22 {dimension_numbers = #tpu.dot_dimension_numbers<[1], [0], [0], [1], [0, 0, 1, 1], [], []>} : vector<16x192xbf16>, vector<192x64xbf16>, vector<16x64xf32> -> vector<16x64xf32>
    %c0_23 = arith.constant 0 : index
    %c0_24 = arith.constant 0 : index
    %19 = vector.load %arg5[%c0_23, %c0_24] : memref<2x64xf32, #tpu.memory_space<vmem>>, vector<1x64xf32>
    %20 = vector.broadcast %19 : vector<1x64xf32> to vector<16x64xf32>
    %21 = arith.mulf %18, %20 : vector<16x64xf32>
    %c1_25 = arith.constant 1 : index
    %c0_26 = arith.constant 0 : index
    %22 = vector.load %arg5[%c1_25, %c0_26] : memref<2x64xf32, #tpu.memory_space<vmem>>, vector<1x64xf32>
    %23 = vector.broadcast %22 : vector<1x64xf32> to vector<16x64xf32>
    %24 = arith.addf %21, %23 : vector<16x64xf32>
    %cst_27 = arith.constant 0.000000e+00 : f32
    %25 = vector.broadcast %cst_27 : f32 to vector<16x64xf32>
    %26 = arith.maximumf %24, %25 : vector<16x64xf32>
    %c1_28 = arith.constant 1 : index
    %c0_29 = arith.constant 0 : index
    %27 = vector.load %arg23[%c1_28, %c0_29] : memref<18x64xf32, #tpu.memory_space<vmem>>, vector<16x64xf32>
    tpu.vector_store %arg23[%c1_28, %c0_29], %26 {strides = array<i32>} : memref<18x64xf32, #tpu.memory_space<vmem>>, vector<16x64xf32>,
    %c0_30 = arith.constant 0 : index
    %c0_31 = arith.constant 0 : index
    %28 = vector.load %arg23[%c0_30, %c0_31] : memref<18x64xf32, #tpu.memory_space<vmem>>, vector<16x64xf32>
    %c1_32 = arith.constant 1 : index
    %c0_33 = arith.constant 0 : index
    %29 = vector.load %arg23[%c1_32, %c0_33] : memref<18x64xf32, #tpu.memory_space<vmem>>, vector<16x64xf32>
    %c2_34 = arith.constant 2 : index
    %c0_35 = arith.constant 0 : index
    %30 = vector.load %arg23[%c2_34, %c0_35] : memref<18x64xf32, #tpu.memory_space<vmem>>, vector<16x64xf32>
    %31 = tpu.concatenate %28, %29, %30 in 1 : vector<16x64xf32>, vector<16x64xf32>, vector<16x64xf32> -> vector<16x192xf32>
    %32 = arith.truncf %31 : vector<16x192xf32> to vector<16x192xbf16>
    %c0_36 = arith.constant 0 : index
    %c0_37 = arith.constant 0 : index
    %33 = vector.load %arg2[%c0_36, %c0_37] : memref<192x64xbf16, #tpu.memory_space<vmem>>, vector<192x64xbf16>
    %cst_38 = arith.constant dense<0.000000e+00> : vector<16x64xf32>
    %34 = tpu.matmul %32, %33, %cst_38 {dimension_numbers = #tpu.dot_dimension_numbers<[1], [0], [0], [1], [0, 0, 1, 1], [], []>} : vector<16x192xbf16>, vector<192x64xbf16>, vector<16x64xf32> -> vector<16x64xf32>
    %c0_39 = arith.constant 0 : index
    %c0_40 = arith.constant 0 : index
    %35 = vector.load %arg3[%c0_39, %c0_40] : memref<2x64xf32, #tpu.memory_space<vmem>>, vector<1x64xf32>
    %36 = vector.broadcast %35 : vector<1x64xf32> to vector<16x64xf32>
    %37 = arith.mulf %34, %36 : vector<16x64xf32>
    %c1_41 = arith.constant 1 : index
    %c0_42 = arith.constant 0 : index
    %38 = vector.load %arg3[%c1_41, %c0_42] : memref<2x64xf32, #tpu.memory_space<vmem>>, vector<1x64xf32>
    %39 = vector.broadcast %38 : vector<1x64xf32> to vector<16x64xf32>
    %40 = arith.addf %37, %39 : vector<16x64xf32>
    %cst_43 = arith.constant 0.000000e+00 : f32
    %41 = vector.broadcast %cst_43 : f32 to vector<16x64xf32>
    %42 = arith.maximumf %40, %41 : vector<16x64xf32>
    %43 = arith.addf %42, %10 : vector<16x64xf32>
    %cst_44 = arith.constant 0.000000e+00 : f32
    %44 = vector.broadcast %cst_44 : f32 to vector<16x64xf32>
    %45 = arith.maximumf %43, %44 : vector<16x64xf32>
    %46 = arith.truncf %10 : vector<16x64xf32> to vector<16x64xbf16>
    %c0_45 = arith.constant 0 : index
    %c0_46 = arith.constant 0 : index
    %c0_47 = arith.constant 0 : index
    %47 = vector.load %arg6[%c0_45, %c0_46, %c0_47] : memref<2x8x16xbf16, #tpu.memory_space<vmem>>, vector<1x8x16xbf16>
    %48 = vector.shape_cast %47 : vector<1x8x16xbf16> to vector<8x16xbf16>
    %cst_48 = arith.constant dense<0.000000e+00> : vector<8x64xf32>
    %49 = tpu.matmul %48, %46, %cst_48 {dimension_numbers = #tpu.dot_dimension_numbers<[1], [0], [0], [1], [0, 0, 1, 1], [], []>} : vector<8x16xbf16>, vector<16x64xbf16>, vector<8x64xf32> -> vector<8x64xf32>
    %c1_49 = arith.constant 1 : index
    %c0_50 = arith.constant 0 : index
    %c0_51 = arith.constant 0 : index
    %50 = vector.load %arg6[%c1_49, %c0_50, %c0_51] : memref<2x8x16xbf16, #tpu.memory_space<vmem>>, vector<1x8x16xbf16>
    %51 = vector.shape_cast %50 : vector<1x8x16xbf16> to vector<8x16xbf16>
    %cst_52 = arith.constant dense<0.000000e+00> : vector<8x64xf32>
    %52 = tpu.matmul %51, %46, %cst_52 {dimension_numbers = #tpu.dot_dimension_numbers<[1], [0], [0], [1], [0, 0, 1, 1], [], []>} : vector<8x16xbf16>, vector<16x64xbf16>, vector<8x64xf32> -> vector<8x64xf32>
    %53 = arith.maximumf %49, %52 : vector<8x64xf32>
    %54 = arith.truncf %53 : vector<8x64xf32> to vector<8x64xbf16>
    %c0_53 = arith.constant 0 : index
    %c0_54 = arith.constant 0 : index
    %c0_55 = arith.constant 0 : index
    %55 = vector.load %arg7[%c0_53, %c0_54, %c0_55] : memref<2x64x32xbf16, #tpu.memory_space<vmem>>, vector<1x64x32xbf16>
    %56 = vector.shape_cast %55 : vector<1x64x32xbf16> to vector<64x32xbf16>
    %cst_56 = arith.constant dense<0.000000e+00> : vector<8x32xf32>
    %57 = tpu.matmul %54, %56, %cst_56 {dimension_numbers = #tpu.dot_dimension_numbers<[1], [0], [0], [1], [0, 0, 1, 1], [], []>} : vector<8x64xbf16>, vector<64x32xbf16>, vector<8x32xf32> -> vector<8x32xf32>
    %c1_57 = arith.constant 1 : index
    %c0_58 = arith.constant 0 : index
    %c0_59 = arith.constant 0 : index
    %58 = vector.load %arg7[%c1_57, %c0_58, %c0_59] : memref<2x64x32xbf16, #tpu.memory_space<vmem>>, vector<1x64x32xbf16>
    %59 = vector.shape_cast %58 : vector<1x64x32xbf16> to vector<64x32xbf16>
    %cst_60 = arith.constant dense<0.000000e+00> : vector<8x32xf32>
    %60 = tpu.matmul %54, %59, %cst_60 {dimension_numbers = #tpu.dot_dimension_numbers<[1], [0], [0], [1], [0, 0, 1, 1], [], []>} : vector<8x64xbf16>, vector<64x32xbf16>, vector<8x32xf32> -> vector<8x32xf32>
    %61 = arith.maximumf %57, %60 : vector<8x32xf32>
    %c1_61 = arith.constant 1 : index
    %c0_62 = arith.constant 0 : index
    %62 = vector.load %arg24[%c1_61, %c0_62] : memref<10x32xf32, #tpu.memory_space<vmem>>, vector<8x32xf32>
    tpu.vector_store %arg24[%c1_61, %c0_62], %61 {strides = array<i32>} : memref<10x32xf32, #tpu.memory_space<vmem>>, vector<8x32xf32>,
    %c0_63 = arith.constant 0 : index
    %c0_64 = arith.constant 0 : index
    %63 = vector.load %arg24[%c0_63, %c0_64] : memref<10x32xf32, #tpu.memory_space<vmem>>, vector<8x32xf32>
    %c1_65 = arith.constant 1 : index
    %c0_66 = arith.constant 0 : index
    %64 = vector.load %arg24[%c1_65, %c0_66] : memref<10x32xf32, #tpu.memory_space<vmem>>, vector<8x32xf32>
    %c2_67 = arith.constant 2 : index
    %c0_68 = arith.constant 0 : index
    %65 = vector.load %arg24[%c2_67, %c0_68] : memref<10x32xf32, #tpu.memory_space<vmem>>, vector<8x32xf32>
    %66 = tpu.concatenate %63, %64, %65 in 1 : vector<8x32xf32>, vector<8x32xf32>, vector<8x32xf32> -> vector<8x96xf32>
    %67 = arith.truncf %66 : vector<8x96xf32> to vector<8x96xbf16>
    %c0_69 = arith.constant 0 : index
    %c0_70 = arith.constant 0 : index
    %68 = vector.load %arg10[%c0_69, %c0_70] : memref<96x128xbf16, #tpu.memory_space<vmem>>, vector<96x128xbf16>
    %cst_71 = arith.constant dense<0.000000e+00> : vector<8x128xf32>
    %69 = tpu.matmul %67, %68, %cst_71 {dimension_numbers = #tpu.dot_dimension_numbers<[1], [0], [0], [1], [0, 0, 1, 1], [], []>} : vector<8x96xbf16>, vector<96x128xbf16>, vector<8x128xf32> -> vector<8x128xf32>
    %c0_72 = arith.constant 0 : index
    %c0_73 = arith.constant 0 : index
    %70 = vector.load %arg11[%c0_72, %c0_73] : memref<2x128xf32, #tpu.memory_space<vmem>>, vector<1x128xf32>
    %71 = vector.broadcast %70 : vector<1x128xf32> to vector<8x128xf32>
    %72 = arith.mulf %69, %71 : vector<8x128xf32>
    %c1_74 = arith.constant 1 : index
    %c0_75 = arith.constant 0 : index
    %73 = vector.load %arg11[%c1_74, %c0_75] : memref<2x128xf32, #tpu.memory_space<vmem>>, vector<1x128xf32>
    %74 = vector.broadcast %73 : vector<1x128xf32> to vector<8x128xf32>
    %75 = arith.addf %72, %74 : vector<8x128xf32>
    %76 = vector.extract_strided_slice %75 {offsets = [0, 0], sizes = [8, 64], strides = [1, 1]} : vector<8x128xf32> to vector<8x64xf32>
    %cst_76 = arith.constant 0.000000e+00 : f32
    %77 = vector.broadcast %cst_76 : f32 to vector<8x64xf32>
    %78 = arith.maximumf %76, %77 : vector<8x64xf32>
    %79 = vector.extract_strided_slice %75 {offsets = [0, 64], sizes = [8, 64], strides = [1, 1]} : vector<8x128xf32> to vector<8x64xf32>
    %c1_77 = arith.constant 1 : index
    %c0_78 = arith.constant 0 : index
    %80 = vector.load %arg25[%c1_77, %c0_78] : memref<10x64xf32, #tpu.memory_space<vmem>>, vector<8x64xf32>
    tpu.vector_store %arg25[%c1_77, %c0_78], %78 {strides = array<i32>} : memref<10x64xf32, #tpu.memory_space<vmem>>, vector<8x64xf32>,
    %c0_79 = arith.constant 0 : index
    %c0_80 = arith.constant 0 : index
    %81 = vector.load %arg25[%c0_79, %c0_80] : memref<10x64xf32, #tpu.memory_space<vmem>>, vector<8x64xf32>
    %c1_81 = arith.constant 1 : index
    %c0_82 = arith.constant 0 : index
    %82 = vector.load %arg25[%c1_81, %c0_82] : memref<10x64xf32, #tpu.memory_space<vmem>>, vector<8x64xf32>
    %c2_83 = arith.constant 2 : index
    %c0_84 = arith.constant 0 : index
    %83 = vector.load %arg25[%c2_83, %c0_84] : memref<10x64xf32, #tpu.memory_space<vmem>>, vector<8x64xf32>
    %84 = tpu.concatenate %81, %82, %83 in 1 : vector<8x64xf32>, vector<8x64xf32>, vector<8x64xf32> -> vector<8x192xf32>
    %85 = arith.truncf %84 : vector<8x192xf32> to vector<8x192xbf16>
    %c0_85 = arith.constant 0 : index
    %c0_86 = arith.constant 0 : index
    %86 = vector.load %arg8[%c0_85, %c0_86] : memref<192x64xbf16, #tpu.memory_space<vmem>>, vector<192x64xbf16>
    %cst_87 = arith.constant dense<0.000000e+00> : vector<8x64xf32>
    %87 = tpu.matmul %85, %86, %cst_87 {dimension_numbers = #tpu.dot_dimension_numbers<[1], [0], [0], [1], [0, 0, 1, 1], [], []>} : vector<8x192xbf16>, vector<192x64xbf16>, vector<8x64xf32> -> vector<8x64xf32>
    %c0_88 = arith.constant 0 : index
    %c0_89 = arith.constant 0 : index
    %88 = vector.load %arg9[%c0_88, %c0_89] : memref<2x64xf32, #tpu.memory_space<vmem>>, vector<1x64xf32>
    %89 = vector.broadcast %88 : vector<1x64xf32> to vector<8x64xf32>
    %90 = arith.mulf %87, %89 : vector<8x64xf32>
    %c1_90 = arith.constant 1 : index
    %c0_91 = arith.constant 0 : index
    %91 = vector.load %arg9[%c1_90, %c0_91] : memref<2x64xf32, #tpu.memory_space<vmem>>, vector<1x64xf32>
    %92 = vector.broadcast %91 : vector<1x64xf32> to vector<8x64xf32>
    %93 = arith.addf %90, %92 : vector<8x64xf32>
    %cst_92 = arith.constant 0.000000e+00 : f32
    %94 = vector.broadcast %cst_92 : f32 to vector<8x64xf32>
    %95 = arith.maximumf %93, %94 : vector<8x64xf32>
    %96 = arith.addf %95, %79 : vector<8x64xf32>
    %cst_93 = arith.constant 0.000000e+00 : f32
    %97 = vector.broadcast %cst_93 : f32 to vector<8x64xf32>
    %98 = arith.maximumf %96, %97 : vector<8x64xf32>
    %c1_94 = arith.constant 1 : index
    %c0_95 = arith.constant 0 : index
    %99 = vector.load %arg25[%c1_94, %c0_95] : memref<10x64xf32, #tpu.memory_space<vmem>>, vector<8x64xf32>
    tpu.vector_store %arg25[%c1_94, %c0_95], %98 {strides = array<i32>} : memref<10x64xf32, #tpu.memory_space<vmem>>, vector<8x64xf32>,
    %c0_96 = arith.constant 0 : index
    %c0_97 = arith.constant 0 : index
    %100 = vector.load %arg25[%c0_96, %c0_97] : memref<10x64xf32, #tpu.memory_space<vmem>>, vector<8x64xf32>
    %c1_98 = arith.constant 1 : index
    %c0_99 = arith.constant 0 : index
    %101 = vector.load %arg25[%c1_98, %c0_99] : memref<10x64xf32, #tpu.memory_space<vmem>>, vector<8x64xf32>
    %c2_100 = arith.constant 2 : index
    %c0_101 = arith.constant 0 : index
    %102 = vector.load %arg25[%c2_100, %c0_101] : memref<10x64xf32, #tpu.memory_space<vmem>>, vector<8x64xf32>
    %103 = tpu.concatenate %100, %101, %102 in 1 : vector<8x64xf32>, vector<8x64xf32>, vector<8x64xf32> -> vector<8x192xf32>
    %104 = arith.truncf %103 : vector<8x192xf32> to vector<8x192xbf16>
    %c0_102 = arith.constant 0 : index
    %c0_103 = arith.constant 0 : index
    %105 = vector.load %arg14[%c0_102, %c0_103] : memref<192x64xbf16, #tpu.memory_space<vmem>>, vector<192x64xbf16>
    %cst_104 = arith.constant dense<0.000000e+00> : vector<8x64xf32>
    %106 = tpu.matmul %104, %105, %cst_104 {dimension_numbers = #tpu.dot_dimension_numbers<[1], [0], [0], [1], [0, 0, 1, 1], [], []>} : vector<8x192xbf16>, vector<192x64xbf16>, vector<8x64xf32> -> vector<8x64xf32>
    %c0_105 = arith.constant 0 : index
    %c0_106 = arith.constant 0 : index
    %107 = vector.load %arg15[%c0_105, %c0_106] : memref<2x64xf32, #tpu.memory_space<vmem>>, vector<1x64xf32>
    %108 = vector.broadcast %107 : vector<1x64xf32> to vector<8x64xf32>
    %109 = arith.mulf %106, %108 : vector<8x64xf32>
    %c1_107 = arith.constant 1 : index
    %c0_108 = arith.constant 0 : index
    %110 = vector.load %arg15[%c1_107, %c0_108] : memref<2x64xf32, #tpu.memory_space<vmem>>, vector<1x64xf32>
    %111 = vector.broadcast %110 : vector<1x64xf32> to vector<8x64xf32>
    %112 = arith.addf %109, %111 : vector<8x64xf32>
    %cst_109 = arith.constant 0.000000e+00 : f32
    %113 = vector.broadcast %cst_109 : f32 to vector<8x64xf32>
    %114 = arith.maximumf %112, %113 : vector<8x64xf32>
    %c1_110 = arith.constant 1 : index
    %c0_111 = arith.constant 0 : index
    %115 = vector.load %arg25[%c1_110, %c0_111] : memref<10x64xf32, #tpu.memory_space<vmem>>, vector<8x64xf32>
    tpu.vector_store %arg25[%c1_110, %c0_111], %114 {strides = array<i32>} : memref<10x64xf32, #tpu.memory_space<vmem>>, vector<8x64xf32>,
    %c0_112 = arith.constant 0 : index
    %c0_113 = arith.constant 0 : index
    %116 = vector.load %arg25[%c0_112, %c0_113] : memref<10x64xf32, #tpu.memory_space<vmem>>, vector<8x64xf32>
    %c1_114 = arith.constant 1 : index
    %c0_115 = arith.constant 0 : index
    %117 = vector.load %arg25[%c1_114, %c0_115] : memref<10x64xf32, #tpu.memory_space<vmem>>, vector<8x64xf32>
    %c2_116 = arith.constant 2 : index
    %c0_117 = arith.constant 0 : index
    %118 = vector.load %arg25[%c2_116, %c0_117] : memref<10x64xf32, #tpu.memory_space<vmem>>, vector<8x64xf32>
    %119 = tpu.concatenate %116, %117, %118 in 1 : vector<8x64xf32>, vector<8x64xf32>, vector<8x64xf32> -> vector<8x192xf32>
    %120 = arith.truncf %119 : vector<8x192xf32> to vector<8x192xbf16>
    %c0_118 = arith.constant 0 : index
    %c0_119 = arith.constant 0 : index
    %121 = vector.load %arg12[%c0_118, %c0_119] : memref<192x64xbf16, #tpu.memory_space<vmem>>, vector<192x64xbf16>
    %cst_120 = arith.constant dense<0.000000e+00> : vector<8x64xf32>
    %122 = tpu.matmul %120, %121, %cst_120 {dimension_numbers = #tpu.dot_dimension_numbers<[1], [0], [0], [1], [0, 0, 1, 1], [], []>} : vector<8x192xbf16>, vector<192x64xbf16>, vector<8x64xf32> -> vector<8x64xf32>
    %c0_121 = arith.constant 0 : index
    %c0_122 = arith.constant 0 : index
    %123 = vector.load %arg13[%c0_121, %c0_122] : memref<2x64xf32, #tpu.memory_space<vmem>>, vector<1x64xf32>
    %124 = vector.broadcast %123 : vector<1x64xf32> to vector<8x64xf32>
    %125 = arith.mulf %122, %124 : vector<8x64xf32>
    %c1_123 = arith.constant 1 : index
    %c0_124 = arith.constant 0 : index
    %126 = vector.load %arg13[%c1_123, %c0_124] : memref<2x64xf32, #tpu.memory_space<vmem>>, vector<1x64xf32>
    %127 = vector.broadcast %126 : vector<1x64xf32> to vector<8x64xf32>
    %128 = arith.addf %125, %127 : vector<8x64xf32>
    %cst_125 = arith.constant 0.000000e+00 : f32
    %129 = vector.broadcast %cst_125 : f32 to vector<8x64xf32>
    %130 = arith.maximumf %128, %129 : vector<8x64xf32>
    %131 = arith.addf %130, %98 : vector<8x64xf32>
    %cst_126 = arith.constant 0.000000e+00 : f32
    %132 = vector.broadcast %cst_126 : f32 to vector<8x64xf32>
    %133 = arith.maximumf %131, %132 : vector<8x64xf32>
    %c1_127 = arith.constant 1 : index
    %c0_128 = arith.constant 0 : index
    %134 = vector.load %arg25[%c1_127, %c0_128] : memref<10x64xf32, #tpu.memory_space<vmem>>, vector<8x64xf32>
    tpu.vector_store %arg25[%c1_127, %c0_128], %133 {strides = array<i32>} : memref<10x64xf32, #tpu.memory_space<vmem>>, vector<8x64xf32>,
    %c0_129 = arith.constant 0 : index
    %c0_130 = arith.constant 0 : index
    %135 = vector.load %arg25[%c0_129, %c0_130] : memref<10x64xf32, #tpu.memory_space<vmem>>, vector<8x64xf32>
    %c1_131 = arith.constant 1 : index
    %c0_132 = arith.constant 0 : index
    %136 = vector.load %arg25[%c1_131, %c0_132] : memref<10x64xf32, #tpu.memory_space<vmem>>, vector<8x64xf32>
    %c2_133 = arith.constant 2 : index
    %c0_134 = arith.constant 0 : index
    %137 = vector.load %arg25[%c2_133, %c0_134] : memref<10x64xf32, #tpu.memory_space<vmem>>, vector<8x64xf32>
    %138 = tpu.concatenate %135, %136, %137 in 1 : vector<8x64xf32>, vector<8x64xf32>, vector<8x64xf32> -> vector<8x192xf32>
    %139 = arith.truncf %138 : vector<8x192xf32> to vector<8x192xbf16>
    %c0_135 = arith.constant 0 : index
    %c0_136 = arith.constant 0 : index
    %140 = vector.load %arg18[%c0_135, %c0_136] : memref<192x64xbf16, #tpu.memory_space<vmem>>, vector<192x64xbf16>
    %cst_137 = arith.constant dense<0.000000e+00> : vector<8x64xf32>
    %141 = tpu.matmul %139, %140, %cst_137 {dimension_numbers = #tpu.dot_dimension_numbers<[1], [0], [0], [1], [0, 0, 1, 1], [], []>} : vector<8x192xbf16>, vector<192x64xbf16>, vector<8x64xf32> -> vector<8x64xf32>
    %c0_138 = arith.constant 0 : index
    %c0_139 = arith.constant 0 : index
    %142 = vector.load %arg19[%c0_138, %c0_139] : memref<2x64xf32, #tpu.memory_space<vmem>>, vector<1x64xf32>
    %143 = vector.broadcast %142 : vector<1x64xf32> to vector<8x64xf32>
    %144 = arith.mulf %141, %143 : vector<8x64xf32>
    %c1_140 = arith.constant 1 : index
    %c0_141 = arith.constant 0 : index
    %145 = vector.load %arg19[%c1_140, %c0_141] : memref<2x64xf32, #tpu.memory_space<vmem>>, vector<1x64xf32>
    %146 = vector.broadcast %145 : vector<1x64xf32> to vector<8x64xf32>
    %147 = arith.addf %144, %146 : vector<8x64xf32>
    %148 = vector.extract_strided_slice %147 {offsets = [0, 0], sizes = [8, 32], strides = [1, 1]} : vector<8x64xf32> to vector<8x32xf32>
    %cst_142 = arith.constant 0.000000e+00 : f32
    %149 = vector.broadcast %cst_142 : f32 to vector<8x32xf32>
    %150 = arith.maximumf %148, %149 : vector<8x32xf32>
    %151 = vector.extract_strided_slice %147 {offsets = [0, 32], sizes = [8, 32], strides = [1, 1]} : vector<8x64xf32> to vector<8x32xf32>
    %c1_143 = arith.constant 1 : index
    %c0_144 = arith.constant 0 : index
    %152 = vector.load %arg24[%c1_143, %c0_144] : memref<10x32xf32, #tpu.memory_space<vmem>>, vector<8x32xf32>
    tpu.vector_store %arg24[%c1_143, %c0_144], %150 {strides = array<i32>} : memref<10x32xf32, #tpu.memory_space<vmem>>, vector<8x32xf32>,
    %c0_145 = arith.constant 0 : index
    %c0_146 = arith.constant 0 : index
    %153 = vector.load %arg24[%c0_145, %c0_146] : memref<10x32xf32, #tpu.memory_space<vmem>>, vector<8x32xf32>
    %c1_147 = arith.constant 1 : index
    %c0_148 = arith.constant 0 : index
    %154 = vector.load %arg24[%c1_147, %c0_148] : memref<10x32xf32, #tpu.memory_space<vmem>>, vector<8x32xf32>
    %c2_149 = arith.constant 2 : index
    %c0_150 = arith.constant 0 : index
    %155 = vector.load %arg24[%c2_149, %c0_150] : memref<10x32xf32, #tpu.memory_space<vmem>>, vector<8x32xf32>
    %156 = tpu.concatenate %153, %154, %155 in 1 : vector<8x32xf32>, vector<8x32xf32>, vector<8x32xf32> -> vector<8x96xf32>
    %157 = arith.truncf %156 : vector<8x96xf32> to vector<8x96xbf16>
    %c0_151 = arith.constant 0 : index
    %c0_152 = arith.constant 0 : index
    %158 = vector.load %arg16[%c0_151, %c0_152] : memref<96x32xbf16, #tpu.memory_space<vmem>>, vector<96x32xbf16>
    %cst_153 = arith.constant dense<0.000000e+00> : vector<8x32xf32>
    %159 = tpu.matmul %157, %158, %cst_153 {dimension_numbers = #tpu.dot_dimension_numbers<[1], [0], [0], [1], [0, 0, 1, 1], [], []>} : vector<8x96xbf16>, vector<96x32xbf16>, vector<8x32xf32> -> vector<8x32xf32>
    %c0_154 = arith.constant 0 : index
    %c0_155 = arith.constant 0 : index
    %160 = vector.load %arg17[%c0_154, %c0_155] : memref<2x32xf32, #tpu.memory_space<vmem>>, vector<1x32xf32>
    %161 = vector.broadcast %160 : vector<1x32xf32> to vector<8x32xf32>
    %162 = arith.mulf %159, %161 : vector<8x32xf32>
    %c1_156 = arith.constant 1 : index
    %c0_157 = arith.constant 0 : index
    %163 = vector.load %arg17[%c1_156, %c0_157] : memref<2x32xf32, #tpu.memory_space<vmem>>, vector<1x32xf32>
    %164 = vector.broadcast %163 : vector<1x32xf32> to vector<8x32xf32>
    %165 = arith.addf %162, %164 : vector<8x32xf32>
    %cst_158 = arith.constant 0.000000e+00 : f32
    %166 = vector.broadcast %cst_158 : f32 to vector<8x32xf32>
    %167 = arith.maximumf %165, %166 : vector<8x32xf32>
    %168 = arith.addf %167, %151 : vector<8x32xf32>
    %cst_159 = arith.constant 0.000000e+00 : f32
    %169 = vector.broadcast %cst_159 : f32 to vector<8x32xf32>
    %170 = arith.maximumf %168, %169 : vector<8x32xf32>
    %171 = arith.truncf %170 : vector<8x32xf32> to vector<8x32xbf16>
    %c0_160 = arith.constant 0 : index
    %c0_161 = arith.constant 0 : index
    %172 = vector.load %arg20[%c0_160, %c0_161] : memref<16x8xbf16, #tpu.memory_space<vmem>>, vector<16x8xbf16>
    %cst_162 = arith.constant dense<0.000000e+00> : vector<16x32xf32>
    %173 = tpu.matmul %172, %171, %cst_162 {dimension_numbers = #tpu.dot_dimension_numbers<[1], [0], [0], [1], [0, 0, 1, 1], [], []>} : vector<16x8xbf16>, vector<8x32xbf16>, vector<16x32xf32> -> vector<16x32xf32>
    %174 = arith.truncf %173 : vector<16x32xf32> to vector<16x32xbf16>
    %c0_163 = arith.constant 0 : index
    %c0_164 = arith.constant 0 : index
    %175 = vector.load %arg21[%c0_163, %c0_164] : memref<32x64xbf16, #tpu.memory_space<vmem>>, vector<32x64xbf16>
    %cst_165 = arith.constant dense<0.000000e+00> : vector<16x64xf32>
    %176 = tpu.matmul %174, %175, %cst_165 {dimension_numbers = #tpu.dot_dimension_numbers<[1], [0], [0], [1], [0, 0, 1, 1], [], []>} : vector<16x32xbf16>, vector<32x64xbf16>, vector<16x64xf32> -> vector<16x64xf32>
    %177 = arith.addf %176, %45 : vector<16x64xf32>
    %c0_166 = arith.constant 0 : index
    %c0_167 = arith.constant 0 : index
    %c0_168 = arith.constant 0 : index
    %178 = vector.load %arg22[%c0_166, %c0_167, %c0_168] : memref<1x16x64xf32, #tpu.memory_space<vmem>>, vector<1x16x64xf32>
    %179 = vector.shape_cast %178 : vector<1x16x64xf32> to vector<16x64xf32>
    %180 = vector.shape_cast %177 : vector<16x64xf32> to vector<1x16x64xf32>
    tpu.vector_store %arg22[%c0_166, %c0_167, %c0_168], %180 {strides = array<i32>} : memref<1x16x64xf32, #tpu.memory_space<vmem>>, vector<1x16x64xf32>,
    return
  }
  func.func @transform_0(%arg0: i32) -> (i32, i32, i32) {
    %c0_i32 = arith.constant 0 : i32
    %c0_i32_0 = arith.constant 0 : i32
    %c0_i32_1 = arith.constant 0 : i32
    return %arg0, %c0_i32, %c0_i32_0 : i32, i32, i32
  }
  func.func @transform_1(%arg0: i32) -> (i32, i32) {
    %c0_i32 = arith.constant 0 : i32
    %c0_i32_0 = arith.constant 0 : i32
    %c0_i32_1 = arith.constant 0 : i32
    return %c0_i32, %c0_i32_0 : i32, i32
  }
  func.func @transform_2(%arg0: i32) -> (i32, i32) {
    %c0_i32 = arith.constant 0 : i32
    %c0_i32_0 = arith.constant 0 : i32
    %c0_i32_1 = arith.constant 0 : i32
    return %c0_i32, %c0_i32_0 : i32, i32
  }
  func.func @transform_3(%arg0: i32) -> (i32, i32) {
    %c0_i32 = arith.constant 0 : i32
    %c0_i32_0 = arith.constant 0 : i32
    %c0_i32_1 = arith.constant 0 : i32
    return %c0_i32, %c0_i32_0 : i32, i32
  }
  func.func @transform_4(%arg0: i32) -> (i32, i32) {
    %c0_i32 = arith.constant 0 : i32
    %c0_i32_0 = arith.constant 0 : i32
    %c0_i32_1 = arith.constant 0 : i32
    return %c0_i32, %c0_i32_0 : i32, i32
  }
  func.func @transform_5(%arg0: i32) -> (i32, i32, i32) {
    %c0_i32 = arith.constant 0 : i32
    %c0_i32_0 = arith.constant 0 : i32
    %c0_i32_1 = arith.constant 0 : i32
    %c0_i32_2 = arith.constant 0 : i32
    return %c0_i32, %c0_i32_0, %c0_i32_1 : i32, i32, i32
  }
  func.func @transform_6(%arg0: i32) -> (i32, i32, i32) {
    %c0_i32 = arith.constant 0 : i32
    %c0_i32_0 = arith.constant 0 : i32
    %c0_i32_1 = arith.constant 0 : i32
    %c0_i32_2 = arith.constant 0 : i32
    return %c0_i32, %c0_i32_0, %c0_i32_1 : i32, i32, i32
  }
  func.func @transform_7(%arg0: i32) -> (i32, i32) {
    %c0_i32 = arith.constant 0 : i32
    %c0_i32_0 = arith.constant 0 : i32
    %c0_i32_1 = arith.constant 0 : i32
    return %c0_i32, %c0_i32_0 : i32, i32
  }
  func.func @transform_8(%arg0: i32) -> (i32, i32) {
    %c0_i32 = arith.constant 0 : i32
    %c0_i32_0 = arith.constant 0 : i32
    %c0_i32_1 = arith.constant 0 : i32
    return %c0_i32, %c0_i32_0 : i32, i32
  }
  func.func @transform_9(%arg0: i32) -> (i32, i32) {
    %c0_i32 = arith.constant 0 : i32
    %c0_i32_0 = arith.constant 0 : i32
    %c0_i32_1 = arith.constant 0 : i32
    return %c0_i32, %c0_i32_0 : i32, i32
  }
  func.func @transform_10(%arg0: i32) -> (i32, i32) {
    %c0_i32 = arith.constant 0 : i32
    %c0_i32_0 = arith.constant 0 : i32
    %c0_i32_1 = arith.constant 0 : i32
    return %c0_i32, %c0_i32_0 : i32, i32
  }
  func.func @transform_11(%arg0: i32) -> (i32, i32) {
    %c0_i32 = arith.constant 0 : i32
    %c0_i32_0 = arith.constant 0 : i32
    %c0_i32_1 = arith.constant 0 : i32
    return %c0_i32, %c0_i32_0 : i32, i32
  }
  func.func @transform_12(%arg0: i32) -> (i32, i32) {
    %c0_i32 = arith.constant 0 : i32
    %c0_i32_0 = arith.constant 0 : i32
    %c0_i32_1 = arith.constant 0 : i32
    return %c0_i32, %c0_i32_0 : i32, i32
  }
  func.func @transform_13(%arg0: i32) -> (i32, i32) {
    %c0_i32 = arith.constant 0 : i32
    %c0_i32_0 = arith.constant 0 : i32
    %c0_i32_1 = arith.constant 0 : i32
    return %c0_i32, %c0_i32_0 : i32, i32
  }
  func.func @transform_14(%arg0: i32) -> (i32, i32) {
    %c0_i32 = arith.constant 0 : i32
    %c0_i32_0 = arith.constant 0 : i32
    %c0_i32_1 = arith.constant 0 : i32
    return %c0_i32, %c0_i32_0 : i32, i32
  }
  func.func @transform_15(%arg0: i32) -> (i32, i32) {
    %c0_i32 = arith.constant 0 : i32
    %c0_i32_0 = arith.constant 0 : i32
    %c0_i32_1 = arith.constant 0 : i32
    return %c0_i32, %c0_i32_0 : i32, i32
  }
  func.func @transform_16(%arg0: i32) -> (i32, i32) {
    %c0_i32 = arith.constant 0 : i32
    %c0_i32_0 = arith.constant 0 : i32
    %c0_i32_1 = arith.constant 0 : i32
    return %c0_i32, %c0_i32_0 : i32, i32
  }
  func.func @transform_17(%arg0: i32) -> (i32, i32) {
    %c0_i32 = arith.constant 0 : i32
    %c0_i32_0 = arith.constant 0 : i32
    %c0_i32_1 = arith.constant 0 : i32
    return %c0_i32, %c0_i32_0 : i32, i32
  }
  func.func @transform_18(%arg0: i32) -> (i32, i32) {
    %c0_i32 = arith.constant 0 : i32
    %c0_i32_0 = arith.constant 0 : i32
    %c0_i32_1 = arith.constant 0 : i32
    return %c0_i32, %c0_i32_0 : i32, i32
  }
  func.func @transform_19(%arg0: i32) -> (i32, i32) {
    %c0_i32 = arith.constant 0 : i32
    %c0_i32_0 = arith.constant 0 : i32
    %c0_i32_1 = arith.constant 0 : i32
    return %c0_i32, %c0_i32_0 : i32, i32
  }
  func.func @transform_20(%arg0: i32) -> (i32, i32) {
    %c0_i32 = arith.constant 0 : i32
    %c0_i32_0 = arith.constant 0 : i32
    %c0_i32_1 = arith.constant 0 : i32
    return %c0_i32, %c0_i32_0 : i32, i32
  }
  func.func @transform_21(%arg0: i32) -> (i32, i32, i32) {
    %c0_i32 = arith.constant 0 : i32
    %c0_i32_0 = arith.constant 0 : i32
    %c0_i32_1 = arith.constant 0 : i32
    return %arg0, %c0_i32, %c0_i32_0 : i32, i32, i32
  }
}

</mosaic_0001>

<llo_original>
// kernel: tile.85
$region0: #{tile.85}
  #allocation0 [shape = 's32[1]{0}', space=sflag, size = 0x4, scoped, tag = 'scoped memory for tile.85']
  %s0 = inlined_call_operand.vmem [shape: f32[4], index: 0, kind: input, shape index: {}]
  %s1 = inlined_call_operand.vmem [shape: f32[16,4], index: 1, kind: output, shape index: {}]
  // Predicated region
  $region2: #{tile.85} parent=0 // pred_check
    _
  $region3: #{tile.85} parent=0 // pred_check_branch
    %3 = sbr.rel (0) target = $region5
  $region4: #{tile.85} parent=0 // pred_region
    _
  $region5: #{tile.85} parent=0 // pred_fallthru
    _
  %v4 = vld [vmem:[%s0] ss:$0 sm:$0xff]
  %5 = vst [vmem:[%s1] sm:$0xff] %v4
  %s6 = scalar_lea.vmem %s1, 8
  %7 = vst [vmem:[%s6] sm:$0xff] %v4

// kernel: tile.87
$region0: #{tile.87}
  %s0 = inlined_call_operand.vmem [shape: f32[16,4], index: 0, kind: input, shape index: {}]
  %s1 = inlined_call_operand.vmem [shape: f32[1,64], index: 1, kind: output, shape index: {}]
  $region1: #{tile.87} parent=0
    #allocation0 [shape = 'u8[4096]{0}', space=vmem, size = 0x1000, scoped, tag = 'scoped mem for output reshape']
    %v2 = vld [vmem:[%s0] sm:$0x1]
    %vm3 = vcmask 31744
    %4 = vst.msk [vmem:[#allocation0] sm:$0x1] %vm3, %v2
    %s5 = scalar_lea.vmem %s0, 15
    %v6 = vld [vmem:[%s5] sm:$0x1]
    %7 = vrot.lane.b32.xlu0 %v6, 60
    %v8 = vpop.permute.xlu0 %7
    %vm9 = vcmask 523744
    %10 = vst.msk [vmem:[#allocation0] sm:$0x1] %vm9, %v8
    %s11 = scalar_lea.vmem %s0, 14
    %v12 = vld [vmem:[%s11] sm:$0x1]
    %13 = vrot.lane.b32.xlu0 %v12, 56
    %v14 = vpop.permute.xlu0 %13
    %vm15 = vcmask 490944
    %16 = vst.msk [vmem:[#allocation0] sm:$0x1] %vm15, %v14
    %s17 = scalar_lea.vmem %s0, 13
    %v18 = vld [vmem:[%s17] sm:$0x1]
    %19 = vrot.lane.b32.xlu0 %v18, 52
    %v20 = vpop.permute.xlu0 %19
    %vm21 = vcmask 458144
    %22 = vst.msk [vmem:[#allocation0] sm:$0x1] %vm21, %v20
    %s23 = scalar_lea.vmem %s0, 12
    %v24 = vld [vmem:[%s23] sm:$0x1]
    %25 = vrot.lane.b32.xlu0 %v24, 48
    %v26 = vpop.permute.xlu0 %25
    %vm27 = vcmask 425344
    %28 = vst.msk [vmem:[#allocation0] sm:$0x1] %vm27, %v26
    %s29 = scalar_lea.vmem %s0, 11
    %v30 = vld [vmem:[%s29] sm:$0x1]
    %31 = vrot.lane.b32.xlu0 %v30, 44
    %v32 = vpop.permute.xlu0 %31
    %vm33 = vcmask 392544
    %34 = vst.msk [vmem:[#allocation0] sm:$0x1] %vm33, %v32
    %s35 = scalar_lea.vmem %s0, 10
    %v36 = vld [vmem:[%s35] sm:$0x1]
    %37 = vrot.lane.b32.xlu0 %v36, 40
    %v38 = vpop.permute.xlu0 %37
    %vm39 = vcmask 359744
    %40 = vst.msk [vmem:[#allocation0] sm:$0x1] %vm39, %v38
    %s41 = scalar_lea.vmem %s0, 9
    %v42 = vld [vmem:[%s41] sm:$0x1]
    %43 = vrot.lane.b32.xlu0 %v42, 36
    %v44 = vpop.permute.xlu0 %43
    %vm45 = vcmask 326944
    %46 = vst.msk [vmem:[#allocation0] sm:$0x1] %vm45, %v44
    %s47 = scalar_lea.vmem %s0, 8
    %v48 = vld [vmem:[%s47] sm:$0x1]
    %49 = vrot.lane.b32.xlu0 %v48, 32
    %v50 = vpop.permute.xlu0 %49
    %vm51 = vcmask 294144
    %52 = vst.msk [vmem:[#allocation0] sm:$0x1] %vm51, %v50
    %s53 = scalar_lea.vmem %s0, 7
    %v54 = vld [vmem:[%s53] sm:$0x1]
    %55 = vrot.lane.b32.xlu0 %v54, 28
    %v56 = vpop.permute.xlu0 %55
    %vm57 = vcmask 261344
    %58 = vst.msk [vmem:[#allocation0] sm:$0x1] %vm57, %v56
    %s59 = scalar_lea.vmem %s0, 6
    %v60 = vld [vmem:[%s59] sm:$0x1]
    %61 = vrot.lane.b32.xlu0 %v60, 24
    %v62 = vpop.permute.xlu0 %61
    %vm63 = vcmask 228544
    %64 = vst.msk [vmem:[#allocation0] sm:$0x1] %vm63, %v62
    %s65 = scalar_lea.vmem %s0, 5
    %v66 = vld [vmem:[%s65] sm:$0x1]
    %67 = vrot.lane.b32.xlu0 %v66, 20
    %v68 = vpop.permute.xlu0 %67
    %vm69 = vcmask 195744
    %70 = vst.msk [vmem:[#allocation0] sm:$0x1] %vm69, %v68
    %s71 = scalar_lea.vmem %s0, 4
    %v72 = vld [vmem:[%s71] sm:$0x1]
    %73 = vrot.lane.b32.xlu0 %v72, 16
    %v74 = vpop.permute.xlu0 %73
    %vm75 = vcmask 162944
    %76 = vst.msk [vmem:[#allocation0] sm:$0x1] %vm75, %v74
    %s77 = scalar_lea.vmem %s0, 3
    %v78 = vld [vmem:[%s77] sm:$0x1]
    %79 = vrot.lane.b32.xlu0 %v78, 12
    %v80 = vpop.permute.xlu0 %79
    %vm81 = vcmask 130144
    %82 = vst.msk [vmem:[#allocation0] sm:$0x1] %vm81, %v80
    %s83 = scalar_lea.vmem %s0, 2
    %v84 = vld [vmem:[%s83] sm:$0x1]
    %85 = vrot.lane.b32.xlu0 %v84, 8
    %v86 = vpop.permute.xlu0 %85
    %vm87 = vcmask 97344
    %88 = vst.msk [vmem:[#allocation0] sm:$0x1] %vm87, %v86
    %s89 = scalar_lea.vmem %s0, 1
    %v90 = vld [vmem:[%s89] sm:$0x1]
    %91 = vrot.lane.b32.xlu0 %v90, 4
    %v92 = vpop.permute.xlu0 %91
    %vm93 = vcmask 64544
    %94 = vst.msk [vmem:[#allocation0] sm:$0x1] %vm93, %v92
    %s96 = sshllo.u32 0, 1
    %v98 = vld [vmem:[#allocation0] sm:%s96]
    %s99 = sshllo.u32 0, 1
    %100 = vst [vmem:[%s1] sm:%s99] %v98

// kernel: tile.101
$region0: #{tile.101}
  #allocation0 [shape = 's32[1]{0}', space=sflag, size = 0x4, scoped, tag = 'scoped memory for tile.101']
  %s0 = inlined_call_operand.vmem [shape: f32[8], index: 0, kind: input, shape index: {}]
  %s1 = inlined_call_operand.vmem [shape: f32[8,8], index: 1, kind: output, shape index: {}]
  // Predicated region
  $region2: #{tile.101} parent=0 // pred_check
    _
  $region3: #{tile.101} parent=0 // pred_check_branch
    %3 = sbr.rel (0) target = $region5
  $region4: #{tile.101} parent=0 // pred_region
    _
  $region5: #{tile.101} parent=0 // pred_fallthru
    _
  %v4 = vld [vmem:[%s0] ss:$0 sm:$0xff]
  %5 = vst [vmem:[%s1] sm:$0xff] %v4

// kernel: tile.103
$region0: #{tile.103}
  %s0 = inlined_call_operand.vmem [shape: f32[8,8], index: 0, kind: input, shape index: {}]
  %s1 = inlined_call_operand.vmem [shape: f32[1,64], index: 1, kind: output, shape index: {}]
  $region1: #{tile.103} parent=0
    #allocation0 [shape = 'u8[4096]{0}', space=vmem, size = 0x1000, scoped, tag = 'scoped mem for output reshape']
    %v2 = vld [vmem:[%s0] sm:$0x1]
    %vm3 = vcmask 64512
    %4 = vst.msk [vmem:[#allocation0] sm:$0x1] %vm3, %v2
    %s5 = scalar_lea.vmem %s0, 7
    %v6 = vld [vmem:[%s5] sm:$0x1]
    %7 = vrot.lane.b32.xlu0 %v6, 56
    %v8 = vpop.permute.xlu0 %7
    %vm9 = vcmask 523712
    %10 = vst.msk [vmem:[#allocation0] sm:$0x1] %vm9, %v8
    %s11 = scalar_lea.vmem %s0, 6
    %v12 = vld [vmem:[%s11] sm:$0x1]
    %13 = vrot.lane.b32.xlu0 %v12, 48
    %v14 = vpop.permute.xlu0 %13
    %vm15 = vcmask 458112
    %16 = vst.msk [vmem:[#allocation0] sm:$0x1] %vm15, %v14
    %s17 = scalar_lea.vmem %s0, 5
    %v18 = vld [vmem:[%s17] sm:$0x1]
    %19 = vrot.lane.b32.xlu0 %v18, 40
    %v20 = vpop.permute.xlu0 %19
    %vm21 = vcmask 392512
    %22 = vst.msk [vmem:[#allocation0] sm:$0x1] %vm21, %v20
    %s23 = scalar_lea.vmem %s0, 4
    %v24 = vld [vmem:[%s23] sm:$0x1]
    %25 = vrot.lane.b32.xlu0 %v24, 32
    %v26 = vpop.permute.xlu0 %25
    %vm27 = vcmask 326912
    %28 = vst.msk [vmem:[#allocation0] sm:$0x1] %vm27, %v26
    %s29 = scalar_lea.vmem %s0, 3
    %v30 = vld [vmem:[%s29] sm:$0x1]
    %31 = vrot.lane.b32.xlu0 %v30, 24
    %v32 = vpop.permute.xlu0 %31
    %vm33 = vcmask 261312
    %34 = vst.msk [vmem:[#allocation0] sm:$0x1] %vm33, %v32
    %s35 = scalar_lea.vmem %s0, 2
    %v36 = vld [vmem:[%s35] sm:$0x1]
    %37 = vrot.lane.b32.xlu0 %v36, 16
    %v38 = vpop.permute.xlu0 %37
    %vm39 = vcmask 195712
    %40 = vst.msk [vmem:[#allocation0] sm:$0x1] %vm39, %v38
    %s41 = scalar_lea.vmem %s0, 1
    %v42 = vld [vmem:[%s41] sm:$0x1]
    %43 = vrot.lane.b32.xlu0 %v42, 8
    %v44 = vpop.permute.xlu0 %43
    %vm45 = vcmask 130112
    %46 = vst.msk [vmem:[#allocation0] sm:$0x1] %vm45, %v44
    %s48 = sshllo.u32 0, 1
    %v50 = vld [vmem:[#allocation0] sm:%s48]
    %s51 = sshllo.u32 0, 1
    %52 = vst [vmem:[%s1] sm:%s51] %v50

// kernel: tile.157
$region0: #{tile.157}
  #allocation0 [shape = 's32[1]{0}', space=sflag, size = 0x4, scoped, tag = 'scoped memory for tile.157']
  %s0 = inlined_call_operand.vmem [shape: f32[4], index: 0, kind: input, shape index: {}]
  %s1 = inlined_call_operand.vmem [shape: f32[8,4], index: 1, kind: output, shape index: {}]
  // Predicated region
  $region2: #{tile.157} parent=0 // pred_check
    _
  $region3: #{tile.157} parent=0 // pred_check_branch
    %3 = sbr.rel (0) target = $region5
  $region4: #{tile.157} parent=0 // pred_region
    _
  $region5: #{tile.157} parent=0 // pred_fallthru
    _
  %v4 = vld [vmem:[%s0] ss:$0 sm:$0xff]
  %5 = vst [vmem:[%s1] sm:$0xff] %v4

// kernel: tile.159
$region0: #{tile.159}
  %s0 = inlined_call_operand.vmem [shape: f32[8,4], index: 0, kind: input, shape index: {}]
  %s1 = inlined_call_operand.vmem [shape: f32[1,32], index: 1, kind: output, shape index: {}]
  $region1: #{tile.159} parent=0
    #allocation0 [shape = 'u8[4096]{0}', space=vmem, size = 0x1000, scoped, tag = 'scoped mem for output reshape']
    %v2 = vld [vmem:[%s0] sm:$0x1]
    %vm3 = vcmask 31744
    %4 = vst.msk [vmem:[#allocation0] sm:$0x1] %vm3, %v2
    %s5 = scalar_lea.vmem %s0, 7
    %v6 = vld [vmem:[%s5] sm:$0x1]
    %7 = vrot.lane.b32.xlu0 %v6, 28
    %v8 = vpop.permute.xlu0 %7
    %vm9 = vcmask 261344
    %10 = vst.msk [vmem:[#allocation0] sm:$0x1] %vm9, %v8
    %s11 = scalar_lea.vmem %s0, 6
    %v12 = vld [vmem:[%s11] sm:$0x1]
    %13 = vrot.lane.b32.xlu0 %v12, 24
    %v14 = vpop.permute.xlu0 %13
    %vm15 = vcmask 228544
    %16 = vst.msk [vmem:[#allocation0] sm:$0x1] %vm15, %v14
    %s17 = scalar_lea.vmem %s0, 5
    %v18 = vld [vmem:[%s17] sm:$0x1]
    %19 = vrot.lane.b32.xlu0 %v18, 20
    %v20 = vpop.permute.xlu0 %19
    %vm21 = vcmask 195744
    %22 = vst.msk [vmem:[#allocation0] sm:$0x1] %vm21, %v20
    %s23 = scalar_lea.vmem %s0, 4
    %v24 = vld [vmem:[%s23] sm:$0x1]
    %25 = vrot.lane.b32.xlu0 %v24, 16
    %v26 = vpop.permute.xlu0 %25
    %vm27 = vcmask 162944
    %28 = vst.msk [vmem:[#allocation0] sm:$0x1] %vm27, %v26
    %s29 = scalar_lea.vmem %s0, 3
    %v30 = vld [vmem:[%s29] sm:$0x1]
    %31 = vrot.lane.b32.xlu0 %v30, 12
    %v32 = vpop.permute.xlu0 %31
    %vm33 = vcmask 130144
    %34 = vst.msk [vmem:[#allocation0] sm:$0x1] %vm33, %v32
    %s35 = scalar_lea.vmem %s0, 2
    %v36 = vld [vmem:[%s35] sm:$0x1]
    %37 = vrot.lane.b32.xlu0 %v36, 8
    %v38 = vpop.permute.xlu0 %37
    %vm39 = vcmask 97344
    %40 = vst.msk [vmem:[#allocation0] sm:$0x1] %vm39, %v38
    %s41 = scalar_lea.vmem %s0, 1
    %v42 = vld [vmem:[%s41] sm:$0x1]
    %43 = vrot.lane.b32.xlu0 %v42, 4
    %v44 = vpop.permute.xlu0 %43
    %vm45 = vcmask 64544
    %46 = vst.msk [vmem:[#allocation0] sm:$0x1] %vm45, %v44
    %s48 = sshllo.u32 0, 1
    %v50 = vld [vmem:[#allocation0] sm:%s48]
    %s51 = sshllo.u32 0, 1
    %52 = vst [vmem:[%s1] sm:%s51] %v50

// kernel: _lambda_.1
$region0: #{_lambda_.1}
  #allocation0 [shape = 'u32[]', space=smem, size = 0x4, offset = 0x4, fixed_abs, tag = 'smem constant byte address 0x4 - core index']
  #allocation1 [shape = 'u32[144,128]{1,0:T(1,128)}', space=vmem, size = 0x12000, scoped, tag = 'internal scratch']
  #allocation2 [shape = 'f32[18,64]{1,0:T(8,128)}', space=vmem, size = 0x3000, scoped, tag = 'scratch operand']
  #allocation3 [shape = 'f32[10,32]{1,0:T(8,128)}', space=vmem, size = 0x2000, scoped, tag = 'scratch operand']
  #allocation4 [shape = 'f32[10,64]{1,0:T(8,128)}', space=vmem, size = 0x2000, scoped, tag = 'scratch operand']
  %s0 = inlined_call_operand.vmem [shape: f32[2,16,64], index: 0, kind: input, shape index: {}]
  %s1 = inlined_call_operand.vmem [shape: bf16[192,64], index: 1, kind: input, shape index: {}]
  %s2 = inlined_call_operand.vmem [shape: f32[2,64], index: 2, kind: input, shape index: {}]
  %s3 = inlined_call_operand.vmem [shape: bf16[192,64], index: 3, kind: input, shape index: {}]
  %s4 = inlined_call_operand.vmem [shape: f32[2,64], index: 4, kind: input, shape index: {}]
  %s5 = inlined_call_operand.vmem [shape: bf16[2,8,16], index: 5, kind: input, shape index: {}]
  %s6 = inlined_call_operand.vmem [shape: bf16[2,64,32], index: 6, kind: input, shape index: {}]
  %s7 = inlined_call_operand.vmem [shape: bf16[192,64], index: 7, kind: input, shape index: {}]
  %s8 = inlined_call_operand.vmem [shape: f32[2,64], index: 8, kind: input, shape index: {}]
  %s9 = inlined_call_operand.vmem [shape: bf16[96,128], index: 9, kind: input, shape index: {}]
  %s10 = inlined_call_operand.vmem [shape: f32[2,128], index: 10, kind: input, shape index: {}]
  %s11 = inlined_call_operand.vmem [shape: bf16[192,64], index: 11, kind: input, shape index: {}]
  %s12 = inlined_call_operand.vmem [shape: f32[2,64], index: 12, kind: input, shape index: {}]
  %s13 = inlined_call_operand.vmem [shape: bf16[192,64], index: 13, kind: input, shape index: {}]
  %s14 = inlined_call_operand.vmem [shape: f32[2,64], index: 14, kind: input, shape index: {}]
  %s15 = inlined_call_operand.vmem [shape: bf16[96,32], index: 15, kind: input, shape index: {}]
  %s16 = inlined_call_operand.vmem [shape: f32[2,32], index: 16, kind: input, shape index: {}]
  %s17 = inlined_call_operand.vmem [shape: bf16[192,64], index: 17, kind: input, shape index: {}]
  %s18 = inlined_call_operand.vmem [shape: f32[2,64], index: 18, kind: input, shape index: {}]
  %s19 = inlined_call_operand.vmem [shape: bf16[16,8], index: 19, kind: input, shape index: {}]
  %s20 = inlined_call_operand.vmem [shape: bf16[32,64], index: 20, kind: input, shape index: {}]
  %s21 = inlined_call_operand.vmem [shape: f32[2,16,64], index: 21, kind: output, shape index: {}]
  %s22 = sld [smem:[#allocation0]]
  $region117: #{_lambda_.1} parent=0
    _
  %s24 = ssub.s32 1, %s22
  %s25 = scalar_select 0, %s24, %s22
  loop: start=0, step=1, limit=4
  $region2: #{_lambda_.1} parent=0 // loop_pre_header
    _
  $region3: #{_lambda_.1} parent=0 // loop_header
    %s27 = sphi 0, %s31
    %p28 = scmp.ge.s32.totalorder %s27, 4
    %s37 = sphi 0, %s39
    %s40 = sphi 0, %s37
    %s41 = sphi 0, %s40
    %s57 = sphi 0, %s41
    %s61 = sphi 0, %s61
    %s63 = sphi 0, %s61
    %s64 = sphi 0, %s63
    %s78 = sphi 0, %s64
    %s82 = sphi 0, %s82
    %s84 = sphi 0, %s82
    %s85 = sphi 0, %s84
    %s99 = sphi 0, %s85
    %s103 = sphi 0, %s103
    %s105 = sphi 0, %s103
    %s106 = sphi 0, %s105
    %s120 = sphi 0, %s106
    %s124 = sphi 0, %s124
    %s126 = sphi 0, %s124
    %s127 = sphi 0, %s126
    %s141 = sphi 0, %s127
    %s145 = sphi 0, %s145
    %s147 = sphi 0, %s145
    %s148 = sphi 0, %s147
    %s162 = sphi 0, %s148
    %s166 = sphi 0, %s166
    %s168 = sphi 0, %s166
    %s169 = sphi 0, %s168
    %s183 = sphi 0, %s169
    %s187 = sphi 0, %s187
    %s189 = sphi 0, %s187
    %s190 = sphi 0, %s189
    %s204 = sphi 0, %s190
    %s208 = sphi 0, %s208
    %s210 = sphi 0, %s208
    %s211 = sphi 0, %s210
    %s225 = sphi 0, %s211
    %s229 = sphi 0, %s229
    %s231 = sphi 0, %s229
    %s232 = sphi 0, %s231
    %s246 = sphi 0, %s232
    %s250 = sphi 0, %s250
    %s252 = sphi 0, %s250
    %s253 = sphi 0, %s252
    %s267 = sphi 0, %s253
    %s271 = sphi 0, %s271
    %s273 = sphi 0, %s271
    %s274 = sphi 0, %s273
    %s288 = sphi 0, %s274
    %s292 = sphi 0, %s292
    %s294 = sphi 0, %s292
    %s295 = sphi 0, %s294
    %s309 = sphi 0, %s295
    %s313 = sphi 0, %s313
    %s315 = sphi 0, %s313
    %s316 = sphi 0, %s315
    %s330 = sphi 0, %s316
    %s334 = sphi 0, %s334
    %s336 = sphi 0, %s334
    %s337 = sphi 0, %s336
    %s351 = sphi 0, %s337
    %s355 = sphi 0, %s355
    %s357 = sphi 0, %s355
    %s358 = sphi 0, %s357
    %s372 = sphi 0, %s358
    %s376 = sphi 0, %s376
    %s378 = sphi 0, %s376
    %s379 = sphi 0, %s378
    %s393 = sphi 0, %s379
    %s397 = sphi 0, %s397
    %s399 = sphi 0, %s397
    %s400 = sphi 0, %s399
    %s414 = sphi 0, %s400
    %s418 = sphi 0, %s418
    %s420 = sphi 0, %s418
    %s421 = sphi 0, %s420
    %s435 = sphi 0, %s421
    %s439 = sphi 0, %s439
    %s441 = sphi 0, %s439
    %s442 = sphi 0, %s441
    %s456 = sphi 0, %s442
    %s460 = sphi 0, %s460
    %s462 = sphi 0, %s460
    %s463 = sphi 0, %s462
    %s477 = sphi 0, %s463
    %s483 = sphi 0, %s485
    %s486 = sphi 0, %s483
    %s487 = sphi 0, %s486
    %s503 = sphi 0, %s487
  $region4: #{_lambda_.1} parent=0 // loop_header_branch
    %30 = sbr.rel (%p28) target = $region8
  $region5: #{_lambda_.1} parent=0 // loop_body
    %s32 = ssub.s32 %s27, 1
    %s33 = ssub.s32 %s27, 2
    %s34 = sadd.s32 %s27, 1
    %s35 = ssub.s32 %s27, %s34
    %p36 = scmp.eq.s32.totalorder %s35, 0
    %s38 = sadd.s32 %s37, 1
    %s39 = scalar_select %p36, %s37, %s38
    %p42 = pneg %p36
    %p43 = scmp.eq.s32.totalorder %s27, 1
    %p44 = por %p42, %p43
    %p45 = scmp.ne.s32.totalorder %s37, %s40
    %p46 = scmp.eq.s32.totalorder %s27, 0
    %p47 = por %p45, %p46
    %p48 = scmp.ne.s32.totalorder %s37, %s40
    %p49 = scmp.eq.s32.totalorder %s32, 1
    %p50 = por %p48, %p49
    %p51 = scmp.ne.s32.totalorder %s40, %s41
    %p52 = scmp.eq.s32.totalorder %s32, 0
    %p53 = por %p51, %p52
    %p54 = scmp.ne.s32.totalorder %s40, %s41
    %p55 = scmp.eq.s32.totalorder %s33, 1
    %p56 = por %p54, %p55
    %p58 = scmp.ne.s32.totalorder %s41, %s57
    %p59 = scmp.eq.s32.totalorder %s33, 0
    %p60 = por %p58, %p59
    %s62 = sadd.s32 %s61, 1
    %p65 = scmp.eq.s32.totalorder %s27, 1
    %p66 = scmp.ne.s32.totalorder %s61, %s63
    %p67 = scmp.eq.s32.totalorder %s27, 0
    %p68 = por %p66, %p67
    %p69 = scmp.ne.s32.totalorder %s61, %s63
    %p70 = scmp.eq.s32.totalorder %s32, 1
    %p71 = por %p69, %p70
    %p72 = scmp.ne.s32.totalorder %s63, %s64
    %p73 = scmp.eq.s32.totalorder %s32, 0
    %p74 = por %p72, %p73
    %p75 = scmp.ne.s32.totalorder %s63, %s64
    %p76 = scmp.eq.s32.totalorder %s33, 1
    %p77 = por %p75, %p76
    %p79 = scmp.ne.s32.totalorder %s64, %s78
    %p80 = scmp.eq.s32.totalorder %s33, 0
    %p81 = por %p79, %p80
    %s83 = sadd.s32 %s82, 1
    %p86 = scmp.eq.s32.totalorder %s27, 1
    %p87 = scmp.ne.s32.totalorder %s82, %s84
    %p88 = scmp.eq.s32.totalorder %s27, 0
    %p89 = por %p87, %p88
    %p90 = scmp.ne.s32.totalorder %s82, %s84
    %p91 = scmp.eq.s32.totalorder %s32, 1
    %p92 = por %p90, %p91
    %p93 = scmp.ne.s32.totalorder %s84, %s85
    %p94 = scmp.eq.s32.totalorder %s32, 0
    %p95 = por %p93, %p94
    %p96 = scmp.ne.s32.totalorder %s84, %s85
    %p97 = scmp.eq.s32.totalorder %s33, 1
    %p98 = por %p96, %p97
    %p100 = scmp.ne.s32.totalorder %s85, %s99
    %p101 = scmp.eq.s32.totalorder %s33, 0
    %p102 = por %p100, %p101
    %s104 = sadd.s32 %s103, 1
    %p107 = scmp.eq.s32.totalorder %s27, 1
    %p108 = scmp.ne.s32.totalorder %s103, %s105
    %p109 = scmp.eq.s32.totalorder %s27, 0
    %p110 = por %p108, %p109
    %p111 = scmp.ne.s32.totalorder %s103, %s105
    %p112 = scmp.eq.s32.totalorder %s32, 1
    %p113 = por %p111, %p112
    %p114 = scmp.ne.s32.totalorder %s105, %s106
    %p115 = scmp.eq.s32.totalorder %s32, 0
    %p116 = por %p114, %p115
    %p117 = scmp.ne.s32.totalorder %s105, %s106
    %p118 = scmp.eq.s32.totalorder %s33, 1
    %p119 = por %p117, %p118
    %p121 = scmp.ne.s32.totalorder %s106, %s120
    %p122 = scmp.eq.s32.totalorder %s33, 0
    %p123 = por %p121, %p122
    %s125 = sadd.s32 %s124, 1
    %p128 = scmp.eq.s32.totalorder %s27, 1
    %p129 = scmp.ne.s32.totalorder %s124, %s126
    %p130 = scmp.eq.s32.totalorder %s27, 0
    %p131 = por %p129, %p130
    %p132 = scmp.ne.s32.totalorder %s124, %s126
    %p133 = scmp.eq.s32.totalorder %s32, 1
    %p134 = por %p132, %p133
    %p135 = scmp.ne.s32.totalorder %s126, %s127
    %p136 = scmp.eq.s32.totalorder %s32, 0
    %p137 = por %p135, %p136
    %p138 = scmp.ne.s32.totalorder %s126, %s127
    %p139 = scmp.eq.s32.totalorder %s33, 1
    %p140 = por %p138, %p139
    %p142 = scmp.ne.s32.totalorder %s127, %s141
    %p143 = scmp.eq.s32.totalorder %s33, 0
    %p144 = por %p142, %p143
    %s146 = sadd.s32 %s145, 1
    %p149 = scmp.eq.s32.totalorder %s27, 1
    %p150 = scmp.ne.s32.totalorder %s145, %s147
    %p151 = scmp.eq.s32.totalorder %s27, 0
    %p152 = por %p150, %p151
    %p153 = scmp.ne.s32.totalorder %s145, %s147
    %p154 = scmp.eq.s32.totalorder %s32, 1
    %p155 = por %p153, %p154
    %p156 = scmp.ne.s32.totalorder %s147, %s148
    %p157 = scmp.eq.s32.totalorder %s32, 0
    %p158 = por %p156, %p157
    %p159 = scmp.ne.s32.totalorder %s147, %s148
    %p160 = scmp.eq.s32.totalorder %s33, 1
    %p161 = por %p159, %p160
    %p163 = scmp.ne.s32.totalorder %s148, %s162
    %p164 = scmp.eq.s32.totalorder %s33, 0
    %p165 = por %p163, %p164
    %s167 = sadd.s32 %s166, 1
    %p170 = scmp.eq.s32.totalorder %s27, 1
    %p171 = scmp.ne.s32.totalorder %s166, %s168
    %p172 = scmp.eq.s32.totalorder %s27, 0
    %p173 = por %p171, %p172
    %p174 = scmp.ne.s32.totalorder %s166, %s168
    %p175 = scmp.eq.s32.totalorder %s32, 1
    %p176 = por %p174, %p175
    %p177 = scmp.ne.s32.totalorder %s168, %s169
    %p178 = scmp.eq.s32.totalorder %s32, 0
    %p179 = por %p177, %p178
    %p180 = scmp.ne.s32.totalorder %s168, %s169
    %p181 = scmp.eq.s32.totalorder %s33, 1
    %p182 = por %p180, %p181
    %p184 = scmp.ne.s32.totalorder %s169, %s183
    %p185 = scmp.eq.s32.totalorder %s33, 0
    %p186 = por %p184, %p185
    %s188 = sadd.s32 %s187, 1
    %p191 = scmp.eq.s32.totalorder %s27, 1
    %p192 = scmp.ne.s32.totalorder %s187, %s189
    %p193 = scmp.eq.s32.totalorder %s27, 0
    %p194 = por %p192, %p193
    %p195 = scmp.ne.s32.totalorder %s187, %s189
    %p196 = scmp.eq.s32.totalorder %s32, 1
    %p197 = por %p195, %p196
    %p198 = scmp.ne.s32.totalorder %s189, %s190
    %p199 = scmp.eq.s32.totalorder %s32, 0
    %p200 = por %p198, %p199
    %p201 = scmp.ne.s32.totalorder %s189, %s190
    %p202 = scmp.eq.s32.totalorder %s33, 1
    %p203 = por %p201, %p202
    %p205 = scmp.ne.s32.totalorder %s190, %s204
    %p206 = scmp.eq.s32.totalorder %s33, 0
    %p207 = por %p205, %p206
    %s209 = sadd.s32 %s208, 1
    %p212 = scmp.eq.s32.totalorder %s27, 1
    %p213 = scmp.ne.s32.totalorder %s208, %s210
    %p214 = scmp.eq.s32.totalorder %s27, 0
    %p215 = por %p213, %p214
    %p216 = scmp.ne.s32.totalorder %s208, %s210
    %p217 = scmp.eq.s32.totalorder %s32, 1
    %p218 = por %p216, %p217
    %p219 = scmp.ne.s32.totalorder %s210, %s211
    %p220 = scmp.eq.s32.totalorder %s32, 0
    %p221 = por %p219, %p220
    %p222 = scmp.ne.s32.totalorder %s210, %s211
    %p223 = scmp.eq.s32.totalorder %s33, 1
    %p224 = por %p222, %p223
    %p226 = scmp.ne.s32.totalorder %s211, %s225
    %p227 = scmp.eq.s32.totalorder %s33, 0
    %p228 = por %p226, %p227
    %s230 = sadd.s32 %s229, 1
    %p233 = scmp.eq.s32.totalorder %s27, 1
    %p234 = scmp.ne.s32.totalorder %s229, %s231
    %p235 = scmp.eq.s32.totalorder %s27, 0
    %p236 = por %p234, %p235
    %p237 = scmp.ne.s32.totalorder %s229, %s231
    %p238 = scmp.eq.s32.totalorder %s32, 1
    %p239 = por %p237, %p238
    %p240 = scmp.ne.s32.totalorder %s231, %s232
    %p241 = scmp.eq.s32.totalorder %s32, 0
    %p242 = por %p240, %p241
    %p243 = scmp.ne.s32.totalorder %s231, %s232
    %p244 = scmp.eq.s32.totalorder %s33, 1
    %p245 = por %p243, %p244
    %p247 = scmp.ne.s32.totalorder %s232, %s246
    %p248 = scmp.eq.s32.totalorder %s33, 0
    %p249 = por %p247, %p248
    %s251 = sadd.s32 %s250, 1
    %p254 = scmp.eq.s32.totalorder %s27, 1
    %p255 = scmp.ne.s32.totalorder %s250, %s252
    %p256 = scmp.eq.s32.totalorder %s27, 0
    %p257 = por %p255, %p256
    %p258 = scmp.ne.s32.totalorder %s250, %s252
    %p259 = scmp.eq.s32.totalorder %s32, 1
    %p260 = por %p258, %p259
    %p261 = scmp.ne.s32.totalorder %s252, %s253
    %p262 = scmp.eq.s32.totalorder %s32, 0
    %p263 = por %p261, %p262
    %p264 = scmp.ne.s32.totalorder %s252, %s253
    %p265 = scmp.eq.s32.totalorder %s33, 1
    %p266 = por %p264, %p265
    %p268 = scmp.ne.s32.totalorder %s253, %s267
    %p269 = scmp.eq.s32.totalorder %s33, 0
    %p270 = por %p268, %p269
    %s272 = sadd.s32 %s271, 1
    %p275 = scmp.eq.s32.totalorder %s27, 1
    %p276 = scmp.ne.s32.totalorder %s271, %s273
    %p277 = scmp.eq.s32.totalorder %s27, 0
    %p278 = por %p276, %p277
    %p279 = scmp.ne.s32.totalorder %s271, %s273
    %p280 = scmp.eq.s32.totalorder %s32, 1
    %p281 = por %p279, %p280
    %p282 = scmp.ne.s32.totalorder %s273, %s274
    %p283 = scmp.eq.s32.totalorder %s32, 0
    %p284 = por %p282, %p283
    %p285 = scmp.ne.s32.totalorder %s273, %s274
    %p286 = scmp.eq.s32.totalorder %s33, 1
    %p287 = por %p285, %p286
    %p289 = scmp.ne.s32.totalorder %s274, %s288
    %p290 = scmp.eq.s32.totalorder %s33, 0
    %p291 = por %p289, %p290
    %s293 = sadd.s32 %s292, 1
    %p296 = scmp.eq.s32.totalorder %s27, 1
    %p297 = scmp.ne.s32.totalorder %s292, %s294
    %p298 = scmp.eq.s32.totalorder %s27, 0
    %p299 = por %p297, %p298
    %p300 = scmp.ne.s32.totalorder %s292, %s294
    %p301 = scmp.eq.s32.totalorder %s32, 1
    %p302 = por %p300, %p301
    %p303 = scmp.ne.s32.totalorder %s294, %s295
    %p304 = scmp.eq.s32.totalorder %s32, 0
    %p305 = por %p303, %p304
    %p306 = scmp.ne.s32.totalorder %s294, %s295
    %p307 = scmp.eq.s32.totalorder %s33, 1
    %p308 = por %p306, %p307
    %p310 = scmp.ne.s32.totalorder %s295, %s309
    %p311 = scmp.eq.s32.totalorder %s33, 0
    %p312 = por %p310, %p311
    %s314 = sadd.s32 %s313, 1
    %p317 = scmp.eq.s32.totalorder %s27, 1
    %p318 = scmp.ne.s32.totalorder %s313, %s315
    %p319 = scmp.eq.s32.totalorder %s27, 0
    %p320 = por %p318, %p319
    %p321 = scmp.ne.s32.totalorder %s313, %s315
    %p322 = scmp.eq.s32.totalorder %s32, 1
    %p323 = por %p321, %p322
    %p324 = scmp.ne.s32.totalorder %s315, %s316
    %p325 = scmp.eq.s32.totalorder %s32, 0
    %p326 = por %p324, %p325
    %p327 = scmp.ne.s32.totalorder %s315, %s316
    %p328 = scmp.eq.s32.totalorder %s33, 1
    %p329 = por %p327, %p328
    %p331 = scmp.ne.s32.totalorder %s316, %s330
    %p332 = scmp.eq.s32.totalorder %s33, 0
    %p333 = por %p331, %p332
    %s335 = sadd.s32 %s334, 1
    %p338 = scmp.eq.s32.totalorder %s27, 1
    %p339 = scmp.ne.s32.totalorder %s334, %s336
    %p340 = scmp.eq.s32.totalorder %s27, 0
    %p341 = por %p339, %p340
    %p342 = scmp.ne.s32.totalorder %s334, %s336
    %p343 = scmp.eq.s32.totalorder %s32, 1
    %p344 = por %p342, %p343
    %p345 = scmp.ne.s32.totalorder %s336, %s337
    %p346 = scmp.eq.s32.totalorder %s32, 0
    %p347 = por %p345, %p346
    %p348 = scmp.ne.s32.totalorder %s336, %s337
    %p349 = scmp.eq.s32.totalorder %s33, 1
    %p350 = por %p348, %p349
    %p352 = scmp.ne.s32.totalorder %s337, %s351
    %p353 = scmp.eq.s32.totalorder %s33, 0
    %p354 = por %p352, %p353
    %s356 = sadd.s32 %s355, 1
    %p359 = scmp.eq.s32.totalorder %s27, 1
    %p360 = scmp.ne.s32.totalorder %s355, %s357
    %p361 = scmp.eq.s32.totalorder %s27, 0
    %p362 = por %p360, %p361
    %p363 = scmp.ne.s32.totalorder %s355, %s357
    %p364 = scmp.eq.s32.totalorder %s32, 1
    %p365 = por %p363, %p364
    %p366 = scmp.ne.s32.totalorder %s357, %s358
    %p367 = scmp.eq.s32.totalorder %s32, 0
    %p368 = por %p366, %p367
    %p369 = scmp.ne.s32.totalorder %s357, %s358
    %p370 = scmp.eq.s32.totalorder %s33, 1
    %p371 = por %p369, %p370
    %p373 = scmp.ne.s32.totalorder %s358, %s372
    %p374 = scmp.eq.s32.totalorder %s33, 0
    %p375 = por %p373, %p374
    %s377 = sadd.s32 %s376, 1
    %p380 = scmp.eq.s32.totalorder %s27, 1
    %p381 = scmp.ne.s32.totalorder %s376, %s378
    %p382 = scmp.eq.s32.totalorder %s27, 0
    %p383 = por %p381, %p382
    %p384 = scmp.ne.s32.totalorder %s376, %s378
    %p385 = scmp.eq.s32.totalorder %s32, 1
    %p386 = por %p384, %p385
    %p387 = scmp.ne.s32.totalorder %s378, %s379
    %p388 = scmp.eq.s32.totalorder %s32, 0
    %p389 = por %p387, %p388
    %p390 = scmp.ne.s32.totalorder %s378, %s379
    %p391 = scmp.eq.s32.totalorder %s33, 1
    %p392 = por %p390, %p391
    %p394 = scmp.ne.s32.totalorder %s379, %s393
    %p395 = scmp.eq.s32.totalorder %s33, 0
    %p396 = por %p394, %p395
    %s398 = sadd.s32 %s397, 1
    %p401 = scmp.eq.s32.totalorder %s27, 1
    %p402 = scmp.ne.s32.totalorder %s397, %s399
    %p403 = scmp.eq.s32.totalorder %s27, 0
    %p404 = por %p402, %p403
    %p405 = scmp.ne.s32.totalorder %s397, %s399
    %p406 = scmp.eq.s32.totalorder %s32, 1
    %p407 = por %p405, %p406
    %p408 = scmp.ne.s32.totalorder %s399, %s400
    %p409 = scmp.eq.s32.totalorder %s32, 0
    %p410 = por %p408, %p409
    %p411 = scmp.ne.s32.totalorder %s399, %s400
    %p412 = scmp.eq.s32.totalorder %s33, 1
    %p413 = por %p411, %p412
    %p415 = scmp.ne.s32.totalorder %s400, %s414
    %p416 = scmp.eq.s32.totalorder %s33, 0
    %p417 = por %p415, %p416
    %s419 = sadd.s32 %s418, 1
    %p422 = scmp.eq.s32.totalorder %s27, 1
    %p423 = scmp.ne.s32.totalorder %s418, %s420
    %p424 = scmp.eq.s32.totalorder %s27, 0
    %p425 = por %p423, %p424
    %p426 = scmp.ne.s32.totalorder %s418, %s420
    %p427 = scmp.eq.s32.totalorder %s32, 1
    %p428 = por %p426, %p427
    %p429 = scmp.ne.s32.totalorder %s420, %s421
    %p430 = scmp.eq.s32.totalorder %s32, 0
    %p431 = por %p429, %p430
    %p432 = scmp.ne.s32.totalorder %s420, %s421
    %p433 = scmp.eq.s32.totalorder %s33, 1
    %p434 = por %p432, %p433
    %p436 = scmp.ne.s32.totalorder %s421, %s435
    %p437 = scmp.eq.s32.totalorder %s33, 0
    %p438 = por %p436, %p437
    %s440 = sadd.s32 %s439, 1
    %p443 = scmp.eq.s32.totalorder %s27, 1
    %p444 = scmp.ne.s32.totalorder %s439, %s441
    %p445 = scmp.eq.s32.totalorder %s27, 0
    %p446 = por %p444, %p445
    %p447 = scmp.ne.s32.totalorder %s439, %s441
    %p448 = scmp.eq.s32.totalorder %s32, 1
    %p449 = por %p447, %p448
    %p450 = scmp.ne.s32.totalorder %s441, %s442
    %p451 = scmp.eq.s32.totalorder %s32, 0
    %p452 = por %p450, %p451
    %p453 = scmp.ne.s32.totalorder %s441, %s442
    %p454 = scmp.eq.s32.totalorder %s33, 1
    %p455 = por %p453, %p454
    %p457 = scmp.ne.s32.totalorder %s442, %s456
    %p458 = scmp.eq.s32.totalorder %s33, 0
    %p459 = por %p457, %p458
    %s461 = sadd.s32 %s460, 1
    %p464 = scmp.eq.s32.totalorder %s27, 1
    %p465 = scmp.ne.s32.totalorder %s460, %s462
    %p466 = scmp.eq.s32.totalorder %s27, 0
    %p467 = por %p465, %p466
    %p468 = scmp.ne.s32.totalorder %s460, %s462
    %p469 = scmp.eq.s32.totalorder %s32, 1
    %p470 = por %p468, %p469
    %p471 = scmp.ne.s32.totalorder %s462, %s463
    %p472 = scmp.eq.s32.totalorder %s32, 0
    %p473 = por %p471, %p472
    %p474 = scmp.ne.s32.totalorder %s462, %s463
    %p475 = scmp.eq.s32.totalorder %s33, 1
    %p476 = por %p474, %p475
    %p478 = scmp.ne.s32.totalorder %s463, %s477
    %p479 = scmp.eq.s32.totalorder %s33, 0
    %p480 = por %p478, %p479
    %s481 = ssub.s32 %s27, %s34
    %p482 = scmp.eq.s32.totalorder %s481, 0
    %s484 = sadd.s32 %s483, 1
    %s485 = scalar_select %p482, %s483, %s484
    %p488 = pneg %p482
    %p489 = scmp.eq.s32.totalorder %s27, 1
    %p490 = por %p488, %p489
    %p491 = scmp.ne.s32.totalorder %s483, %s486
    %p492 = scmp.eq.s32.totalorder %s27, 0
    %p493 = por %p491, %p492
    %p494 = scmp.ne.s32.totalorder %s483, %s486
    %p495 = scmp.eq.s32.totalorder %s32, 1
    %p496 = por %p494, %p495
    %p497 = scmp.ne.s32.totalorder %s486, %s487
    %p498 = scmp.eq.s32.totalorder %s32, 0
    %p499 = por %p497, %p498
    %p500 = scmp.ne.s32.totalorder %s486, %s487
    %p501 = scmp.eq.s32.totalorder %s33, 1
    %p502 = por %p500, %p501
    %p504 = scmp.ne.s32.totalorder %s487, %s503
    %p505 = scmp.eq.s32.totalorder %s33, 0
    %p506 = por %p504, %p505
    %p507 = scmp.le.s32.totalorder 1, %s27
    %p508 = scmp.lt.s32.totalorder %s27, 3
    %p509 = pnand %p507, %p508
    %p510 = pneg %p509
    // Predicated region
    $region9: #{_lambda_.1} parent=5 // pred_check
      _
    $region10: #{_lambda_.1} parent=5 // pred_check_branch
      %512 = sbr.rel (%p509) target = $region12
    $region11: #{_lambda_.1} parent=5 // pred_region
      %s513 = ssub.s32 %s27, 1
      // Predicated region
      $region13: #{_lambda_.1} parent=11 // pred_check
        %p514 = pneg %p74
      $region14: #{_lambda_.1} parent=11 // pred_check_branch
        %516 = sbr.rel (%p514) target = $region16
      $region15: #{_lambda_.1} parent=11 // pred_region
        _
      $region16: #{_lambda_.1} parent=11 // pred_fallthru
        _
      // Predicated region
      $region17: #{_lambda_.1} parent=11 // pred_check
        %p517 = pneg %p95
      $region18: #{_lambda_.1} parent=11 // pred_check_branch
        %519 = sbr.rel (%p517) target = $region20
      $region19: #{_lambda_.1} parent=11 // pred_region
        _
      $region20: #{_lambda_.1} parent=11 // pred_fallthru
        _
      // Predicated region
      $region21: #{_lambda_.1} parent=11 // pred_check
        %p520 = pneg %p116
      $region22: #{_lambda_.1} parent=11 // pred_check_branch
        %522 = sbr.rel (%p520) target = $region24
      $region23: #{_lambda_.1} parent=11 // pred_region
        _
      $region24: #{_lambda_.1} parent=11 // pred_fallthru
        _
      // Predicated region
      $region25: #{_lambda_.1} parent=11 // pred_check
        %p523 = pneg %p137
      $region26: #{_lambda_.1} parent=11 // pred_check_branch
        %525 = sbr.rel (%p523) target = $region28
      $region27: #{_lambda_.1} parent=11 // pred_region
        _
      $region28: #{_lambda_.1} parent=11 // pred_fallthru
        _
      // Predicated region
      $region29: #{_lambda_.1} parent=11 // pred_check
        %p526 = pneg %p158
      $region30: #{_lambda_.1} parent=11 // pred_check_branch
        %528 = sbr.rel (%p526) target = $region32
      $region31: #{_lambda_.1} parent=11 // pred_region
        _
      $region32: #{_lambda_.1} parent=11 // pred_fallthru
        _
      // Predicated region
      $region33: #{_lambda_.1} parent=11 // pred_check
        %p529 = pneg %p179
      $region34: #{_lambda_.1} parent=11 // pred_check_branch
        %531 = sbr.rel (%p529) target = $region36
      $region35: #{_lambda_.1} parent=11 // pred_region
        _
      $region36: #{_lambda_.1} parent=11 // pred_fallthru
        _
      // Predicated region
      $region37: #{_lambda_.1} parent=11 // pred_check
        %p532 = pneg %p200
      $region38: #{_lambda_.1} parent=11 // pred_check_branch
        %534 = sbr.rel (%p532) target = $region40
      $region39: #{_lambda_.1} parent=11 // pred_region
        _
      $region40: #{_lambda_.1} parent=11 // pred_fallthru
        _
      // Predicated region
      $region41: #{_lambda_.1} parent=11 // pred_check
        %p535 = pneg %p221
      $region42: #{_lambda_.1} parent=11 // pred_check_branch
        %537 = sbr.rel (%p535) target = $region44
      $region43: #{_lambda_.1} parent=11 // pred_region
        _
      $region44: #{_lambda_.1} parent=11 // pred_fallthru
        _
      // Predicated region
      $region45: #{_lambda_.1} parent=11 // pred_check
        %p538 = pneg %p242
      $region46: #{_lambda_.1} parent=11 // pred_check_branch
        %540 = sbr.rel (%p538) target = $region48
      $region47: #{_lambda_.1} parent=11 // pred_region
        _
      $region48: #{_lambda_.1} parent=11 // pred_fallthru
        _
      // Predicated region
      $region49: #{_lambda_.1} parent=11 // pred_check
        %p541 = pneg %p263
      $region50: #{_lambda_.1} parent=11 // pred_check_branch
        %543 = sbr.rel (%p541) target = $region52
      $region51: #{_lambda_.1} parent=11 // pred_region
        _
      $region52: #{_lambda_.1} parent=11 // pred_fallthru
        _
      // Predicated region
      $region53: #{_lambda_.1} parent=11 // pred_check
        %p544 = pneg %p284
      $region54: #{_lambda_.1} parent=11 // pred_check_branch
        %546 = sbr.rel (%p544) target = $region56
      $region55: #{_lambda_.1} parent=11 // pred_region
        _
      $region56: #{_lambda_.1} parent=11 // pred_fallthru
        _
      // Predicated region
      $region57: #{_lambda_.1} parent=11 // pred_check
        %p547 = pneg %p305
      $region58: #{_lambda_.1} parent=11 // pred_check_branch
        %549 = sbr.rel (%p547) target = $region60
      $region59: #{_lambda_.1} parent=11 // pred_region
        _
      $region60: #{_lambda_.1} parent=11 // pred_fallthru
        _
      // Predicated region
      $region61: #{_lambda_.1} parent=11 // pred_check
        %p550 = pneg %p326
      $region62: #{_lambda_.1} parent=11 // pred_check_branch
        %552 = sbr.rel (%p550) target = $region64
      $region63: #{_lambda_.1} parent=11 // pred_region
        _
      $region64: #{_lambda_.1} parent=11 // pred_fallthru
        _
      // Predicated region
      $region65: #{_lambda_.1} parent=11 // pred_check
        %p553 = pneg %p347
      $region66: #{_lambda_.1} parent=11 // pred_check_branch
        %555 = sbr.rel (%p553) target = $region68
      $region67: #{_lambda_.1} parent=11 // pred_region
        _
      $region68: #{_lambda_.1} parent=11 // pred_fallthru
        _
      // Predicated region
      $region69: #{_lambda_.1} parent=11 // pred_check
        %p556 = pneg %p368
      $region70: #{_lambda_.1} parent=11 // pred_check_branch
        %558 = sbr.rel (%p556) target = $region72
      $region71: #{_lambda_.1} parent=11 // pred_region
        _
      $region72: #{_lambda_.1} parent=11 // pred_fallthru
        _
      // Predicated region
      $region73: #{_lambda_.1} parent=11 // pred_check
        %p559 = pneg %p389
      $region74: #{_lambda_.1} parent=11 // pred_check_branch
        %561 = sbr.rel (%p559) target = $region76
      $region75: #{_lambda_.1} parent=11 // pred_region
        _
      $region76: #{_lambda_.1} parent=11 // pred_fallthru
        _
      // Predicated region
      $region77: #{_lambda_.1} parent=11 // pred_check
        %p562 = pneg %p410
      $region78: #{_lambda_.1} parent=11 // pred_check_branch
        %564 = sbr.rel (%p562) target = $region80
      $region79: #{_lambda_.1} parent=11 // pred_region
        _
      $region80: #{_lambda_.1} parent=11 // pred_fallthru
        _
      // Predicated region
      $region81: #{_lambda_.1} parent=11 // pred_check
        %p565 = pneg %p431
      $region82: #{_lambda_.1} parent=11 // pred_check_branch
        %567 = sbr.rel (%p565) target = $region84
      $region83: #{_lambda_.1} parent=11 // pred_region
        _
      $region84: #{_lambda_.1} parent=11 // pred_fallthru
        _
      // Predicated region
      $region85: #{_lambda_.1} parent=11 // pred_check
        %p568 = pneg %p452
      $region86: #{_lambda_.1} parent=11 // pred_check_branch
        %570 = sbr.rel (%p568) target = $region88
      $region87: #{_lambda_.1} parent=11 // pred_region
        _
      $region88: #{_lambda_.1} parent=11 // pred_fallthru
        _
      // Predicated region
      $region89: #{_lambda_.1} parent=11 // pred_check
        %p571 = pneg %p473
      $region90: #{_lambda_.1} parent=11 // pred_check_branch
        %573 = sbr.rel (%p571) target = $region92
      $region91: #{_lambda_.1} parent=11 // pred_region
        _
      $region92: #{_lambda_.1} parent=11 // pred_fallthru
        _
    $region12: #{_lambda_.1} parent=5 // pred_fallthru
      _
    %p574 = scmp.lt.s32.totalorder %s27, 2
    // Predicated region
    $region93: #{_lambda_.1} parent=5 // pred_check
      %p575 = pneg %p574
    $region94: #{_lambda_.1} parent=5 // pred_check_branch
      %577 = sbr.rel (%p575) target = $region96
    $region95: #{_lambda_.1} parent=5 // pred_region
      // Predicated region
      $region97: #{_lambda_.1} parent=95 // pred_check
        %p578 = pneg %p47
      $region98: #{_lambda_.1} parent=95 // pred_check_branch
        %580 = sbr.rel (%p578) target = $region100
      $region99: #{_lambda_.1} parent=95 // pred_region
        %p581 = scmp.lt.s32.totalorder %s27, 1
        %s582 = scalar_select %p581, %s27, 1
        %s583 = smul.addr %s582, 2
        %s584 = smul.addr %s583, 8
        %s585 = scalar_lea.vmem %s0, %s584
      $region100: #{_lambda_.1} parent=95 // pred_fallthru
        _
    $region96: #{_lambda_.1} parent=5 // pred_fallthru
      _
    %p586 = scmp.le.s32.totalorder 1, %s27
    %p587 = scmp.lt.s32.totalorder %s27, 3
    %p588 = pnand %p586, %p587
    %p589 = pneg %p588
    // Predicated region
    $region101: #{_lambda_.1} parent=5 // pred_check
      _
    $region102: #{_lambda_.1} parent=5 // pred_check_branch
      %591 = sbr.rel (%p588) target = $region104
    $region103: #{_lambda_.1} parent=5 // pred_region
      %s592 = ssub.s32 %s27, 1
      %p593 = scmp.lt.s32.totalorder %s32, 1
      %s594 = scalar_select %p593, %s32, 1
      %s595 = smul.addr %s594, 2
      %s596 = smul.addr %s595, 8
      %s597 = scalar_lea.vmem %s0, %s596
      %p598 = pneg %p53
      %p599 = pneg %p50
      %p600 = pneg %p74
      %p601 = pneg %p71
      %p602 = pneg %p95
      %p603 = pneg %p92
      %p604 = pneg %p116
      %p605 = pneg %p113
      %p606 = pneg %p137
      %p607 = pneg %p134
      %p608 = pneg %p158
      %p609 = pneg %p155
      %p610 = pneg %p179
      %p611 = pneg %p176
      %p612 = pneg %p200
      %p613 = pneg %p197
      %p614 = pneg %p221
      %p615 = pneg %p218
      %p616 = pneg %p242
      %p617 = pneg %p239
      %p618 = pneg %p263
      %p619 = pneg %p260
      %p620 = pneg %p284
      %p621 = pneg %p281
      %p622 = pneg %p305
      %p623 = pneg %p302
      %p624 = pneg %p326
      %p625 = pneg %p323
      %p626 = pneg %p347
      %p627 = pneg %p344
      %p628 = pneg %p368
      %p629 = pneg %p365
      %p630 = pneg %p389
      %p631 = pneg %p386
      %p632 = pneg %p410
      %p633 = pneg %p407
      %p634 = pneg %p431
      %p635 = pneg %p428
      %p636 = pneg %p452
      %p637 = pneg %p449
      %p638 = pneg %p473
      %p639 = pneg %p470
      %p640 = pneg %p499
      %p641 = pneg %p496
      %p642 = scmp.lt.s32.totalorder %s32, 1
      %s643 = scalar_select %p642, %s32, 1
      %s644 = smul.addr %s643, 2
      %s645 = smul.addr %s644, 8
      %s646 = scalar_lea.vmem %s21, %s645
      %p647 = scmp.lt.s32.totalorder %s32, 1
      %s648 = scalar_select %p647, %s32, 1
      %s649 = smul.addr %s648, 2
      %s650 = smul.addr %s649, 8
      %s651 = scalar_lea.vmem %s0, %s650
      %p652 = scmp.lt.s32.totalorder %s32, 1
      %s653 = scalar_select %p652, %s32, 1
      %s654 = smul.addr %s653, 2
      %s655 = smul.addr %s654, 8
      %s656 = scalar_lea.vmem %s21, %s655
      %vm658 = vcmask 516096
      %659 = vst.msk [vmem:[#allocation2] sm:$0x1] %vm658, 0.0
      %660 = vst.msk [vmem:[#allocation2 + $0x11] sm:$0x1] %vm658, 0.0
      %vm661 = vcmask 253952
      %662 = vst.msk [vmem:[#allocation3] sm:$0x1] %vm661, 0.0
      %663 = vst.msk [vmem:[#allocation3 + $0x9] sm:$0x1] %vm661, 0.0
      %664 = vst.msk [vmem:[#allocation4] sm:$0x1] %vm658, 0.0
      %665 = vst.msk [vmem:[#allocation4 + $0x9] sm:$0x1] %vm658, 0.0
      %v666 = vld [vmem:[%s651] sm:$0xff]
      %v667 = vld [vmem:[%s651 + $0x8] sm:$0xff]
      %vm668 = vcmask 523264
      %669 = vst.msk [vmem:[#allocation2 + $0x1] sm:$0xff] %vm668, %v666
      %670 = vst.msk [vmem:[#allocation2 + $0x9] sm:$0xff] %vm668, %v667
      %v671 = vld [vmem:[#allocation2] sm:$0xff]
      %v672 = vld [vmem:[#allocation2 + $0x8] sm:$0xff]
      %v673 = vld [vmem:[#allocation2 + $0x1] sm:$0xff]
      %v674 = vld [vmem:[#allocation2 + $0x9] sm:$0xff]
      %v675 = vld [vmem:[#allocation2 + $0x2] sm:$0xff]
      %v676 = vld [vmem:[#allocation2 + $0xa] sm:$0xff]
      %679 = vrot.lane.b32.xlu0 %v673, 64
      %v680 = vpop.permute.xlu0 %679
      %681 = vrot.lane.b32.xlu0 %v674, 64
      %v682 = vpop.permute.xlu0 %681
      %v685 = vsel %vm668, %v671, %v680
      %v686 = vsel %vm668, %v672, %v682
      %v687 = vpack.c.bf16 %v686, %v685
      %v688 = vpack.c.bf16 %v676, %v675
      %v689 = vld [vmem:[%s3] sm:$0xf]
      %v690 = vld [vmem:[%s3 + $0x4] sm:$0xf]
      %v691 = vld [vmem:[%s3 + $0x8] sm:$0xf]
      %v692 = vld [vmem:[%s3 + $0xc] sm:$0xf]
      %v693 = vld [vmem:[%s3 + $0x10] sm:$0xf]
      %v694 = vld [vmem:[%s3 + $0x14] sm:$0xf]
      %v695 = vld [vmem:[%s3 + $0x18] sm:$0xf]
      %v696 = vld [vmem:[%s3 + $0x1c] sm:$0xf]
      %v697 = vld [vmem:[%s3 + $0x20] sm:$0xf]
      %v698 = vld [vmem:[%s3 + $0x24] sm:$0xf]
      %v699 = vld [vmem:[%s3 + $0x28] sm:$0xf]
      %v700 = vld [vmem:[%s3 + $0x2c] sm:$0xf]
      %v701 = vld [vmem:[%s3 + $0x30] sm:$0xf]
      %v702 = vld [vmem:[%s3 + $0x34] sm:$0xf]
      %v703 = vld [vmem:[%s3 + $0x38] sm:$0xf]
      %v704 = vld [vmem:[%s3 + $0x3c] sm:$0xf]
      %v705 = vld [vmem:[%s3 + $0x40] sm:$0xf]
      %v706 = vld [vmem:[%s3 + $0x44] sm:$0xf]
      %v707 = vld [vmem:[%s3 + $0x48] sm:$0xf]
      %v708 = vld [vmem:[%s3 + $0x4c] sm:$0xf]
      %v709 = vld [vmem:[%s3 + $0x50] sm:$0xf]
      %v710 = vld [vmem:[%s3 + $0x54] sm:$0xf]
      %v711 = vld [vmem:[%s3 + $0x58] sm:$0xf]
      %v712 = vld [vmem:[%s3 + $0x5c] sm:$0xf]
      %v737 = vunpack.c.l.b16 %v689
      %v738 = vunpack.c.l.b16 %v690
      %v739 = vunpack.c.l.b16 %v691
      %v740 = vunpack.c.l.b16 %v692
      %v741 = vunpack.c.l.b16 %v693
      %v742 = vunpack.c.l.b16 %v694
      %v743 = vunpack.c.l.b16 %v695
      %v744 = vunpack.c.l.b16 %v696
      %v745 = vunpack.c.l.b16 %v697
      %v746 = vunpack.c.l.b16 %v698
      %v747 = vunpack.c.l.b16 %v699
      %v748 = vunpack.c.l.b16 %v700
      %v749 = vunpack.c.l.b16 %v701
      %v750 = vunpack.c.l.b16 %v702
      %v751 = vunpack.c.l.b16 %v703
      %v752 = vunpack.c.l.b16 %v704
      %v753 = vunpack.c.l.b16 %v705
      %v754 = vunpack.c.l.b16 %v706
      %v755 = vunpack.c.l.b16 %v707
      %v756 = vunpack.c.l.b16 %v708
      %v757 = vunpack.c.l.b16 %v709
      %v758 = vunpack.c.l.b16 %v710
      %v759 = vunpack.c.l.b16 %v711
      %v760 = vunpack.c.l.b16 %v712
      %v761 = vpack.c.b16 %v738, %v737
      %v762 = vpack.c.b16 %v740, %v739
      %v763 = vpack.c.b16 %v742, %v741
      %v764 = vpack.c.b16 %v744, %v743
      %v765 = vpack.c.b16 %v746, %v745
      %v766 = vpack.c.b16 %v748, %v747
      %v767 = vpack.c.b16 %v750, %v749
      %v768 = vpack.c.b16 %v752, %v751
      %v769 = vpack.c.b16 %v754, %v753
      %v770 = vpack.c.b16 %v756, %v755
      %v771 = vpack.c.b16 %v758, %v757
      %v772 = vpack.c.b16 %v760, %v759
      %v786 = vsel %vm668, %v688, 0
      %788 = vmatprep.subr.bf16.mxu0 0
      %789 = vmatpush1.bf16.msra.mxu0 %v761
      %790 = vmatprep.subr.bf16.mxu0 0
      %791 = vmatpush1.bf16.msra.mxu0 %v762
      %792 = vmatprep.subr.bf16.mxu0 0
      %793 = vmatpush1.bf16.msra.mxu0 %v763
      %794 = vmatprep.subr.bf16.mxu0 0
      %795 = vmatpush1.bf16.msra.mxu0 %v764
      %796 = vmatprep.subr.bf16.mxu0 0
      %797 = vmatpush1.bf16.msra.mxu0 %v765
      %798 = vmatprep.subr.bf16.mxu0 0
      %799 = vmatpush1.bf16.msra.mxu0 %v766
      %800 = vmatprep.subr.bf16.mxu0 0
      %801 = vmatpush1.bf16.msra.mxu0 %v767
      %802 = vmatprep.subr.bf16.mxu0 0
      %803 = vmatpush1.bf16.msra.mxu0 %v768
      %804 = vmatprep.subr.bf16.mxu0 0
      %805 = vmatpush1.bf16.msra.mxu0 %v769
      %806 = vmatprep.subr.bf16.mxu0 0
      %807 = vmatpush1.bf16.msra.mxu0 %v770
      %808 = vmatprep.subr.bf16.mxu0 0
      %809 = vmatpush1.bf16.msra.mxu0 %v771
      %810 = vmatprep.subr.bf16.mxu0 0
      %811 = vmatpush1.bf16.msra.mxu0 %v772
      %812 = vmatprep.subr.bf16.mxu0 0
      %813 = vmatpush1.bf16.msra.mxu0 0
      %814 = vmatprep.subr.bf16.mxu0 0
      %815 = vmatpush1.bf16.msra.mxu0 0
      %816 = vmatprep.subr.bf16.mxu0 0
      %817 = vmatpush1.bf16.msra.mxu0 0
      %818 = vmatprep.subr.bf16.mxu0 0
      %819 = vmatpush1.bf16.msra.mxu0 0
      %820 = vmatprep.mubr.bf16.mxu0 %v786
      %821 = vmatmul.mubr.bf16.gmra.mrb[0].mxu0 %v687
      %v822 = vpop.f32.mrb[0].mxu0
      %v823 = vadd.f32 0.0, %v822
      %v824 = vpop.f32.mrb[0].mxu0
      %v825 = vpop.f32.mrb[0].mxu0
      %v826 = vadd.f32 0.0, %v825
      %v827 = vpop.f32.mrb[0].mxu0
      %828 = vdwg.mxu0
      %v829 = vld [vmem:[%s4] sm:$0x1]
      %v830 = vlaneseq
      %v831 = vshrl.u32 %v830, 7
      %v832 = vsub.s32 0, %v831
      %v833 = vrot.slane %v829, %v832
      %v834 = vmul.f32 %v823, %v833
      %v835 = vmul.f32 %v826, %v833
      %v836 = vld [vmem:[%s4 + $0x1] sm:$0x1]
      %v837 = vlaneseq
      %v838 = vshrl.u32 %v837, 7
      %v839 = vsub.s32 0, %v838
      %v840 = vrot.slane %v836, %v839
      %v841 = vadd.f32 %v834, %v840
      %v842 = vadd.f32 %v835, %v840
      %v843 = vmax.f32 %v841, 0.0
      %v844 = vmax.f32 %v842, 0.0
      %845 = vst.msk [vmem:[#allocation2 + $0x1] sm:$0xff] %vm668, %v843
      %846 = vst.msk [vmem:[#allocation2 + $0x9] sm:$0xff] %vm668, %v844
      %v847 = vld [vmem:[#allocation2] sm:$0xff]
      %v848 = vld [vmem:[#allocation2 + $0x8] sm:$0xff]
      %v849 = vld [vmem:[#allocation2 + $0x1] sm:$0xff]
      %v850 = vld [vmem:[#allocation2 + $0x9] sm:$0xff]
      %v851 = vld [vmem:[#allocation2 + $0x2] sm:$0xff]
      %v852 = vld [vmem:[#allocation2 + $0xa] sm:$0xff]
      %855 = vrot.lane.b32.xlu0 %v849, 64
      %v856 = vpop.permute.xlu0 %855
      %857 = vrot.lane.b32.xlu0 %v850, 64
      %v858 = vpop.permute.xlu0 %857
      %v861 = vsel %vm668, %v847, %v856
      %v862 = vsel %vm668, %v848, %v858
      %v863 = vpack.c.bf16 %v862, %v861
      %v864 = vpack.c.bf16 %v852, %v851
      %v865 = vld [vmem:[%s1] sm:$0xf]
      %v866 = vld [vmem:[%s1 + $0x4] sm:$0xf]
      %v867 = vld [vmem:[%s1 + $0x8] sm:$0xf]
      %v868 = vld [vmem:[%s1 + $0xc] sm:$0xf]
      %v869 = vld [vmem:[%s1 + $0x10] sm:$0xf]
      %v870 = vld [vmem:[%s1 + $0x14] sm:$0xf]
      %v871 = vld [vmem:[%s1 + $0x18] sm:$0xf]
      %v872 = vld [vmem:[%s1 + $0x1c] sm:$0xf]
      %v873 = vld [vmem:[%s1 + $0x20] sm:$0xf]
      %v874 = vld [vmem:[%s1 + $0x24] sm:$0xf]
      %v875 = vld [vmem:[%s1 + $0x28] sm:$0xf]
      %v876 = vld [vmem:[%s1 + $0x2c] sm:$0xf]
      %v877 = vld [vmem:[%s1 + $0x30] sm:$0xf]
      %v878 = vld [vmem:[%s1 + $0x34] sm:$0xf]
      %v879 = vld [vmem:[%s1 + $0x38] sm:$0xf]
      %v880 = vld [vmem:[%s1 + $0x3c] sm:$0xf]
      %v881 = vld [vmem:[%s1 + $0x40] sm:$0xf]
      %v882 = vld [vmem:[%s1 + $0x44] sm:$0xf]
      %v883 = vld [vmem:[%s1 + $0x48] sm:$0xf]
      %v884 = vld [vmem:[%s1 + $0x4c] sm:$0xf]
      %v885 = vld [vmem:[%s1 + $0x50] sm:$0xf]
      %v886 = vld [vmem:[%s1 + $0x54] sm:$0xf]
      %v887 = vld [vmem:[%s1 + $0x58] sm:$0xf]
      %v888 = vld [vmem:[%s1 + $0x5c] sm:$0xf]
      %v913 = vunpack.c.l.b16 %v865
      %v914 = vunpack.c.l.b16 %v866
      %v915 = vunpack.c.l.b16 %v867
      %v916 = vunpack.c.l.b16 %v868
      %v917 = vunpack.c.l.b16 %v869
      %v918 = vunpack.c.l.b16 %v870
      %v919 = vunpack.c.l.b16 %v871
      %v920 = vunpack.c.l.b16 %v872
      %v921 = vunpack.c.l.b16 %v873
      %v922 = vunpack.c.l.b16 %v874
      %v923 = vunpack.c.l.b16 %v875
      %v924 = vunpack.c.l.b16 %v876
      %v925 = vunpack.c.l.b16 %v877
      %v926 = vunpack.c.l.b16 %v878
      %v927 = vunpack.c.l.b16 %v879
      %v928 = vunpack.c.l.b16 %v880
      %v929 = vunpack.c.l.b16 %v881
      %v930 = vunpack.c.l.b16 %v882
      %v931 = vunpack.c.l.b16 %v883
      %v932 = vunpack.c.l.b16 %v884
      %v933 = vunpack.c.l.b16 %v885
      %v934 = vunpack.c.l.b16 %v886
      %v935 = vunpack.c.l.b16 %v887
      %v936 = vunpack.c.l.b16 %v888
      %v937 = vpack.c.b16 %v914, %v913
      %v938 = vpack.c.b16 %v916, %v915
      %v939 = vpack.c.b16 %v918, %v917
      %v940 = vpack.c.b16 %v920, %v919
      %v941 = vpack.c.b16 %v922, %v921
      %v942 = vpack.c.b16 %v924, %v923
      %v943 = vpack.c.b16 %v926, %v925
      %v944 = vpack.c.b16 %v928, %v927
      %v945 = vpack.c.b16 %v930, %v929
      %v946 = vpack.c.b16 %v932, %v931
      %v947 = vpack.c.b16 %v934, %v933
      %v948 = vpack.c.b16 %v936, %v935
      %v962 = vsel %vm668, %v864, 0
      %964 = vmatprep.subr.bf16.mxu0 0
      %965 = vmatpush1.bf16.msra.mxu0 %v937
      %966 = vmatprep.subr.bf16.mxu0 0
      %967 = vmatpush1.bf16.msra.mxu0 %v938
      %968 = vmatprep.subr.bf16.mxu0 0
      %969 = vmatpush1.bf16.msra.mxu0 %v939
      %970 = vmatprep.subr.bf16.mxu0 0
      %971 = vmatpush1.bf16.msra.mxu0 %v940
      %972 = vmatprep.subr.bf16.mxu0 0
      %973 = vmatpush1.bf16.msra.mxu0 %v941
      %974 = vmatprep.subr.bf16.mxu0 0
      %975 = vmatpush1.bf16.msra.mxu0 %v942
      %976 = vmatprep.subr.bf16.mxu0 0
      %977 = vmatpush1.bf16.msra.mxu0 %v943
      %978 = vmatprep.subr.bf16.mxu0 0
      %979 = vmatpush1.bf16.msra.mxu0 %v944
      %980 = vmatprep.subr.bf16.mxu0 0
      %981 = vmatpush1.bf16.msra.mxu0 %v945
      %982 = vmatprep.subr.bf16.mxu0 0
      %983 = vmatpush1.bf16.msra.mxu0 %v946
      %984 = vmatprep.subr.bf16.mxu0 0
      %985 = vmatpush1.bf16.msra.mxu0 %v947
      %986 = vmatprep.subr.bf16.mxu0 0
      %987 = vmatpush1.bf16.msra.mxu0 %v948
      %988 = vmatprep.subr.bf16.mxu0 0
      %989 = vmatpush1.bf16.msra.mxu0 0
      %990 = vmatprep.subr.bf16.mxu0 0
      %991 = vmatpush1.bf16.msra.mxu0 0
      %992 = vmatprep.subr.bf16.mxu0 0
      %993 = vmatpush1.bf16.msra.mxu0 0
      %994 = vmatprep.subr.bf16.mxu0 0
      %995 = vmatpush1.bf16.msra.mxu0 0
      %996 = vmatprep.mubr.bf16.mxu0 %v962
      %997 = vmatmul.mubr.bf16.gmra.mrb[0].mxu0 %v863
      %v998 = vpop.f32.mrb[0].mxu0
      %v999 = vadd.f32 0.0, %v998
      %v1000 = vpop.f32.mrb[0].mxu0
      %v1001 = vpop.f32.mrb[0].mxu0
      %v1002 = vadd.f32 0.0, %v1001
      %v1003 = vpop.f32.mrb[0].mxu0
      %1004 = vdwg.mxu0
      %v1005 = vld [vmem:[%s2] sm:$0x1]
      %v1006 = vlaneseq
      %v1007 = vshrl.u32 %v1006, 7
      %v1008 = vsub.s32 0, %v1007
      %v1009 = vrot.slane %v1005, %v1008
      %v1010 = vmul.f32 %v999, %v1009
      %v1011 = vmul.f32 %v1002, %v1009
      %v1012 = vld [vmem:[%s2 + $0x1] sm:$0x1]
      %v1013 = vlaneseq
      %v1014 = vshrl.u32 %v1013, 7
      %v1015 = vsub.s32 0, %v1014
      %v1016 = vrot.slane %v1012, %v1015
      %v1017 = vadd.f32 %v1010, %v1016
      %v1018 = vadd.f32 %v1011, %v1016
      %v1019 = vmax.f32 %v1017, 0.0
      %v1020 = vmax.f32 %v1018, 0.0
      %v1021 = vadd.f32 %v1019, %v666
      %v1022 = vadd.f32 %v1020, %v667
      %v1023 = vmax.f32 %v1021, 0.0
      %v1024 = vmax.f32 %v1022, 0.0
      %v1025 = vpack.c.bf16 %v667, %v666
      %v1026 = vld [vmem:[%s5] sm:$0xf]
      %vm1027 = vcmask 130048
      %v1029 = vsel %vm1027, %v1026, 0
      %1031 = vmatprep.subr.bf16.mxu0 0
      %1032 = vmatpush1.bf16.msra.mxu0 %v1025
      %1033 = vmatprep.subr.bf16.mxu0 0
      %1034 = vmatpush1.bf16.msra.mxu0 0
      %1035 = vmatprep.subr.bf16.mxu0 0
      %1036 = vmatpush1.bf16.msra.mxu0 0
      %1037 = vmatprep.subr.bf16.mxu0 0
      %1038 = vmatpush1.bf16.msra.mxu0 0
      %1039 = vmatprep.subr.bf16.mxu0 0
      %1040 = vmatpush1.bf16.msra.mxu0 0
      %1041 = vmatprep.subr.bf16.mxu0 0
      %1042 = vmatpush1.bf16.msra.mxu0 0
      %1043 = vmatprep.subr.bf16.mxu0 0
      %1044 = vmatpush1.bf16.msra.mxu0 0
      %1045 = vmatprep.subr.bf16.mxu0 0
      %1046 = vmatpush1.bf16.msra.mxu0 0
      %1047 = vmatprep.subr.bf16.mxu0 0
      %1048 = vmatpush1.bf16.msra.mxu0 0
      %1049 = vmatprep.subr.bf16.mxu0 0
      %1050 = vmatpush1.bf16.msra.mxu0 0
      %1051 = vmatprep.subr.bf16.mxu0 0
      %1052 = vmatpush1.bf16.msra.mxu0 0
      %1053 = vmatprep.subr.bf16.mxu0 0
      %1054 = vmatpush1.bf16.msra.mxu0 0
      %1055 = vmatprep.subr.bf16.mxu0 0
      %1056 = vmatpush1.bf16.msra.mxu0 0
      %1057 = vmatprep.subr.bf16.mxu0 0
      %1058 = vmatpush1.bf16.msra.mxu0 0
      %1059 = vmatprep.subr.bf16.mxu0 0
      %1060 = vmatpush1.bf16.msra.mxu0 0
      %1061 = vmatprep.subr.bf16.mxu0 0
      %1062 = vmatpush1.bf16.msra.mxu0 0
      %1063 = vmatprep.mubr.bf16.mxu0 0
      %1064 = vmatmul.mubr.bf16.gmra.mrb[0].mxu0 %v1029
      %v1065 = vpop.f32.mrb[0].mxu0
      %v1066 = vadd.f32 0.0, %v1065
      %v1067 = vpop.f32.mrb[0].mxu0
      %v1068 = vpop.f32.mrb[0].mxu0
      %v1069 = vpop.f32.mrb[0].mxu0
      %1070 = vdwg.mxu0
      %s1071 = scalar_lea.vmem %s5, 4
      %v1072 = vld [vmem:[%s1071] sm:$0xf]
      %v1074 = vsel %vm1027, %v1072, 0
      %1076 = vmatprep.subr.bf16.mxu0 0
      %1077 = vmatpush1.bf16.msra.mxu0 %v1025
      %1078 = vmatprep.subr.bf16.mxu0 0
      %1079 = vmatpush1.bf16.msra.mxu0 0
      %1080 = vmatprep.subr.bf16.mxu0 0
      %1081 = vmatpush1.bf16.msra.mxu0 0
      %1082 = vmatprep.subr.bf16.mxu0 0
      %1083 = vmatpush1.bf16.msra.mxu0 0
      %1084 = vmatprep.subr.bf16.mxu0 0
      %1085 = vmatpush1.bf16.msra.mxu0 0
      %1086 = vmatprep.subr.bf16.mxu0 0
      %1087 = vmatpush1.bf16.msra.mxu0 0
      %1088 = vmatprep.subr.bf16.mxu0 0
      %1089 = vmatpush1.bf16.msra.mxu0 0
      %1090 = vmatprep.subr.bf16.mxu0 0
      %1091 = vmatpush1.bf16.msra.mxu0 0
      %1092 = vmatprep.subr.bf16.mxu0 0
      %1093 = vmatpush1.bf16.msra.mxu0 0
      %1094 = vmatprep.subr.bf16.mxu0 0
      %1095 = vmatpush1.bf16.msra.mxu0 0
      %1096 = vmatprep.subr.bf16.mxu0 0
      %1097 = vmatpush1.bf16.msra.mxu0 0
      %1098 = vmatprep.subr.bf16.mxu0 0
      %1099 = vmatpush1.bf16.msra.mxu0 0
      %1100 = vmatprep.subr.bf16.mxu0 0
      %1101 = vmatpush1.bf16.msra.mxu0 0
      %1102 = vmatprep.subr.bf16.mxu0 0
      %1103 = vmatpush1.bf16.msra.mxu0 0
      %1104 = vmatprep.subr.bf16.mxu0 0
      %1105 = vmatpush1.bf16.msra.mxu0 0
      %1106 = vmatprep.subr.bf16.mxu0 0
      %1107 = vmatpush1.bf16.msra.mxu0 0
      %1108 = vmatprep.mubr.bf16.mxu0 0
      %1109 = vmatmul.mubr.bf16.gmra.mrb[0].mxu0 %v1074
      %v1110 = vpop.f32.mrb[0].mxu0
      %v1111 = vadd.f32 0.0, %v1110
      %v1112 = vpop.f32.mrb[0].mxu0
      %v1113 = vpop.f32.mrb[0].mxu0
      %v1114 = vpop.f32.mrb[0].mxu0
      %1115 = vdwg.mxu0
      %v1116 = vmax.f32 %v1066, %v1111
      %v1117 = vpack.c.bf16 %v1116, %v1116
      %v1118 = vld [vmem:[%s6] sm:$0xf]
      %v1119 = vld [vmem:[%s6 + $0x4] sm:$0xf]
      %v1120 = vld [vmem:[%s6 + $0x8] sm:$0xf]
      %v1121 = vld [vmem:[%s6 + $0xc] sm:$0xf]
      %v1122 = vld [vmem:[%s6 + $0x10] sm:$0xf]
      %v1123 = vld [vmem:[%s6 + $0x14] sm:$0xf]
      %v1124 = vld [vmem:[%s6 + $0x18] sm:$0xf]
      %v1125 = vld [vmem:[%s6 + $0x1c] sm:$0xf]
      %v1134 = vunpack.c.l.b16 %v1118
      %v1135 = vunpack.c.l.b16 %v1119
      %v1136 = vunpack.c.l.b16 %v1120
      %v1137 = vunpack.c.l.b16 %v1121
      %v1138 = vunpack.c.l.b16 %v1122
      %v1139 = vunpack.c.l.b16 %v1123
      %v1140 = vunpack.c.l.b16 %v1124
      %v1141 = vunpack.c.l.b16 %v1125
      %v1142 = vpack.c.b16 %v1135, %v1134
      %v1143 = vpack.c.b16 %v1137, %v1136
      %v1144 = vpack.c.b16 %v1139, %v1138
      %v1145 = vpack.c.b16 %v1141, %v1140
      %v1151 = vsel %vm668, %v1117, 0
      %1153 = vmatprep.subr.bf16.mxu0 0
      %1154 = vmatpush1.bf16.msra.mxu0 %v1142
      %1155 = vmatprep.subr.bf16.mxu0 0
      %1156 = vmatpush1.bf16.msra.mxu0 %v1143
      %1157 = vmatprep.subr.bf16.mxu0 0
      %1158 = vmatpush1.bf16.msra.mxu0 %v1144
      %1159 = vmatprep.subr.bf16.mxu0 0
      %1160 = vmatpush1.bf16.msra.mxu0 %v1145
      %1161 = vmatprep.subr.bf16.mxu0 0
      %1162 = vmatpush1.bf16.msra.mxu0 0
      %1163 = vmatprep.subr.bf16.mxu0 0
      %1164 = vmatpush1.bf16.msra.mxu0 0
      %1165 = vmatprep.subr.bf16.mxu0 0
      %1166 = vmatpush1.bf16.msra.mxu0 0
      %1167 = vmatprep.subr.bf16.mxu0 0
      %1168 = vmatpush1.bf16.msra.mxu0 0
      %1169 = vmatprep.subr.bf16.mxu0 0
      %1170 = vmatpush1.bf16.msra.mxu0 0
      %1171 = vmatprep.subr.bf16.mxu0 0
      %1172 = vmatpush1.bf16.msra.mxu0 0
      %1173 = vmatprep.subr.bf16.mxu0 0
      %1174 = vmatpush1.bf16.msra.mxu0 0
      %1175 = vmatprep.subr.bf16.mxu0 0
      %1176 = vmatpush1.bf16.msra.mxu0 0
      %1177 = vmatprep.subr.bf16.mxu0 0
      %1178 = vmatpush1.bf16.msra.mxu0 0
      %1179 = vmatprep.subr.bf16.mxu0 0
      %1180 = vmatpush1.bf16.msra.mxu0 0
      %1181 = vmatprep.subr.bf16.mxu0 0
      %1182 = vmatpush1.bf16.msra.mxu0 0
      %1183 = vmatprep.subr.bf16.mxu0 0
      %1184 = vmatpush1.bf16.msra.mxu0 0
      %1185 = vmatprep.mubr.bf16.mxu0 0
      %1186 = vmatmul.mubr.bf16.gmra.mrb[0].mxu0 %v1151
      %v1187 = vpop.f32.mrb[0].mxu0
      %v1188 = vadd.f32 0.0, %v1187
      %v1189 = vpop.f32.mrb[0].mxu0
      %v1190 = vpop.f32.mrb[0].mxu0
      %v1191 = vpop.f32.mrb[0].mxu0
      %1192 = vdwg.mxu0
      %s1193 = scalar_lea.vmem %s6, 32
      %v1194 = vld [vmem:[%s1193] sm:$0xf]
      %v1195 = vld [vmem:[%s1193 + $0x4] sm:$0xf]
      %v1196 = vld [vmem:[%s1193 + $0x8] sm:$0xf]
      %v1197 = vld [vmem:[%s1193 + $0xc] sm:$0xf]
      %v1198 = vld [vmem:[%s1193 + $0x10] sm:$0xf]
      %v1199 = vld [vmem:[%s1193 + $0x14] sm:$0xf]
      %v1200 = vld [vmem:[%s1193 + $0x18] sm:$0xf]
      %v1201 = vld [vmem:[%s1193 + $0x1c] sm:$0xf]
      %v1210 = vunpack.c.l.b16 %v1194
      %v1211 = vunpack.c.l.b16 %v1195
      %v1212 = vunpack.c.l.b16 %v1196
      %v1213 = vunpack.c.l.b16 %v1197
      %v1214 = vunpack.c.l.b16 %v1198
      %v1215 = vunpack.c.l.b16 %v1199
      %v1216 = vunpack.c.l.b16 %v1200
      %v1217 = vunpack.c.l.b16 %v1201
      %v1218 = vpack.c.b16 %v1211, %v1210
      %v1219 = vpack.c.b16 %v1213, %v1212
      %v1220 = vpack.c.b16 %v1215, %v1214
      %v1221 = vpack.c.b16 %v1217, %v1216
      %1226 = vmatprep.subr.bf16.mxu0 0
      %1227 = vmatpush1.bf16.msra.mxu0 %v1218
      %1228 = vmatprep.subr.bf16.mxu0 0
      %1229 = vmatpush1.bf16.msra.mxu0 %v1219
      %1230 = vmatprep.subr.bf16.mxu0 0
      %1231 = vmatpush1.bf16.msra.mxu0 %v1220
      %1232 = vmatprep.subr.bf16.mxu0 0
      %1233 = vmatpush1.bf16.msra.mxu0 %v1221
      %1234 = vmatprep.subr.bf16.mxu0 0
      %1235 = vmatpush1.bf16.msra.mxu0 0
      %1236 = vmatprep.subr.bf16.mxu0 0
      %1237 = vmatpush1.bf16.msra.mxu0 0
      %1238 = vmatprep.subr.bf16.mxu0 0
      %1239 = vmatpush1.bf16.msra.mxu0 0
      %1240 = vmatprep.subr.bf16.mxu0 0
      %1241 = vmatpush1.bf16.msra.mxu0 0
      %1242 = vmatprep.subr.bf16.mxu0 0
      %1243 = vmatpush1.bf16.msra.mxu0 0
      %1244 = vmatprep.subr.bf16.mxu0 0
      %1245 = vmatpush1.bf16.msra.mxu0 0
      %1246 = vmatprep.subr.bf16.mxu0 0
      %1247 = vmatpush1.bf16.msra.mxu0 0
      %1248 = vmatprep.subr.bf16.mxu0 0
      %1249 = vmatpush1.bf16.msra.mxu0 0
      %1250 = vmatprep.subr.bf16.mxu0 0
      %1251 = vmatpush1.bf16.msra.mxu0 0
      %1252 = vmatprep.subr.bf16.mxu0 0
      %1253 = vmatpush1.bf16.msra.mxu0 0
      %1254 = vmatprep.subr.bf16.mxu0 0
      %1255 = vmatpush1.bf16.msra.mxu0 0
      %1256 = vmatprep.subr.bf16.mxu0 0
      %1257 = vmatpush1.bf16.msra.mxu0 0
      %1258 = vmatprep.mubr.bf16.mxu0 0
      %1259 = vmatmul.mubr.bf16.gmra.mrb[0].mxu0 %v1151
      %v1260 = vpop.f32.mrb[0].mxu0
      %v1261 = vadd.f32 0.0, %v1260
      %v1262 = vpop.f32.mrb[0].mxu0
      %v1263 = vpop.f32.mrb[0].mxu0
      %v1264 = vpop.f32.mrb[0].mxu0
      %1265 = vdwg.mxu0
      %v1266 = vmax.f32 %v1188, %v1261
      %vm1267 = vcmask 261120
      %1268 = vst.msk [vmem:[#allocation3 + $0x1] sm:$0xff] %vm1267, %v1266
      %v1269 = vld [vmem:[#allocation3] sm:$0xff]
      %v1270 = vld [vmem:[#allocation3 + $0x1] sm:$0xff]
      %v1271 = vld [vmem:[#allocation3 + $0x2] sm:$0xff]
      %1273 = vrot.lane.b32.xlu0 %v1270, 32
      %v1274 = vpop.permute.xlu0 %1273
      %1277 = vrot.lane.b32.xlu0 %v1271, 64
      %v1278 = vpop.permute.xlu0 %1277
      %v1280 = vsel %vm1267, %v1269, %v1274
      %v1281 = vsel %vm668, %v1280, %v1278
      %v1282 = vpack.c.bf16 %v1281, %v1281
      %v1283 = vld [vmem:[%s9] sm:$0xf]
      %v1284 = vld [vmem:[%s9 + $0x4] sm:$0xf]
      %v1285 = vld [vmem:[%s9 + $0x8] sm:$0xf]
      %v1286 = vld [vmem:[%s9 + $0xc] sm:$0xf]
      %v1287 = vld [vmem:[%s9 + $0x10] sm:$0xf]
      %v1288 = vld [vmem:[%s9 + $0x14] sm:$0xf]
      %v1289 = vld [vmem:[%s9 + $0x18] sm:$0xf]
      %v1290 = vld [vmem:[%s9 + $0x1c] sm:$0xf]
      %v1291 = vld [vmem:[%s9 + $0x20] sm:$0xf]
      %v1292 = vld [vmem:[%s9 + $0x24] sm:$0xf]
      %v1293 = vld [vmem:[%s9 + $0x28] sm:$0xf]
      %v1294 = vld [vmem:[%s9 + $0x2c] sm:$0xf]
      %v1307 = vunpack.c.l.b16 %v1283
      %v1308 = vunpack.c.l.b16 %v1284
      %v1309 = vunpack.c.l.b16 %v1285
      %v1310 = vunpack.c.l.b16 %v1286
      %v1311 = vunpack.c.l.b16 %v1287
      %v1312 = vunpack.c.l.b16 %v1288
      %v1313 = vunpack.c.l.b16 %v1289
      %v1314 = vunpack.c.l.b16 %v1290
      %v1315 = vunpack.c.l.b16 %v1291
      %v1316 = vunpack.c.l.b16 %v1292
      %v1317 = vunpack.c.l.b16 %v1293
      %v1318 = vunpack.c.l.b16 %v1294
      %v1319 = vpack.c.b16 %v1308, %v1307
      %v1320 = vpack.c.b16 %v1310, %v1309
      %v1321 = vpack.c.b16 %v1312, %v1311
      %v1322 = vpack.c.b16 %v1314, %v1313
      %v1323 = vpack.c.b16 %v1316, %v1315
      %v1324 = vpack.c.b16 %v1318, %v1317
      %vm1331 = vcmask 785408
      %v1333 = vsel %vm1331, %v1282, 0
      %1335 = vmatprep.subr.bf16.mxu0 0
      %1336 = vmatpush1.bf16.msra.mxu0 %v1319
      %1337 = vmatprep.subr.bf16.mxu0 0
      %1338 = vmatpush1.bf16.msra.mxu0 %v1320
      %1339 = vmatprep.subr.bf16.mxu0 0
      %1340 = vmatpush1.bf16.msra.mxu0 %v1321
      %1341 = vmatprep.subr.bf16.mxu0 0
      %1342 = vmatpush1.bf16.msra.mxu0 %v1322
      %1343 = vmatprep.subr.bf16.mxu0 0
      %1344 = vmatpush1.bf16.msra.mxu0 %v1323
      %1345 = vmatprep.subr.bf16.mxu0 0
      %1346 = vmatpush1.bf16.msra.mxu0 %v1324
      %1347 = vmatprep.subr.bf16.mxu0 0
      %1348 = vmatpush1.bf16.msra.mxu0 0
      %1349 = vmatprep.subr.bf16.mxu0 0
      %1350 = vmatpush1.bf16.msra.mxu0 0
      %1351 = vmatprep.subr.bf16.mxu0 0
      %1352 = vmatpush1.bf16.msra.mxu0 0
      %1353 = vmatprep.subr.bf16.mxu0 0
      %1354 = vmatpush1.bf16.msra.mxu0 0
      %1355 = vmatprep.subr.bf16.mxu0 0
      %1356 = vmatpush1.bf16.msra.mxu0 0
      %1357 = vmatprep.subr.bf16.mxu0 0
      %1358 = vmatpush1.bf16.msra.mxu0 0
      %1359 = vmatprep.subr.bf16.mxu0 0
      %1360 = vmatpush1.bf16.msra.mxu0 0
      %1361 = vmatprep.subr.bf16.mxu0 0
      %1362 = vmatpush1.bf16.msra.mxu0 0
      %1363 = vmatprep.subr.bf16.mxu0 0
      %1364 = vmatpush1.bf16.msra.mxu0 0
      %1365 = vmatprep.subr.bf16.mxu0 0
      %1366 = vmatpush1.bf16.msra.mxu0 0
      %1367 = vmatprep.mubr.bf16.mxu0 0
      %1368 = vmatmul.mubr.bf16.gmra.mrb[0].mxu0 %v1333
      %v1369 = vpop.f32.mrb[0].mxu0
      %v1370 = vadd.f32 0.0, %v1369
      %v1371 = vpop.f32.mrb[0].mxu0
      %v1372 = vpop.f32.mrb[0].mxu0
      %v1373 = vpop.f32.mrb[0].mxu0
      %1374 = vdwg.mxu0
      %v1375 = vld [vmem:[%s10] sm:$0x1]
      %v1376 = vlaneseq
      %v1377 = vshrl.u32 %v1376, 7
      %v1378 = vsub.s32 0, %v1377
      %v1379 = vrot.slane %v1375, %v1378
      %v1380 = vmul.f32 %v1370, %v1379
      %v1381 = vld [vmem:[%s10 + $0x1] sm:$0x1]
      %v1382 = vlaneseq
      %v1383 = vshrl.u32 %v1382, 7
      %v1384 = vsub.s32 0, %v1383
      %v1385 = vrot.slane %v1381, %v1384
      %v1386 = vadd.f32 %v1380, %v1385
      %v1387 = vmax.f32 %v1386, 0.0
      %1388 = vst.msk [vmem:[#allocation4 + $0x1] sm:$0xff] %vm668, %v1387
      %v1389 = vld [vmem:[#allocation4] sm:$0xff]
      %v1390 = vld [vmem:[#allocation4 + $0x1] sm:$0xff]
      %v1391 = vld [vmem:[#allocation4 + $0x2] sm:$0xff]
      %1393 = vrot.lane.b32.xlu0 %v1390, 64
      %v1394 = vpop.permute.xlu0 %1393
      %v1396 = vsel %vm668, %v1389, %v1394
      %v1397 = vpack.c.bf16 %v1396, %v1396
      %v1398 = vpack.c.bf16 %v1391, %v1391
      %v1399 = vld [vmem:[%s7] sm:$0xf]
      %v1400 = vld [vmem:[%s7 + $0x4] sm:$0xf]
      %v1401 = vld [vmem:[%s7 + $0x8] sm:$0xf]
      %v1402 = vld [vmem:[%s7 + $0xc] sm:$0xf]
      %v1403 = vld [vmem:[%s7 + $0x10] sm:$0xf]
      %v1404 = vld [vmem:[%s7 + $0x14] sm:$0xf]
      %v1405 = vld [vmem:[%s7 + $0x18] sm:$0xf]
      %v1406 = vld [vmem:[%s7 + $0x1c] sm:$0xf]
      %v1407 = vld [vmem:[%s7 + $0x20] sm:$0xf]
      %v1408 = vld [vmem:[%s7 + $0x24] sm:$0xf]
      %v1409 = vld [vmem:[%s7 + $0x28] sm:$0xf]
      %v1410 = vld [vmem:[%s7 + $0x2c] sm:$0xf]
      %v1411 = vld [vmem:[%s7 + $0x30] sm:$0xf]
      %v1412 = vld [vmem:[%s7 + $0x34] sm:$0xf]
      %v1413 = vld [vmem:[%s7 + $0x38] sm:$0xf]
      %v1414 = vld [vmem:[%s7 + $0x3c] sm:$0xf]
      %v1415 = vld [vmem:[%s7 + $0x40] sm:$0xf]
      %v1416 = vld [vmem:[%s7 + $0x44] sm:$0xf]
      %v1417 = vld [vmem:[%s7 + $0x48] sm:$0xf]
      %v1418 = vld [vmem:[%s7 + $0x4c] sm:$0xf]
      %v1419 = vld [vmem:[%s7 + $0x50] sm:$0xf]
      %v1420 = vld [vmem:[%s7 + $0x54] sm:$0xf]
      %v1421 = vld [vmem:[%s7 + $0x58] sm:$0xf]
      %v1422 = vld [vmem:[%s7 + $0x5c] sm:$0xf]
      %v1447 = vunpack.c.l.b16 %v1399
      %v1448 = vunpack.c.l.b16 %v1400
      %v1449 = vunpack.c.l.b16 %v1401
      %v1450 = vunpack.c.l.b16 %v1402
      %v1451 = vunpack.c.l.b16 %v1403
      %v1452 = vunpack.c.l.b16 %v1404
      %v1453 = vunpack.c.l.b16 %v1405
      %v1454 = vunpack.c.l.b16 %v1406
      %v1455 = vunpack.c.l.b16 %v1407
      %v1456 = vunpack.c.l.b16 %v1408
      %v1457 = vunpack.c.l.b16 %v1409
      %v1458 = vunpack.c.l.b16 %v1410
      %v1459 = vunpack.c.l.b16 %v1411
      %v1460 = vunpack.c.l.b16 %v1412
      %v1461 = vunpack.c.l.b16 %v1413
      %v1462 = vunpack.c.l.b16 %v1414
      %v1463 = vunpack.c.l.b16 %v1415
      %v1464 = vunpack.c.l.b16 %v1416
      %v1465 = vunpack.c.l.b16 %v1417
      %v1466 = vunpack.c.l.b16 %v1418
      %v1467 = vunpack.c.l.b16 %v1419
      %v1468 = vunpack.c.l.b16 %v1420
      %v1469 = vunpack.c.l.b16 %v1421
      %v1470 = vunpack.c.l.b16 %v1422
      %v1471 = vpack.c.b16 %v1448, %v1447
      %v1472 = vpack.c.b16 %v1450, %v1449
      %v1473 = vpack.c.b16 %v1452, %v1451
      %v1474 = vpack.c.b16 %v1454, %v1453
      %v1475 = vpack.c.b16 %v1456, %v1455
      %v1476 = vpack.c.b16 %v1458, %v1457
      %v1477 = vpack.c.b16 %v1460, %v1459
      %v1478 = vpack.c.b16 %v1462, %v1461
      %v1479 = vpack.c.b16 %v1464, %v1463
      %v1480 = vpack.c.b16 %v1466, %v1465
      %v1481 = vpack.c.b16 %v1468, %v1467
      %v1482 = vpack.c.b16 %v1470, %v1469
      %v1496 = vsel %vm668, %v1398, 0
      %1498 = vmatprep.subr.bf16.mxu0 0
      %1499 = vmatpush1.bf16.msra.mxu0 %v1471
      %1500 = vmatprep.subr.bf16.mxu0 0
      %1501 = vmatpush1.bf16.msra.mxu0 %v1472
      %1502 = vmatprep.subr.bf16.mxu0 0
      %1503 = vmatpush1.bf16.msra.mxu0 %v1473
      %1504 = vmatprep.subr.bf16.mxu0 0
      %1505 = vmatpush1.bf16.msra.mxu0 %v1474
      %1506 = vmatprep.subr.bf16.mxu0 0
      %1507 = vmatpush1.bf16.msra.mxu0 %v1475
      %1508 = vmatprep.subr.bf16.mxu0 0
      %1509 = vmatpush1.bf16.msra.mxu0 %v1476
      %1510 = vmatprep.subr.bf16.mxu0 0
      %1511 = vmatpush1.bf16.msra.mxu0 %v1477
      %1512 = vmatprep.subr.bf16.mxu0 0
      %1513 = vmatpush1.bf16.msra.mxu0 %v1478
      %1514 = vmatprep.subr.bf16.mxu0 0
      %1515 = vmatpush1.bf16.msra.mxu0 %v1479
      %1516 = vmatprep.subr.bf16.mxu0 0
      %1517 = vmatpush1.bf16.msra.mxu0 %v1480
      %1518 = vmatprep.subr.bf16.mxu0 0
      %1519 = vmatpush1.bf16.msra.mxu0 %v1481
      %1520 = vmatprep.subr.bf16.mxu0 0
      %1521 = vmatpush1.bf16.msra.mxu0 %v1482
      %1522 = vmatprep.subr.bf16.mxu0 0
      %1523 = vmatpush1.bf16.msra.mxu0 0
      %1524 = vmatprep.subr.bf16.mxu0 0
      %1525 = vmatpush1.bf16.msra.mxu0 0
      %1526 = vmatprep.subr.bf16.mxu0 0
      %1527 = vmatpush1.bf16.msra.mxu0 0
      %1528 = vmatprep.subr.bf16.mxu0 0
      %1529 = vmatpush1.bf16.msra.mxu0 0
      %1530 = vmatprep.mubr.bf16.mxu0 %v1496
      %1531 = vmatmul.mubr.bf16.gmra.mrb[0].mxu0 %v1397
      %v1532 = vpop.f32.mrb[0].mxu0
      %v1533 = vadd.f32 0.0, %v1532
      %v1534 = vpop.f32.mrb[0].mxu0
      %v1535 = vpop.f32.mrb[0].mxu0
      %v1536 = vpop.f32.mrb[0].mxu0
      %1537 = vdwg.mxu0
      %v1538 = vld [vmem:[%s8] sm:$0x1]
      %v1539 = vlaneseq
      %v1540 = vshrl.u32 %v1539, 7
      %v1541 = vsub.s32 0, %v1540
      %v1542 = vrot.slane %v1538, %v1541
      %v1543 = vmul.f32 %v1533, %v1542
      %v1544 = vld [vmem:[%s8 + $0x1] sm:$0x1]
      %v1545 = vlaneseq
      %v1546 = vshrl.u32 %v1545, 7
      %v1547 = vsub.s32 0, %v1546
      %v1548 = vrot.slane %v1544, %v1547
      %v1549 = vadd.f32 %v1543, %v1548
      %v1550 = vmax.f32 %v1549, 0.0
      %1552 = vrot.lane.b32.xlu0 %v1386, 64
      %v1553 = vpop.permute.xlu0 %1552
      %v1555 = vadd.f32 %v1550, %v1553
      %v1556 = vmax.f32 %v1555, 0.0
      %1557 = vst.msk [vmem:[#allocation4 + $0x1] sm:$0xff] %vm668, %v1556
      %v1558 = vld [vmem:[#allocation4] sm:$0xff]
      %v1559 = vld [vmem:[#allocation4 + $0x1] sm:$0xff]
      %v1560 = vld [vmem:[#allocation4 + $0x2] sm:$0xff]
      %1562 = vrot.lane.b32.xlu0 %v1559, 64
      %v1563 = vpop.permute.xlu0 %1562
      %v1565 = vsel %vm668, %v1558, %v1563
      %v1566 = vpack.c.bf16 %v1565, %v1565
      %v1567 = vpack.c.bf16 %v1560, %v1560
      %v1568 = vld [vmem:[%s13] sm:$0xf]
      %v1569 = vld [vmem:[%s13 + $0x4] sm:$0xf]
      %v1570 = vld [vmem:[%s13 + $0x8] sm:$0xf]
      %v1571 = vld [vmem:[%s13 + $0xc] sm:$0xf]
      %v1572 = vld [vmem:[%s13 + $0x10] sm:$0xf]
      %v1573 = vld [vmem:[%s13 + $0x14] sm:$0xf]
      %v1574 = vld [vmem:[%s13 + $0x18] sm:$0xf]
      %v1575 = vld [vmem:[%s13 + $0x1c] sm:$0xf]
      %v1576 = vld [vmem:[%s13 + $0x20] sm:$0xf]
      %v1577 = vld [vmem:[%s13 + $0x24] sm:$0xf]
      %v1578 = vld [vmem:[%s13 + $0x28] sm:$0xf]
      %v1579 = vld [vmem:[%s13 + $0x2c] sm:$0xf]
      %v1580 = vld [vmem:[%s13 + $0x30] sm:$0xf]
      %v1581 = vld [vmem:[%s13 + $0x34] sm:$0xf]
      %v1582 = vld [vmem:[%s13 + $0x38] sm:$0xf]
      %v1583 = vld [vmem:[%s13 + $0x3c] sm:$0xf]
      %v1584 = vld [vmem:[%s13 + $0x40] sm:$0xf]
      %v1585 = vld [vmem:[%s13 + $0x44] sm:$0xf]
      %v1586 = vld [vmem:[%s13 + $0x48] sm:$0xf]
      %v1587 = vld [vmem:[%s13 + $0x4c] sm:$0xf]
      %v1588 = vld [vmem:[%s13 + $0x50] sm:$0xf]
      %v1589 = vld [vmem:[%s13 + $0x54] sm:$0xf]
      %v1590 = vld [vmem:[%s13 + $0x58] sm:$0xf]
      %v1591 = vld [vmem:[%s13 + $0x5c] sm:$0xf]
      %v1616 = vunpack.c.l.b16 %v1568
      %v1617 = vunpack.c.l.b16 %v1569
      %v1618 = vunpack.c.l.b16 %v1570
      %v1619 = vunpack.c.l.b16 %v1571
      %v1620 = vunpack.c.l.b16 %v1572
      %v1621 = vunpack.c.l.b16 %v1573
      %v1622 = vunpack.c.l.b16 %v1574
      %v1623 = vunpack.c.l.b16 %v1575
      %v1624 = vunpack.c.l.b16 %v1576
      %v1625 = vunpack.c.l.b16 %v1577
      %v1626 = vunpack.c.l.b16 %v1578
      %v1627 = vunpack.c.l.b16 %v1579
      %v1628 = vunpack.c.l.b16 %v1580
      %v1629 = vunpack.c.l.b16 %v1581
      %v1630 = vunpack.c.l.b16 %v1582
      %v1631 = vunpack.c.l.b16 %v1583
      %v1632 = vunpack.c.l.b16 %v1584
      %v1633 = vunpack.c.l.b16 %v1585
      %v1634 = vunpack.c.l.b16 %v1586
      %v1635 = vunpack.c.l.b16 %v1587
      %v1636 = vunpack.c.l.b16 %v1588
      %v1637 = vunpack.c.l.b16 %v1589
      %v1638 = vunpack.c.l.b16 %v1590
      %v1639 = vunpack.c.l.b16 %v1591
      %v1640 = vpack.c.b16 %v1617, %v1616
      %v1641 = vpack.c.b16 %v1619, %v1618
      %v1642 = vpack.c.b16 %v1621, %v1620
      %v1643 = vpack.c.b16 %v1623, %v1622
      %v1644 = vpack.c.b16 %v1625, %v1624
      %v1645 = vpack.c.b16 %v1627, %v1626
      %v1646 = vpack.c.b16 %v1629, %v1628
      %v1647 = vpack.c.b16 %v1631, %v1630
      %v1648 = vpack.c.b16 %v1633, %v1632
      %v1649 = vpack.c.b16 %v1635, %v1634
      %v1650 = vpack.c.b16 %v1637, %v1636
      %v1651 = vpack.c.b16 %v1639, %v1638
      %v1665 = vsel %vm668, %v1567, 0
      %1667 = vmatprep.subr.bf16.mxu0 0
      %1668 = vmatpush1.bf16.msra.mxu0 %v1640
      %1669 = vmatprep.subr.bf16.mxu0 0
      %1670 = vmatpush1.bf16.msra.mxu0 %v1641
      %1671 = vmatprep.subr.bf16.mxu0 0
      %1672 = vmatpush1.bf16.msra.mxu0 %v1642
      %1673 = vmatprep.subr.bf16.mxu0 0
      %1674 = vmatpush1.bf16.msra.mxu0 %v1643
      %1675 = vmatprep.subr.bf16.mxu0 0
      %1676 = vmatpush1.bf16.msra.mxu0 %v1644
      %1677 = vmatprep.subr.bf16.mxu0 0
      %1678 = vmatpush1.bf16.msra.mxu0 %v1645
      %1679 = vmatprep.subr.bf16.mxu0 0
      %1680 = vmatpush1.bf16.msra.mxu0 %v1646
      %1681 = vmatprep.subr.bf16.mxu0 0
      %1682 = vmatpush1.bf16.msra.mxu0 %v1647
      %1683 = vmatprep.subr.bf16.mxu0 0
      %1684 = vmatpush1.bf16.msra.mxu0 %v1648
      %1685 = vmatprep.subr.bf16.mxu0 0
      %1686 = vmatpush1.bf16.msra.mxu0 %v1649
      %1687 = vmatprep.subr.bf16.mxu0 0
      %1688 = vmatpush1.bf16.msra.mxu0 %v1650
      %1689 = vmatprep.subr.bf16.mxu0 0
      %1690 = vmatpush1.bf16.msra.mxu0 %v1651
      %1691 = vmatprep.subr.bf16.mxu0 0
      %1692 = vmatpush1.bf16.msra.mxu0 0
      %1693 = vmatprep.subr.bf16.mxu0 0
      %1694 = vmatpush1.bf16.msra.mxu0 0
      %1695 = vmatprep.subr.bf16.mxu0 0
      %1696 = vmatpush1.bf16.msra.mxu0 0
      %1697 = vmatprep.subr.bf16.mxu0 0
      %1698 = vmatpush1.bf16.msra.mxu0 0
      %1699 = vmatprep.mubr.bf16.mxu0 %v1665
      %1700 = vmatmul.mubr.bf16.gmra.mrb[0].mxu0 %v1566
      %v1701 = vpop.f32.mrb[0].mxu0
      %v1702 = vadd.f32 0.0, %v1701
      %v1703 = vpop.f32.mrb[0].mxu0
      %v1704 = vpop.f32.mrb[0].mxu0
      %v1705 = vpop.f32.mrb[0].mxu0
      %1706 = vdwg.mxu0
      %v1707 = vld [vmem:[%s14] sm:$0x1]
      %v1708 = vlaneseq
      %v1709 = vshrl.u32 %v1708, 7
      %v1710 = vsub.s32 0, %v1709
      %v1711 = vrot.slane %v1707, %v1710
      %v1712 = vmul.f32 %v1702, %v1711
      %v1713 = vld [vmem:[%s14 + $0x1] sm:$0x1]
      %v1714 = vlaneseq
      %v1715 = vshrl.u32 %v1714, 7
      %v1716 = vsub.s32 0, %v1715
      %v1717 = vrot.slane %v1713, %v1716
      %v1718 = vadd.f32 %v1712, %v1717
      %v1719 = vmax.f32 %v1718, 0.0
      %1720 = vst.msk [vmem:[#allocation4 + $0x1] sm:$0xff] %vm668, %v1719
      %v1721 = vld [vmem:[#allocation4] sm:$0xff]
      %v1722 = vld [vmem:[#allocation4 + $0x1] sm:$0xff]
      %v1723 = vld [vmem:[#allocation4 + $0x2] sm:$0xff]
      %1725 = vrot.lane.b32.xlu0 %v1722, 64
      %v1726 = vpop.permute.xlu0 %1725
      %v1728 = vsel %vm668, %v1721, %v1726
      %v1729 = vpack.c.bf16 %v1728, %v1728
      %v1730 = vpack.c.bf16 %v1723, %v1723
      %v1731 = vld [vmem:[%s11] sm:$0xf]
      %v1732 = vld [vmem:[%s11 + $0x4] sm:$0xf]
      %v1733 = vld [vmem:[%s11 + $0x8] sm:$0xf]
      %v1734 = vld [vmem:[%s11 + $0xc] sm:$0xf]
      %v1735 = vld [vmem:[%s11 + $0x10] sm:$0xf]
      %v1736 = vld [vmem:[%s11 + $0x14] sm:$0xf]
      %v1737 = vld [vmem:[%s11 + $0x18] sm:$0xf]
      %v1738 = vld [vmem:[%s11 + $0x1c] sm:$0xf]
      %v1739 = vld [vmem:[%s11 + $0x20] sm:$0xf]
      %v1740 = vld [vmem:[%s11 + $0x24] sm:$0xf]
      %v1741 = vld [vmem:[%s11 + $0x28] sm:$0xf]
      %v1742 = vld [vmem:[%s11 + $0x2c] sm:$0xf]
      %v1743 = vld [vmem:[%s11 + $0x30] sm:$0xf]
      %v1744 = vld [vmem:[%s11 + $0x34] sm:$0xf]
      %v1745 = vld [vmem:[%s11 + $0x38] sm:$0xf]
      %v1746 = vld [vmem:[%s11 + $0x3c] sm:$0xf]
      %v1747 = vld [vmem:[%s11 + $0x40] sm:$0xf]
      %v1748 = vld [vmem:[%s11 + $0x44] sm:$0xf]
      %v1749 = vld [vmem:[%s11 + $0x48] sm:$0xf]
      %v1750 = vld [vmem:[%s11 + $0x4c] sm:$0xf]
      %v1751 = vld [vmem:[%s11 + $0x50] sm:$0xf]
      %v1752 = vld [vmem:[%s11 + $0x54] sm:$0xf]
      %v1753 = vld [vmem:[%s11 + $0x58] sm:$0xf]
      %v1754 = vld [vmem:[%s11 + $0x5c] sm:$0xf]
      %v1779 = vunpack.c.l.b16 %v1731
      %v1780 = vunpack.c.l.b16 %v1732
      %v1781 = vunpack.c.l.b16 %v1733
      %v1782 = vunpack.c.l.b16 %v1734
      %v1783 = vunpack.c.l.b16 %v1735
      %v1784 = vunpack.c.l.b16 %v1736
      %v1785 = vunpack.c.l.b16 %v1737
      %v1786 = vunpack.c.l.b16 %v1738
      %v1787 = vunpack.c.l.b16 %v1739
      %v1788 = vunpack.c.l.b16 %v1740
      %v1789 = vunpack.c.l.b16 %v1741
      %v1790 = vunpack.c.l.b16 %v1742
      %v1791 = vunpack.c.l.b16 %v1743
      %v1792 = vunpack.c.l.b16 %v1744
      %v1793 = vunpack.c.l.b16 %v1745
      %v1794 = vunpack.c.l.b16 %v1746
      %v1795 = vunpack.c.l.b16 %v1747
      %v1796 = vunpack.c.l.b16 %v1748
      %v1797 = vunpack.c.l.b16 %v1749
      %v1798 = vunpack.c.l.b16 %v1750
      %v1799 = vunpack.c.l.b16 %v1751
      %v1800 = vunpack.c.l.b16 %v1752
      %v1801 = vunpack.c.l.b16 %v1753
      %v1802 = vunpack.c.l.b16 %v1754
      %v1803 = vpack.c.b16 %v1780, %v1779
      %v1804 = vpack.c.b16 %v1782, %v1781
      %v1805 = vpack.c.b16 %v1784, %v1783
      %v1806 = vpack.c.b16 %v1786, %v1785
      %v1807 = vpack.c.b16 %v1788, %v1787
      %v1808 = vpack.c.b16 %v1790, %v1789
      %v1809 = vpack.c.b16 %v1792, %v1791
      %v1810 = vpack.c.b16 %v1794, %v1793
      %v1811 = vpack.c.b16 %v1796, %v1795
      %v1812 = vpack.c.b16 %v1798, %v1797
      %v1813 = vpack.c.b16 %v1800, %v1799
      %v1814 = vpack.c.b16 %v1802, %v1801
      %v1828 = vsel %vm668, %v1730, 0
      %1830 = vmatprep.subr.bf16.mxu0 0
      %1831 = vmatpush1.bf16.msra.mxu0 %v1803
      %1832 = vmatprep.subr.bf16.mxu0 0
      %1833 = vmatpush1.bf16.msra.mxu0 %v1804
      %1834 = vmatprep.subr.bf16.mxu0 0
      %1835 = vmatpush1.bf16.msra.mxu0 %v1805
      %1836 = vmatprep.subr.bf16.mxu0 0
      %1837 = vmatpush1.bf16.msra.mxu0 %v1806
      %1838 = vmatprep.subr.bf16.mxu0 0
      %1839 = vmatpush1.bf16.msra.mxu0 %v1807
      %1840 = vmatprep.subr.bf16.mxu0 0
      %1841 = vmatpush1.bf16.msra.mxu0 %v1808
      %1842 = vmatprep.subr.bf16.mxu0 0
      %1843 = vmatpush1.bf16.msra.mxu0 %v1809
      %1844 = vmatprep.subr.bf16.mxu0 0
      %1845 = vmatpush1.bf16.msra.mxu0 %v1810
      %1846 = vmatprep.subr.bf16.mxu0 0
      %1847 = vmatpush1.bf16.msra.mxu0 %v1811
      %1848 = vmatprep.subr.bf16.mxu0 0
      %1849 = vmatpush1.bf16.msra.mxu0 %v1812
      %1850 = vmatprep.subr.bf16.mxu0 0
      %1851 = vmatpush1.bf16.msra.mxu0 %v1813
      %1852 = vmatprep.subr.bf16.mxu0 0
      %1853 = vmatpush1.bf16.msra.mxu0 %v1814
      %1854 = vmatprep.subr.bf16.mxu0 0
      %1855 = vmatpush1.bf16.msra.mxu0 0
      %1856 = vmatprep.subr.bf16.mxu0 0
      %1857 = vmatpush1.bf16.msra.mxu0 0
      %1858 = vmatprep.subr.bf16.mxu0 0
      %1859 = vmatpush1.bf16.msra.mxu0 0
      %1860 = vmatprep.subr.bf16.mxu0 0
      %1861 = vmatpush1.bf16.msra.mxu0 0
      %1862 = vmatprep.mubr.bf16.mxu0 %v1828
      %1863 = vmatmul.mubr.bf16.gmra.mrb[0].mxu0 %v1729
      %v1864 = vpop.f32.mrb[0].mxu0
      %v1865 = vadd.f32 0.0, %v1864
      %v1866 = vpop.f32.mrb[0].mxu0
      %v1867 = vpop.f32.mrb[0].mxu0
      %v1868 = vpop.f32.mrb[0].mxu0
      %1869 = vdwg.mxu0
      %v1870 = vld [vmem:[%s12] sm:$0x1]
      %v1871 = vlaneseq
      %v1872 = vshrl.u32 %v1871, 7
      %v1873 = vsub.s32 0, %v1872
      %v1874 = vrot.slane %v1870, %v1873
      %v1875 = vmul.f32 %v1865, %v1874
      %v1876 = vld [vmem:[%s12 + $0x1] sm:$0x1]
      %v1877 = vlaneseq
      %v1878 = vshrl.u32 %v1877, 7
      %v1879 = vsub.s32 0, %v1878
      %v1880 = vrot.slane %v1876, %v1879
      %v1881 = vadd.f32 %v1875, %v1880
      %v1882 = vmax.f32 %v1881, 0.0
      %v1883 = vadd.f32 %v1882, %v1556
      %v1884 = vmax.f32 %v1883, 0.0
      %1885 = vst.msk [vmem:[#allocation4 + $0x1] sm:$0xff] %vm668, %v1884
      %v1886 = vld [vmem:[#allocation4] sm:$0xff]
      %v1887 = vld [vmem:[#allocation4 + $0x1] sm:$0xff]
      %v1888 = vld [vmem:[#allocation4 + $0x2] sm:$0xff]
      %1890 = vrot.lane.b32.xlu0 %v1887, 64
      %v1891 = vpop.permute.xlu0 %1890
      %v1893 = vsel %vm668, %v1886, %v1891
      %v1894 = vpack.c.bf16 %v1893, %v1893
      %v1895 = vpack.c.bf16 %v1888, %v1888
      %v1896 = vld [vmem:[%s17] sm:$0xf]
      %v1897 = vld [vmem:[%s17 + $0x4] sm:$0xf]
      %v1898 = vld [vmem:[%s17 + $0x8] sm:$0xf]
      %v1899 = vld [vmem:[%s17 + $0xc] sm:$0xf]
      %v1900 = vld [vmem:[%s17 + $0x10] sm:$0xf]
      %v1901 = vld [vmem:[%s17 + $0x14] sm:$0xf]
      %v1902 = vld [vmem:[%s17 + $0x18] sm:$0xf]
      %v1903 = vld [vmem:[%s17 + $0x1c] sm:$0xf]
      %v1904 = vld [vmem:[%s17 + $0x20] sm:$0xf]
      %v1905 = vld [vmem:[%s17 + $0x24] sm:$0xf]
      %v1906 = vld [vmem:[%s17 + $0x28] sm:$0xf]
      %v1907 = vld [vmem:[%s17 + $0x2c] sm:$0xf]
      %v1908 = vld [vmem:[%s17 + $0x30] sm:$0xf]
      %v1909 = vld [vmem:[%s17 + $0x34] sm:$0xf]
      %v1910 = vld [vmem:[%s17 + $0x38] sm:$0xf]
      %v1911 = vld [vmem:[%s17 + $0x3c] sm:$0xf]
      %v1912 = vld [vmem:[%s17 + $0x40] sm:$0xf]
      %v1913 = vld [vmem:[%s17 + $0x44] sm:$0xf]
      %v1914 = vld [vmem:[%s17 + $0x48] sm:$0xf]
      %v1915 = vld [vmem:[%s17 + $0x4c] sm:$0xf]
      %v1916 = vld [vmem:[%s17 + $0x50] sm:$0xf]
      %v1917 = vld [vmem:[%s17 + $0x54] sm:$0xf]
      %v1918 = vld [vmem:[%s17 + $0x58] sm:$0xf]
      %v1919 = vld [vmem:[%s17 + $0x5c] sm:$0xf]
      %v1944 = vunpack.c.l.b16 %v1896
      %v1945 = vunpack.c.l.b16 %v1897
      %v1946 = vunpack.c.l.b16 %v1898
      %v1947 = vunpack.c.l.b16 %v1899
      %v1948 = vunpack.c.l.b16 %v1900
      %v1949 = vunpack.c.l.b16 %v1901
      %v1950 = vunpack.c.l.b16 %v1902
      %v1951 = vunpack.c.l.b16 %v1903
      %v1952 = vunpack.c.l.b16 %v1904
      %v1953 = vunpack.c.l.b16 %v1905
      %v1954 = vunpack.c.l.b16 %v1906
      %v1955 = vunpack.c.l.b16 %v1907
      %v1956 = vunpack.c.l.b16 %v1908
      %v1957 = vunpack.c.l.b16 %v1909
      %v1958 = vunpack.c.l.b16 %v1910
      %v1959 = vunpack.c.l.b16 %v1911
      %v1960 = vunpack.c.l.b16 %v1912
      %v1961 = vunpack.c.l.b16 %v1913
      %v1962 = vunpack.c.l.b16 %v1914
      %v1963 = vunpack.c.l.b16 %v1915
      %v1964 = vunpack.c.l.b16 %v1916
      %v1965 = vunpack.c.l.b16 %v1917
      %v1966 = vunpack.c.l.b16 %v1918
      %v1967 = vunpack.c.l.b16 %v1919
      %v1968 = vpack.c.b16 %v1945, %v1944
      %v1969 = vpack.c.b16 %v1947, %v1946
      %v1970 = vpack.c.b16 %v1949, %v1948
      %v1971 = vpack.c.b16 %v1951, %v1950
      %v1972 = vpack.c.b16 %v1953, %v1952
      %v1973 = vpack.c.b16 %v1955, %v1954
      %v1974 = vpack.c.b16 %v1957, %v1956
      %v1975 = vpack.c.b16 %v1959, %v1958
      %v1976 = vpack.c.b16 %v1961, %v1960
      %v1977 = vpack.c.b16 %v1963, %v1962
      %v1978 = vpack.c.b16 %v1965, %v1964
      %v1979 = vpack.c.b16 %v1967, %v1966
      %v1993 = vsel %vm668, %v1895, 0
      %1995 = vmatprep.subr.bf16.mxu0 0
      %1996 = vmatpush1.bf16.msra.mxu0 %v1968
      %1997 = vmatprep.subr.bf16.mxu0 0
      %1998 = vmatpush1.bf16.msra.mxu0 %v1969
      %1999 = vmatprep.subr.bf16.mxu0 0
      %2000 = vmatpush1.bf16.msra.mxu0 %v1970
      %2001 = vmatprep.subr.bf16.mxu0 0
      %2002 = vmatpush1.bf16.msra.mxu0 %v1971
      %2003 = vmatprep.subr.bf16.mxu0 0
      %2004 = vmatpush1.bf16.msra.mxu0 %v1972
      %2005 = vmatprep.subr.bf16.mxu0 0
      %2006 = vmatpush1.bf16.msra.mxu0 %v1973
      %2007 = vmatprep.subr.bf16.mxu0 0
      %2008 = vmatpush1.bf16.msra.mxu0 %v1974
      %2009 = vmatprep.subr.bf16.mxu0 0
      %2010 = vmatpush1.bf16.msra.mxu0 %v1975
      %2011 = vmatprep.subr.bf16.mxu0 0
      %2012 = vmatpush1.bf16.msra.mxu0 %v1976
      %2013 = vmatprep.subr.bf16.mxu0 0
      %2014 = vmatpush1.bf16.msra.mxu0 %v1977
      %2015 = vmatprep.subr.bf16.mxu0 0
      %2016 = vmatpush1.bf16.msra.mxu0 %v1978
      %2017 = vmatprep.subr.bf16.mxu0 0
      %2018 = vmatpush1.bf16.msra.mxu0 %v1979
      %2019 = vmatprep.subr.bf16.mxu0 0
      %2020 = vmatpush1.bf16.msra.mxu0 0
      %2021 = vmatprep.subr.bf16.mxu0 0
      %2022 = vmatpush1.bf16.msra.mxu0 0
      %2023 = vmatprep.subr.bf16.mxu0 0
      %2024 = vmatpush1.bf16.msra.mxu0 0
      %2025 = vmatprep.subr.bf16.mxu0 0
      %2026 = vmatpush1.bf16.msra.mxu0 0
      %2027 = vmatprep.mubr.bf16.mxu0 %v1993
      %2028 = vmatmul.mubr.bf16.gmra.mrb[0].mxu0 %v1894
      %v2029 = vpop.f32.mrb[0].mxu0
      %v2030 = vadd.f32 0.0, %v2029
      %v2031 = vpop.f32.mrb[0].mxu0
      %v2032 = vpop.f32.mrb[0].mxu0
      %v2033 = vpop.f32.mrb[0].mxu0
      %2034 = vdwg.mxu0
      %v2035 = vld [vmem:[%s18] sm:$0x1]
      %v2036 = vlaneseq
      %v2037 = vshrl.u32 %v2036, 7
      %v2038 = vsub.s32 0, %v2037
      %v2039 = vrot.slane %v2035, %v2038
      %v2040 = vmul.f32 %v2030, %v2039
      %v2041 = vld [vmem:[%s18 + $0x1] sm:$0x1]
      %v2042 = vlaneseq
      %v2043 = vshrl.u32 %v2042, 7
      %v2044 = vsub.s32 0, %v2043
      %v2045 = vrot.slane %v2041, %v2044
      %v2046 = vadd.f32 %v2040, %v2045
      %v2047 = vmax.f32 %v2046, 0.0
      %2048 = vst.msk [vmem:[#allocation3 + $0x1] sm:$0xff] %vm1267, %v2047
      %v2049 = vld [vmem:[#allocation3] sm:$0xff]
      %v2050 = vld [vmem:[#allocation3 + $0x1] sm:$0xff]
      %v2051 = vld [vmem:[#allocation3 + $0x2] sm:$0xff]
      %2053 = vrot.lane.b32.xlu0 %v2050, 32
      %v2054 = vpop.permute.xlu0 %2053
      %2057 = vrot.lane.b32.xlu0 %v2051, 64
      %v2058 = vpop.permute.xlu0 %2057
      %v2060 = vsel %vm1267, %v2049, %v2054
      %v2061 = vsel %vm668, %v2060, %v2058
      %v2062 = vpack.c.bf16 %v2061, %v2061
      %v2063 = vld [vmem:[%s15] sm:$0xf]
      %v2064 = vld [vmem:[%s15 + $0x4] sm:$0xf]
      %v2065 = vld [vmem:[%s15 + $0x8] sm:$0xf]
      %v2066 = vld [vmem:[%s15 + $0xc] sm:$0xf]
      %v2067 = vld [vmem:[%s15 + $0x10] sm:$0xf]
      %v2068 = vld [vmem:[%s15 + $0x14] sm:$0xf]
      %v2069 = vld [vmem:[%s15 + $0x18] sm:$0xf]
      %v2070 = vld [vmem:[%s15 + $0x1c] sm:$0xf]
      %v2071 = vld [vmem:[%s15 + $0x20] sm:$0xf]
      %v2072 = vld [vmem:[%s15 + $0x24] sm:$0xf]
      %v2073 = vld [vmem:[%s15 + $0x28] sm:$0xf]
      %v2074 = vld [vmem:[%s15 + $0x2c] sm:$0xf]
      %v2087 = vunpack.c.l.b16 %v2063
      %v2088 = vunpack.c.l.b16 %v2064
      %v2089 = vunpack.c.l.b16 %v2065
      %v2090 = vunpack.c.l.b16 %v2066
      %v2091 = vunpack.c.l.b16 %v2067
      %v2092 = vunpack.c.l.b16 %v2068
      %v2093 = vunpack.c.l.b16 %v2069
      %v2094 = vunpack.c.l.b16 %v2070
      %v2095 = vunpack.c.l.b16 %v2071
      %v2096 = vunpack.c.l.b16 %v2072
      %v2097 = vunpack.c.l.b16 %v2073
      %v2098 = vunpack.c.l.b16 %v2074
      %v2099 = vpack.c.b16 %v2088, %v2087
      %v2100 = vpack.c.b16 %v2090, %v2089
      %v2101 = vpack.c.b16 %v2092, %v2091
      %v2102 = vpack.c.b16 %v2094, %v2093
      %v2103 = vpack.c.b16 %v2096, %v2095
      %v2104 = vpack.c.b16 %v2098, %v2097
      %v2112 = vsel %vm1331, %v2062, 0
      %2114 = vmatprep.subr.bf16.mxu0 0
      %2115 = vmatpush1.bf16.msra.mxu0 %v2099
      %2116 = vmatprep.subr.bf16.mxu0 0
      %2117 = vmatpush1.bf16.msra.mxu0 %v2100
      %2118 = vmatprep.subr.bf16.mxu0 0
      %2119 = vmatpush1.bf16.msra.mxu0 %v2101
      %2120 = vmatprep.subr.bf16.mxu0 0
      %2121 = vmatpush1.bf16.msra.mxu0 %v2102
      %2122 = vmatprep.subr.bf16.mxu0 0
      %2123 = vmatpush1.bf16.msra.mxu0 %v2103
      %2124 = vmatprep.subr.bf16.mxu0 0
      %2125 = vmatpush1.bf16.msra.mxu0 %v2104
      %2126 = vmatprep.subr.bf16.mxu0 0
      %2127 = vmatpush1.bf16.msra.mxu0 0
      %2128 = vmatprep.subr.bf16.mxu0 0
      %2129 = vmatpush1.bf16.msra.mxu0 0
      %2130 = vmatprep.subr.bf16.mxu0 0
      %2131 = vmatpush1.bf16.msra.mxu0 0
      %2132 = vmatprep.subr.bf16.mxu0 0
      %2133 = vmatpush1.bf16.msra.mxu0 0
      %2134 = vmatprep.subr.bf16.mxu0 0
      %2135 = vmatpush1.bf16.msra.mxu0 0
      %2136 = vmatprep.subr.bf16.mxu0 0
      %2137 = vmatpush1.bf16.msra.mxu0 0
      %2138 = vmatprep.subr.bf16.mxu0 0
      %2139 = vmatpush1.bf16.msra.mxu0 0
      %2140 = vmatprep.subr.bf16.mxu0 0
      %2141 = vmatpush1.bf16.msra.mxu0 0
      %2142 = vmatprep.subr.bf16.mxu0 0
      %2143 = vmatpush1.bf16.msra.mxu0 0
      %2144 = vmatprep.subr.bf16.mxu0 0
      %2145 = vmatpush1.bf16.msra.mxu0 0
      %2146 = vmatprep.mubr.bf16.mxu0 0
      %2147 = vmatmul.mubr.bf16.gmra.mrb[0].mxu0 %v2112
      %v2148 = vpop.f32.mrb[0].mxu0
      %v2149 = vadd.f32 0.0, %v2148
      %v2150 = vpop.f32.mrb[0].mxu0
      %v2151 = vpop.f32.mrb[0].mxu0
      %v2152 = vpop.f32.mrb[0].mxu0
      %2153 = vdwg.mxu0
      %v2154 = vld [vmem:[%s16] sm:$0x1]
      %v2155 = vlaneseq
      %v2156 = vshrl.u32 %v2155, 7
      %v2157 = vsub.s32 0, %v2156
      %v2158 = vrot.slane %v2154, %v2157
      %v2159 = vmul.f32 %v2149, %v2158
      %v2160 = vld [vmem:[%s16 + $0x1] sm:$0x1]
      %v2161 = vlaneseq
      %v2162 = vshrl.u32 %v2161, 7
      %v2163 = vsub.s32 0, %v2162
      %v2164 = vrot.slane %v2160, %v2163
      %v2165 = vadd.f32 %v2159, %v2164
      %v2166 = vmax.f32 %v2165, 0.0
      %2168 = vrot.lane.b32.xlu0 %v2046, 96
      %v2169 = vpop.permute.xlu0 %2168
      %v2171 = vadd.f32 %v2166, %v2169
      %v2172 = vmax.f32 %v2171, 0.0
      %v2173 = vpack.c.bf16 %v2172, %v2172
      %v2174 = vld [vmem:[%s19] sm:$0xf]
      %v2175 = vld [vmem:[%s19 + $0x4] sm:$0xf]
      %v2178 = vunpack.c.l.b16 %v2174
      %v2179 = vunpack.c.l.b16 %v2175
      %v2180 = vpack.c.b16 %v2179, %v2178
      %vm2181 = vcmask 64512
      %v2183 = vsel %vm2181, %v2180, 0
      %vm2185 = vcmask 1043456
      %v2187 = vsel %vm2185, %v2173, 0
      %2189 = vmatprep.subr.bf16.mxu0 0
      %2190 = vmatpush1.bf16.msra.mxu0 %v2187
      %2191 = vmatprep.subr.bf16.mxu0 0
      %2192 = vmatpush1.bf16.msra.mxu0 0
      %2193 = vmatprep.subr.bf16.mxu0 0
      %2194 = vmatpush1.bf16.msra.mxu0 0
      %2195 = vmatprep.subr.bf16.mxu0 0
      %2196 = vmatpush1.bf16.msra.mxu0 0
      %2197 = vmatprep.subr.bf16.mxu0 0
      %2198 = vmatpush1.bf16.msra.mxu0 0
      %2199 = vmatprep.subr.bf16.mxu0 0
      %2200 = vmatpush1.bf16.msra.mxu0 0
      %2201 = vmatprep.subr.bf16.mxu0 0
      %2202 = vmatpush1.bf16.msra.mxu0 0
      %2203 = vmatprep.subr.bf16.mxu0 0
      %2204 = vmatpush1.bf16.msra.mxu0 0
      %2205 = vmatprep.subr.bf16.mxu0 0
      %2206 = vmatpush1.bf16.msra.mxu0 0
      %2207 = vmatprep.subr.bf16.mxu0 0
      %2208 = vmatpush1.bf16.msra.mxu0 0
      %2209 = vmatprep.subr.bf16.mxu0 0
      %2210 = vmatpush1.bf16.msra.mxu0 0
      %2211 = vmatprep.subr.bf16.mxu0 0
      %2212 = vmatpush1.bf16.msra.mxu0 0
      %2213 = vmatprep.subr.bf16.mxu0 0
      %2214 = vmatpush1.bf16.msra.mxu0 0
      %2215 = vmatprep.subr.bf16.mxu0 0
      %2216 = vmatpush1.bf16.msra.mxu0 0
      %2217 = vmatprep.subr.bf16.mxu0 0
      %2218 = vmatpush1.bf16.msra.mxu0 0
      %2219 = vmatprep.subr.bf16.mxu0 0
      %2220 = vmatpush1.bf16.msra.mxu0 0
      %2221 = vmatprep.mubr.bf16.mxu0 0
      %2222 = vmatmul.mubr.bf16.gmra.mrb[0].mxu0 %v2183
      %v2223 = vpop.f32.mrb[0].mxu0
      %v2224 = vadd.f32 0.0, %v2223
      %v2225 = vpop.f32.mrb[0].mxu0
      %v2226 = vpop.f32.mrb[0].mxu0
      %v2227 = vadd.f32 0.0, %v2226
      %v2228 = vpop.f32.mrb[0].mxu0
      %2229 = vdwg.mxu0
      %v2230 = vpack.c.bf16 %v2227, %v2224
      %v2231 = vld [vmem:[%s20] sm:$0xf]
      %v2232 = vld [vmem:[%s20 + $0x4] sm:$0xf]
      %v2233 = vld [vmem:[%s20 + $0x8] sm:$0xf]
      %v2234 = vld [vmem:[%s20 + $0xc] sm:$0xf]
      %v2239 = vunpack.c.l.b16 %v2231
      %v2240 = vunpack.c.l.b16 %v2232
      %v2241 = vunpack.c.l.b16 %v2233
      %v2242 = vunpack.c.l.b16 %v2234
      %v2243 = vpack.c.b16 %v2240, %v2239
      %v2244 = vpack.c.b16 %v2242, %v2241
      %v2248 = vsel %vm1267, %v2230, 0
      %2250 = vmatprep.subr.bf16.mxu0 0
      %2251 = vmatpush1.bf16.msra.mxu0 %v2243
      %2252 = vmatprep.subr.bf16.mxu0 0
      %2253 = vmatpush1.bf16.msra.mxu0 %v2244
      %2254 = vmatprep.subr.bf16.mxu0 0
      %2255 = vmatpush1.bf16.msra.mxu0 0
      %2256 = vmatprep.subr.bf16.mxu0 0
      %2257 = vmatpush1.bf16.msra.mxu0 0
      %2258 = vmatprep.subr.bf16.mxu0 0
      %2259 = vmatpush1.bf16.msra.mxu0 0
      %2260 = vmatprep.subr.bf16.mxu0 0
      %2261 = vmatpush1.bf16.msra.mxu0 0
      %2262 = vmatprep.subr.bf16.mxu0 0
      %2263 = vmatpush1.bf16.msra.mxu0 0
      %2264 = vmatprep.subr.bf16.mxu0 0
      %2265 = vmatpush1.bf16.msra.mxu0 0
      %2266 = vmatprep.subr.bf16.mxu0 0
      %2267 = vmatpush1.bf16.msra.mxu0 0
      %2268 = vmatprep.subr.bf16.mxu0 0
      %2269 = vmatpush1.bf16.msra.mxu0 0
      %2270 = vmatprep.subr.bf16.mxu0 0
      %2271 = vmatpush1.bf16.msra.mxu0 0
      %2272 = vmatprep.subr.bf16.mxu0 0
      %2273 = vmatpush1.bf16.msra.mxu0 0
      %2274 = vmatprep.subr.bf16.mxu0 0
      %2275 = vmatpush1.bf16.msra.mxu0 0
      %2276 = vmatprep.subr.bf16.mxu0 0
      %2277 = vmatpush1.bf16.msra.mxu0 0
      %2278 = vmatprep.subr.bf16.mxu0 0
      %2279 = vmatpush1.bf16.msra.mxu0 0
      %2280 = vmatprep.subr.bf16.mxu0 0
      %2281 = vmatpush1.bf16.msra.mxu0 0
      %2282 = vmatprep.mubr.bf16.mxu0 0
      %2283 = vmatmul.mubr.bf16.gmra.mrb[0].mxu0 %v2248
      %v2284 = vpop.f32.mrb[0].mxu0
      %v2285 = vadd.f32 %v1023, %v2284
      %v2286 = vpop.f32.mrb[0].mxu0
      %v2287 = vpop.f32.mrb[0].mxu0
      %v2288 = vadd.f32 %v1024, %v2287
      %v2289 = vpop.f32.mrb[0].mxu0
      %2290 = vdwg.mxu0
      %2291 = vst.msk [vmem:[%s656] sm:$0xff] %vm668, %v2285
      %2292 = vst.msk [vmem:[%s656 + $0x8] sm:$0xff] %vm668, %v2288
      %p2293 = scmp.lt.s32.totalorder %s32, 1
      %s2294 = scalar_select %p2293, %s32, 1
      %s2295 = smul.addr %s2294, 2
      %s2296 = smul.addr %s2295, 8
      %s2297 = scalar_lea.vmem %s21, %s2296
      // Predicated region
      $region105: #{_lambda_.1} parent=103 // pred_check
        %p2298 = pneg %p496
      $region106: #{_lambda_.1} parent=103 // pred_check_branch
        %2300 = sbr.rel (%p2298) target = $region108
      $region107: #{_lambda_.1} parent=103 // pred_region
        _
      $region108: #{_lambda_.1} parent=103 // pred_fallthru
        _
    $region104: #{_lambda_.1} parent=5 // pred_fallthru
      _
    %p2301 = scmp.le.s32.totalorder 2, %s27
    // Predicated region
    $region109: #{_lambda_.1} parent=5 // pred_check
      %p2302 = pneg %p2301
    $region110: #{_lambda_.1} parent=5 // pred_check_branch
      %2304 = sbr.rel (%p2302) target = $region112
    $region111: #{_lambda_.1} parent=5 // pred_region
      %s2305 = ssub.s32 %s27, 2
      // Predicated region
      $region113: #{_lambda_.1} parent=111 // pred_check
        %p2306 = pneg %p502
      $region114: #{_lambda_.1} parent=111 // pred_check_branch
        %2308 = sbr.rel (%p2306) target = $region116
      $region115: #{_lambda_.1} parent=111 // pred_region
        %p2309 = scmp.lt.s32.totalorder %s33, 1
        %s2310 = scalar_select %p2309, %s33, 1
        %s2311 = smul.addr %s2310, 2
        %s2312 = smul.addr %s2311, 8
        %s2313 = scalar_lea.vmem %s21, %s2312
      $region116: #{_lambda_.1} parent=111 // pred_fallthru
        _
    $region112: #{_lambda_.1} parent=5 // pred_fallthru
      _
  $region6: #{_lambda_.1} parent=0 // loop_footer
    %s31 = sadd.s32 1, %s27
  $region7: #{_lambda_.1} parent=0 // loop_footer_branch
    %26 = sbr.rel target = $region3
  $region8: #{_lambda_.1} parent=0 // loop_exit
    _

</llo_original>
